<compile_context>
chip_gen: v6e
topology: v6e:2x2x1
jax: 0.10.0
libtpu: 0.0.40
codegen_flags: <defaults>
</compile_context>

<pallas_src>
import math
import functools

import jax
import jax.numpy as jnp
from jax.experimental import pallas as pl
from jax.experimental.pallas import tpu as pltpu


# ---------------------------------------------------------------------------
# Kernel: one grid step processes BT batch elements end-to-end.
# ---------------------------------------------------------------------------
def _encoder_layer_kernel(
    x_ref,                        # (BT, S, D)  f32
    wq_ref, bq_ref,               # (H, D, hd) bf16, (H, 1, hd) f32   (head-major)
    wk_ref, bk_ref,
    wv_ref, bv_ref,
    wo_ref, bo_ref,               # (D, D) bf16, (1, D) f32
    ln1g_ref, ln1b_ref,           # (1, D) f32
    w1_ref, b1_ref,               # (D, Dff) bf16, (1, Dff) f32
    w2_ref, b2_ref,               # (Dff, D) bf16, (1, D) f32
    ln2g_ref, ln2b_ref,           # (1, D) f32
    o_ref,                        # (BT, S, D)
    ctx_ref,                      # (BT*S, D) bf16 scratch: concatenated per-head context
    *, num_heads: int, dff_chunk: int, eps: float = 1e-5,
):
    BT, S, D = x_ref.shape
    R = BT * S
    hd = D // num_heads
    Dff = w1_ref.shape[1]
    inv_sqrt_hd = 1.0 / math.sqrt(hd)

    # Token rows flattened to (R, D): sublane-dense rows, D on lanes.
    x = x_ref[...].astype(jnp.float32).reshape(R, D)       # f32 residual copy
    x_bf = x.astype(jnp.bfloat16)                          # bf16 MXU operand

    # ---- per-head attention: K=D projections, context -> scratch lane slice ----
    # TODO(synk): flash-style key tiling + fori_loop over heads for long sequences.
    for h in range(num_heads):
        q = jnp.dot(x_bf, wq_ref[h], preferred_element_type=jnp.float32) + bq_ref[h]
        k = jnp.dot(x_bf, wk_ref[h], preferred_element_type=jnp.float32) + bk_ref[h]
        v = jnp.dot(x_bf, wv_ref[h], preferred_element_type=jnp.float32) + bv_ref[h]
        qh = q.reshape(BT, S, hd).astype(jnp.bfloat16)
        kh = k.reshape(BT, S, hd).astype(jnp.bfloat16)
        vh = v.reshape(BT, S, hd).astype(jnp.bfloat16)

        s = jnp.einsum("bqd,bkd->bqk", qh, kh,
                       preferred_element_type=jnp.float32) * inv_sqrt_hd   # (BT,S,S) f32
        # TODO(synk): apply attention mask here when mask is not None.
        s = s - jnp.max(s, axis=-1, keepdims=True)
        p = jnp.exp(s)
        a = p * pl.reciprocal(jnp.sum(p, axis=-1, keepdims=True), approx=True)
        ctx = jnp.einsum("bqk,bkd->bqd", a.astype(jnp.bfloat16), vh,
                         preferred_element_type=jnp.float32)               # (BT,S,hd)
        ctx_ref[:, h * hd:(h + 1) * hd] = ctx.reshape(R, hd).astype(jnp.bfloat16)

    # Single output projection with full K=D contraction depth on the MXU.
    attn = jnp.dot(ctx_ref[...], wo_ref[...],
                   preferred_element_type=jnp.float32) + bo_ref[...]

    # ---- residual + LayerNorm 1 (f32) ----
    resid = x + attn
    mean1 = jnp.mean(resid, axis=-1, keepdims=True)
    var1 = jnp.mean((resid - mean1) ** 2, axis=-1, keepdims=True)
    out1 = (resid - mean1) * jax.lax.rsqrt(var1 + eps) * ln1g_ref[...] + ln1b_ref[...]
    out1_bf = out1.astype(jnp.bfloat16)

    # ---- feed-forward, chunked over Dff to bound the live (R, Dff) intermediate ----
    ff = jnp.zeros((R, D), jnp.float32)
    for c in range(0, Dff, dff_chunk):
        cs = min(dff_chunk, Dff - c)
        h1 = jnp.maximum(
            jnp.dot(out1_bf, w1_ref[:, c:c + cs],
                    preferred_element_type=jnp.float32) + b1_ref[:, c:c + cs], 0.0)
        ff = ff + jnp.dot(h1.astype(jnp.bfloat16), w2_ref[c:c + cs, :],
                          preferred_element_type=jnp.float32)
    ff = ff + b2_ref[...]

    # ---- residual + LayerNorm 2 (f32) ----
    y = out1 + ff
    mean2 = jnp.mean(y, axis=-1, keepdims=True)
    var2 = jnp.mean((y - mean2) ** 2, axis=-1, keepdims=True)
    out2 = (y - mean2) * jax.lax.rsqrt(var2 + eps) * ln2g_ref[...] + ln2b_ref[...]

    o_ref[...] = out2.reshape(BT, S, D).astype(o_ref.dtype)


# ---------------------------------------------------------------------------
# Wrapper
# ---------------------------------------------------------------------------
def _pick_batch_tile(B, max_tile=8):
    """Largest divisor of B (<= max_tile) that leaves a grid of >= 2 steps.

    Keeps both v7x TensorCores busy (dimension_semantics=('parallel',)) and keeps the
    input/output DMA pipeline alive (prefetch i+1 while computing i).
    """
    best = 1
    for t in range(1, min(B, max_tile) + 1):
        if B % t == 0 and B // t >= 2:
            best = t
    return best


def prepare_params(params, *, num_heads):
    """One-time weight preparation: bf16 cast + head-major Q/K/V layout.

    Call once and reuse; doing the casts inside the per-call wrapper would re-read the
    full weights from HBM on every invocation.
    """
    D = params["wq"].shape[0]
    hd = D // num_heads

    def head_major(w):    # (D, D) -> (H, D, hd)
        return jnp.transpose(w.reshape(D, num_heads, hd), (1, 0, 2)).astype(jnp.bfloat16)

    def head_bias(b):     # (1, D) -> (H, 1, hd)
        return b.reshape(num_heads, 1, hd).astype(jnp.float32)

    return dict(
        wq=head_major(params["wq"]), bq=head_bias(params["bq"]),
        wk=head_major(params["wk"]), bk=head_bias(params["bk"]),
        wv=head_major(params["wv"]), bv=head_bias(params["bv"]),
        wo=params["wo"].astype(jnp.bfloat16), bo=params["bo"].astype(jnp.float32),
        ln1_g=params["ln1_g"].astype(jnp.float32), ln1_b=params["ln1_b"].astype(jnp.float32),
        w1=params["w1"].astype(jnp.bfloat16), b1=params["b1"].astype(jnp.float32),
        w2=params["w2"].astype(jnp.bfloat16), b2=params["b2"].astype(jnp.float32),
        ln2_g=params["ln2_g"].astype(jnp.float32), ln2_b=params["ln2_b"].astype(jnp.float32),
    )


def transformer_encoder_layer(x, p, *, num_heads, dff_chunk=512):
    B, S, D = x.shape
    assert D % num_heads == 0, "Embedding size needs to be divisible by heads"
    hd = D // num_heads
    Dff = p["w1"].shape[1]
    BT = _pick_batch_tile(B)
    R = BT * S
    dff_c = min(dff_chunk, Dff)

    # ---- explicit VMEM budget (resident weights + double-buffered I/O + intermediates) ----
    weight_bytes = (4 * D * D + 2 * D * Dff) * 2                 # bf16 matmul weights
    weight_bytes += (9 * D + 2 * Dff) * 4                        # biases + LN params (f32)
    io_bytes = 4 * R * D * 4                                     # 2x in + 2x out buffers (f32)
    inter_bytes = (R * D * 2                                     # ctx scratch (bf16)
                   + 3 * R * hd * 4 + 2 * BT * S * S * 4         # q/k/v + scores/probs
                   + 2 * R * dff_c * 4                           # FFN chunk activations
                   + 6 * R * D * 4)                              # resid/out1/ff/y/out2/x
    vmem_limit = min(int(1.5 * (weight_bytes + io_bytes + inter_bytes)) + (8 << 20),
                     100 << 20)

    flops = (2 * B * S * D * D * 4            # Q, K, V, O projections
             + 2 * B * S * S * D * 2          # scores + context
             + 2 * B * S * D * Dff * 2)       # FFN
    cost = pl.CostEstimate(flops=flops,
                           transcendentals=B * num_heads * S * S,
                           bytes_accessed=2 * B * S * D * 4 + weight_bytes)

    # Whole-array VMEM residents: copied in once, never double-buffered across steps.
    wspec = pl.BlockSpec(memory_space=pltpu.MemorySpace.VMEM)
    in_specs = [pl.BlockSpec((BT, S, D), lambda b: (b, 0, 0))] + [wspec] * 16

    kernel = functools.partial(_encoder_layer_kernel,
                               num_heads=num_heads, dff_chunk=dff_c)

    return pl.pallas_call(
        kernel,
        out_shape=jax.ShapeDtypeStruct((B, S, D), x.dtype),
        grid_spec=pltpu.PrefetchScalarGridSpec(
            num_scalar_prefetch=0,
            grid=(B // BT,),
            in_specs=in_specs,
            out_specs=pl.BlockSpec((BT, S, D), lambda b: (b, 0, 0)),
            scratch_shapes=[pltpu.VMEM((R, D), jnp.bfloat16)],
        ),
        compiler_params=pltpu.CompilerParams(
            dimension_semantics=("parallel",),       # batch tiles shard across TCs (v7x)
            vmem_limit_bytes=vmem_limit,
        ),
        cost_estimate=cost,
    )(
        x,
        p["wq"], p["bq"], p["wk"], p["bk"], p["wv"], p["bv"], p["wo"], p["bo"],
        p["ln1_g"], p["ln1_b"],
        p["w1"], p["b1"], p["w2"], p["b2"],
        p["ln2_g"], p["ln2_b"],
    )


# ---------------------------------------------------------------------------
# Pure-JAX f32 reference (mirrors the PyTorch forward, dropout = identity)
# ---------------------------------------------------------------------------
def reference(x, params, *, num_heads, eps=1e-5):
    B, S, D = x.shape
    hd = D // num_heads

    def ln(v, g, b):
        m = jnp.mean(v, -1, keepdims=True)
        var = jnp.mean((v - m) ** 2, -1, keepdims=True)
        return (v - m) * jax.lax.rsqrt(var + eps) * g + b

    q = x @ params["wq"] + params["bq"]
    k = x @ params["wk"] + params["bk"]
    v = x @ params["wv"] + params["bv"]
    q = q.reshape(B, S, num_heads, hd).transpose(0, 2, 1, 3)
    k = k.reshape(B, S, num_heads, hd).transpose(0, 2, 1, 3)
    v = v.reshape(B, S, num_heads, hd).transpose(0, 2, 1, 3)
    s = jnp.einsum("bhqd,bhkd->bhqk", q, k) / math.sqrt(hd)
    a = jax.nn.softmax(s, axis=-1)
    ctx = jnp.einsum("bhqk,bhkd->bhqd", a, v).transpose(0, 2, 1, 3).reshape(B, S, D)
    attn = ctx @ params["wo"] + params["bo"]
    out1 = ln(x + attn, params["ln1_g"], params["ln1_b"])
    ff = jnp.maximum(out1 @ params["w1"] + params["b1"], 0.0) @ params["w2"] + params["b2"]
    return ln(out1 + ff, params["ln2_g"], params["ln2_b"])


# ---------------------------------------------------------------------------
def init_params(key, d_model, d_ff):
    ks = jax.random.split(key, 12)

    def lin(kw, kb, fan_in, fan_out):
        bound = 1.0 / math.sqrt(fan_in)
        w = jax.random.uniform(kw, (fan_in, fan_out), jnp.float32, -bound, bound)
        b = jax.random.uniform(kb, (1, fan_out), jnp.float32, -bound, bound)
        return w, b

    p = {}
    p["wq"], p["bq"] = lin(ks[0], ks[1], d_model, d_model)
    p["wk"], p["bk"] = lin(ks[2], ks[3], d_model, d_model)
    p["wv"], p["bv"] = lin(ks[4], ks[5], d_model, d_model)
    p["wo"], p["bo"] = lin(ks[6], ks[7], d_model, d_model)
    p["w1"], p["b1"] = lin(ks[8], ks[9], d_model, d_ff)
    p["w2"], p["b2"] = lin(ks[10], ks[11], d_ff, d_model)
    p["ln1_g"] = jnp.ones((1, d_model), jnp.float32)
    p["ln1_b"] = jnp.zeros((1, d_model), jnp.float32)
    p["ln2_g"] = jnp.ones((1, d_model), jnp.float32)
    p["ln2_b"] = jnp.zeros((1, d_model), jnp.float32)
    return p


if __name__ == "__main__":
    # Small but lane-dense demo dims: D and d_ff are multiples of 128, S a multiple of 8,
    # and B//BT >= 2 so the batch grid has at least two steps.
    B, S, D = 4, 8, 128
    num_heads, d_ff = 4, 256

    key = jax.random.PRNGKey(0)
    kx, kp = jax.random.split(key)
    x = jax.random.normal(kx, (B, S, D), jnp.float32)
    params = init_params(kp, D, d_ff)

    prepared = prepare_params(params, num_heads=num_heads)   # one-time bf16 / head-major prep
    out = transformer_encoder_layer(x, prepared, num_heads=num_heads)
    out = jax.block_until_ready(out)

    ref = reference(x, params, num_heads=num_heads)
    assert out.shape == (B, S, D)
    # Kernel matmuls use bf16 operands (f32 accumulation) and an approx reciprocal in the
    # softmax, so compare against the f32 reference with bf16-appropriate tolerances.
    assert jnp.allclose(out, ref, atol=5e-2, rtol=5e-2), "mismatch vs reference"

    print("KERNEL_OK")
</pallas_src>

<mosaic_0001>
module attributes {stable_mosaic.version = 11 : i64} {
  func.func @_encoder_layer_kernel(%arg0: i32, %arg1: memref<2x8x128xf32, #tpu.memory_space<vmem>>, %arg2: memref<4x128x32xbf16, #tpu.memory_space<vmem>>, %arg3: memref<4x1x32xf32, #tpu.memory_space<vmem>>, %arg4: memref<4x128x32xbf16, #tpu.memory_space<vmem>>, %arg5: memref<4x1x32xf32, #tpu.memory_space<vmem>>, %arg6: memref<4x128x32xbf16, #tpu.memory_space<vmem>>, %arg7: memref<4x1x32xf32, #tpu.memory_space<vmem>>, %arg8: memref<128x128xbf16, #tpu.memory_space<vmem>>, %arg9: memref<1x128xf32, #tpu.memory_space<vmem>>, %arg10: memref<1x128xf32, #tpu.memory_space<vmem>>, %arg11: memref<1x128xf32, #tpu.memory_space<vmem>>, %arg12: memref<128x256xbf16, #tpu.memory_space<vmem>>, %arg13: memref<1x256xf32, #tpu.memory_space<vmem>>, %arg14: memref<256x128xbf16, #tpu.memory_space<vmem>>, %arg15: memref<1x128xf32, #tpu.memory_space<vmem>>, %arg16: memref<1x128xf32, #tpu.memory_space<vmem>>, %arg17: memref<1x128xf32, #tpu.memory_space<vmem>>, %arg18: memref<2x8x128xf32, #tpu.memory_space<vmem>>, %arg19: memref<16x128xbf16, #tpu.memory_space<vmem>>) attributes {dimension_semantics = [#tpu.dimension_semantics<parallel>], iteration_bounds = array<i64: 2>, scalar_prefetch = 0 : i64, scratch_operands = 1 : i64, tpu.core_type = #tpu.core_type<tc>, window_params = [{transform_indices = @transform_0, window_bounds = array<i64: 2, 8, 128>}, {pipeline_mode = #tpu.pipeline_mode<synchronous>, transform_indices = @transform_1, window_bounds = array<i64: 4, 128, 32>}, {pipeline_mode = #tpu.pipeline_mode<synchronous>, transform_indices = @transform_2, window_bounds = array<i64: 4, 1, 32>}, {pipeline_mode = #tpu.pipeline_mode<synchronous>, transform_indices = @transform_3, window_bounds = array<i64: 4, 128, 32>}, {pipeline_mode = #tpu.pipeline_mode<synchronous>, transform_indices = @transform_4, window_bounds = array<i64: 4, 1, 32>}, {pipeline_mode = #tpu.pipeline_mode<synchronous>, transform_indices = @transform_5, window_bounds = array<i64: 4, 128, 32>}, {pipeline_mode = #tpu.pipeline_mode<synchronous>, transform_indices = @transform_6, window_bounds = array<i64: 4, 1, 32>}, {pipeline_mode = #tpu.pipeline_mode<synchronous>, transform_indices = @transform_7, window_bounds = array<i64: 128, 128>}, {pipeline_mode = #tpu.pipeline_mode<synchronous>, transform_indices = @transform_8, window_bounds = array<i64: 1, 128>}, {pipeline_mode = #tpu.pipeline_mode<synchronous>, transform_indices = @transform_9, window_bounds = array<i64: 1, 128>}, {pipeline_mode = #tpu.pipeline_mode<synchronous>, transform_indices = @transform_10, window_bounds = array<i64: 1, 128>}, {pipeline_mode = #tpu.pipeline_mode<synchronous>, transform_indices = @transform_11, window_bounds = array<i64: 128, 256>}, {pipeline_mode = #tpu.pipeline_mode<synchronous>, transform_indices = @transform_12, window_bounds = array<i64: 1, 256>}, {pipeline_mode = #tpu.pipeline_mode<synchronous>, transform_indices = @transform_13, window_bounds = array<i64: 256, 128>}, {pipeline_mode = #tpu.pipeline_mode<synchronous>, transform_indices = @transform_14, window_bounds = array<i64: 1, 128>}, {pipeline_mode = #tpu.pipeline_mode<synchronous>, transform_indices = @transform_15, window_bounds = array<i64: 1, 128>}, {pipeline_mode = #tpu.pipeline_mode<synchronous>, transform_indices = @transform_16, window_bounds = array<i64: 1, 128>}, {transform_indices = @transform_17, window_bounds = array<i64: 2, 8, 128>}]} {
    %c0 = arith.constant 0 : index
    %c0_0 = arith.constant 0 : index
    %c0_1 = arith.constant 0 : index
    %0 = vector.load %arg1[%c0, %c0_0, %c0_1] : memref<2x8x128xf32, #tpu.memory_space<vmem>>, vector<2x8x128xf32>
    %1 = vector.shape_cast %0 : vector<2x8x128xf32> to vector<16x128xf32>
    %2 = arith.truncf %1 : vector<16x128xf32> to vector<16x128xbf16>
    %c0_2 = arith.constant 0 : index
    %c0_3 = arith.constant 0 : index
    %c0_4 = arith.constant 0 : index
    %3 = vector.load %arg2[%c0_2, %c0_3, %c0_4] : memref<4x128x32xbf16, #tpu.memory_space<vmem>>, vector<1x128x32xbf16>
    %4 = vector.shape_cast %3 : vector<1x128x32xbf16> to vector<128x32xbf16>
    %cst = arith.constant dense<0.000000e+00> : vector<16x32xf32>
    %5 = tpu.matmul %2, %4, %cst {dimension_numbers = #tpu.dot_dimension_numbers<[1], [0], [0], [1], [0, 0, 1, 1], [], []>} : vector<16x128xbf16>, vector<128x32xbf16>, vector<16x32xf32> -> vector<16x32xf32>
    %c0_5 = arith.constant 0 : index
    %c0_6 = arith.constant 0 : index
    %c0_7 = arith.constant 0 : index
    %6 = vector.load %arg3[%c0_5, %c0_6, %c0_7] : memref<4x1x32xf32, #tpu.memory_space<vmem>>, vector<1x1x32xf32>
    %7 = vector.shape_cast %6 : vector<1x1x32xf32> to vector<1x32xf32>
    %8 = vector.broadcast %7 : vector<1x32xf32> to vector<16x32xf32>
    %9 = arith.addf %5, %8 : vector<16x32xf32>
    %c0_8 = arith.constant 0 : index
    %c0_9 = arith.constant 0 : index
    %c0_10 = arith.constant 0 : index
    %10 = vector.load %arg4[%c0_8, %c0_9, %c0_10] : memref<4x128x32xbf16, #tpu.memory_space<vmem>>, vector<1x128x32xbf16>
    %11 = vector.shape_cast %10 : vector<1x128x32xbf16> to vector<128x32xbf16>
    %cst_11 = arith.constant dense<0.000000e+00> : vector<16x32xf32>
    %12 = tpu.matmul %2, %11, %cst_11 {dimension_numbers = #tpu.dot_dimension_numbers<[1], [0], [0], [1], [0, 0, 1, 1], [], []>} : vector<16x128xbf16>, vector<128x32xbf16>, vector<16x32xf32> -> vector<16x32xf32>
    %c0_12 = arith.constant 0 : index
    %c0_13 = arith.constant 0 : index
    %c0_14 = arith.constant 0 : index
    %13 = vector.load %arg5[%c0_12, %c0_13, %c0_14] : memref<4x1x32xf32, #tpu.memory_space<vmem>>, vector<1x1x32xf32>
    %14 = vector.shape_cast %13 : vector<1x1x32xf32> to vector<1x32xf32>
    %15 = vector.broadcast %14 : vector<1x32xf32> to vector<16x32xf32>
    %16 = arith.addf %12, %15 : vector<16x32xf32>
    %c0_15 = arith.constant 0 : index
    %c0_16 = arith.constant 0 : index
    %c0_17 = arith.constant 0 : index
    %17 = vector.load %arg6[%c0_15, %c0_16, %c0_17] : memref<4x128x32xbf16, #tpu.memory_space<vmem>>, vector<1x128x32xbf16>
    %18 = vector.shape_cast %17 : vector<1x128x32xbf16> to vector<128x32xbf16>
    %cst_18 = arith.constant dense<0.000000e+00> : vector<16x32xf32>
    %19 = tpu.matmul %2, %18, %cst_18 {dimension_numbers = #tpu.dot_dimension_numbers<[1], [0], [0], [1], [0, 0, 1, 1], [], []>} : vector<16x128xbf16>, vector<128x32xbf16>, vector<16x32xf32> -> vector<16x32xf32>
    %c0_19 = arith.constant 0 : index
    %c0_20 = arith.constant 0 : index
    %c0_21 = arith.constant 0 : index
    %20 = vector.load %arg7[%c0_19, %c0_20, %c0_21] : memref<4x1x32xf32, #tpu.memory_space<vmem>>, vector<1x1x32xf32>
    %21 = vector.shape_cast %20 : vector<1x1x32xf32> to vector<1x32xf32>
    %22 = vector.broadcast %21 : vector<1x32xf32> to vector<16x32xf32>
    %23 = arith.addf %19, %22 : vector<16x32xf32>
    %24 = vector.shape_cast %9 : vector<16x32xf32> to vector<2x8x32xf32>
    %25 = arith.truncf %24 : vector<2x8x32xf32> to vector<2x8x32xbf16>
    %26 = vector.shape_cast %16 : vector<16x32xf32> to vector<2x8x32xf32>
    %27 = arith.truncf %26 : vector<2x8x32xf32> to vector<2x8x32xbf16>
    %28 = vector.shape_cast %23 : vector<16x32xf32> to vector<2x8x32xf32>
    %29 = arith.truncf %28 : vector<2x8x32xf32> to vector<2x8x32xbf16>
    "tpu.trace_start"() <{level = 10 : i32, message = "bqd,bkd->bqk"}> : () -> ()
    %cst_22 = arith.constant dense<0.000000e+00> : vector<2x8x8xf32>
    %30 = tpu.matmul %25, %27, %cst_22 {dimension_numbers = #tpu.dot_dimension_numbers<[2], [2], [1], [1], [0, 0, 0, 1, 1, 1], [0], [0]>} : vector<2x8x32xbf16>, vector<2x8x32xbf16>, vector<2x8x8xf32> -> vector<2x8x8xf32>
    "tpu.trace_stop"() : () -> ()
    %cst_23 = arith.constant 0.176776692 : f32
    %31 = vector.broadcast %cst_23 : f32 to vector<2x8x8xf32>
    %32 = arith.mulf %30, %31 : vector<2x8x8xf32>
    %cst_24 = arith.constant dense<0xFF800000> : vector<2x8xf32>
    %33 = vector.multi_reduction <maximumf>, %32, %cst_24 [2] : vector<2x8x8xf32> to vector<2x8xf32>
    %34 = vector.shape_cast %33 : vector<2x8xf32> to vector<2x8x1xf32>
    %35 = vector.broadcast %34 : vector<2x8x1xf32> to vector<2x8x8xf32>
    %36 = arith.subf %32, %35 : vector<2x8x8xf32>
    %37 = math.exp %36 : vector<2x8x8xf32>
    %cst_25 = arith.constant dense<0.000000e+00> : vector<2x8xf32>
    %38 = vector.multi_reduction <add>, %37, %cst_25 [2] : vector<2x8x8xf32> to vector<2x8xf32>
    %39 = vector.shape_cast %38 : vector<2x8xf32> to vector<2x8x1xf32>
    %40 = tpu.reciprocal %39 {approx = true} : vector<2x8x1xf32> -> vector<2x8x1xf32>
    %41 = vector.broadcast %40 : vector<2x8x1xf32> to vector<2x8x8xf32>
    %42 = arith.mulf %37, %41 : vector<2x8x8xf32>
    %43 = arith.truncf %42 : vector<2x8x8xf32> to vector<2x8x8xbf16>
    "tpu.trace_start"() <{level = 10 : i32, message = "bqk,bkd->bqd"}> : () -> ()
    %cst_26 = arith.constant dense<0.000000e+00> : vector<2x8x32xf32>
    %44 = tpu.matmul %43, %29, %cst_26 {dimension_numbers = #tpu.dot_dimension_numbers<[2], [1], [1], [2], [0, 0, 0, 1, 1, 2], [0], [0]>} : vector<2x8x8xbf16>, vector<2x8x32xbf16>, vector<2x8x32xf32> -> vector<2x8x32xf32>
    "tpu.trace_stop"() : () -> ()
    %45 = vector.shape_cast %44 : vector<2x8x32xf32> to vector<16x32xf32>
    %46 = arith.truncf %45 : vector<16x32xf32> to vector<16x32xbf16>
    %c0_27 = arith.constant 0 : index
    %c0_28 = arith.constant 0 : index
    %47 = vector.load %arg19[%c0_27, %c0_28] : memref<16x128xbf16, #tpu.memory_space<vmem>>, vector<16x32xbf16>
    tpu.vector_store %arg19[%c0_27, %c0_28], %46 {strides = array<i32>} : memref<16x128xbf16, #tpu.memory_space<vmem>>, vector<16x32xbf16>,
    %c1 = arith.constant 1 : index
    %c0_29 = arith.constant 0 : index
    %c0_30 = arith.constant 0 : index
    %48 = vector.load %arg2[%c1, %c0_29, %c0_30] : memref<4x128x32xbf16, #tpu.memory_space<vmem>>, vector<1x128x32xbf16>
    %49 = vector.shape_cast %48 : vector<1x128x32xbf16> to vector<128x32xbf16>
    %cst_31 = arith.constant dense<0.000000e+00> : vector<16x32xf32>
    %50 = tpu.matmul %2, %49, %cst_31 {dimension_numbers = #tpu.dot_dimension_numbers<[1], [0], [0], [1], [0, 0, 1, 1], [], []>} : vector<16x128xbf16>, vector<128x32xbf16>, vector<16x32xf32> -> vector<16x32xf32>
    %c1_32 = arith.constant 1 : index
    %c0_33 = arith.constant 0 : index
    %c0_34 = arith.constant 0 : index
    %51 = vector.load %arg3[%c1_32, %c0_33, %c0_34] : memref<4x1x32xf32, #tpu.memory_space<vmem>>, vector<1x1x32xf32>
    %52 = vector.shape_cast %51 : vector<1x1x32xf32> to vector<1x32xf32>
    %53 = vector.broadcast %52 : vector<1x32xf32> to vector<16x32xf32>
    %54 = arith.addf %50, %53 : vector<16x32xf32>
    %c1_35 = arith.constant 1 : index
    %c0_36 = arith.constant 0 : index
    %c0_37 = arith.constant 0 : index
    %55 = vector.load %arg4[%c1_35, %c0_36, %c0_37] : memref<4x128x32xbf16, #tpu.memory_space<vmem>>, vector<1x128x32xbf16>
    %56 = vector.shape_cast %55 : vector<1x128x32xbf16> to vector<128x32xbf16>
    %cst_38 = arith.constant dense<0.000000e+00> : vector<16x32xf32>
    %57 = tpu.matmul %2, %56, %cst_38 {dimension_numbers = #tpu.dot_dimension_numbers<[1], [0], [0], [1], [0, 0, 1, 1], [], []>} : vector<16x128xbf16>, vector<128x32xbf16>, vector<16x32xf32> -> vector<16x32xf32>
    %c1_39 = arith.constant 1 : index
    %c0_40 = arith.constant 0 : index
    %c0_41 = arith.constant 0 : index
    %58 = vector.load %arg5[%c1_39, %c0_40, %c0_41] : memref<4x1x32xf32, #tpu.memory_space<vmem>>, vector<1x1x32xf32>
    %59 = vector.shape_cast %58 : vector<1x1x32xf32> to vector<1x32xf32>
    %60 = vector.broadcast %59 : vector<1x32xf32> to vector<16x32xf32>
    %61 = arith.addf %57, %60 : vector<16x32xf32>
    %c1_42 = arith.constant 1 : index
    %c0_43 = arith.constant 0 : index
    %c0_44 = arith.constant 0 : index
    %62 = vector.load %arg6[%c1_42, %c0_43, %c0_44] : memref<4x128x32xbf16, #tpu.memory_space<vmem>>, vector<1x128x32xbf16>
    %63 = vector.shape_cast %62 : vector<1x128x32xbf16> to vector<128x32xbf16>
    %cst_45 = arith.constant dense<0.000000e+00> : vector<16x32xf32>
    %64 = tpu.matmul %2, %63, %cst_45 {dimension_numbers = #tpu.dot_dimension_numbers<[1], [0], [0], [1], [0, 0, 1, 1], [], []>} : vector<16x128xbf16>, vector<128x32xbf16>, vector<16x32xf32> -> vector<16x32xf32>
    %c1_46 = arith.constant 1 : index
    %c0_47 = arith.constant 0 : index
    %c0_48 = arith.constant 0 : index
    %65 = vector.load %arg7[%c1_46, %c0_47, %c0_48] : memref<4x1x32xf32, #tpu.memory_space<vmem>>, vector<1x1x32xf32>
    %66 = vector.shape_cast %65 : vector<1x1x32xf32> to vector<1x32xf32>
    %67 = vector.broadcast %66 : vector<1x32xf32> to vector<16x32xf32>
    %68 = arith.addf %64, %67 : vector<16x32xf32>
    %69 = vector.shape_cast %54 : vector<16x32xf32> to vector<2x8x32xf32>
    %70 = arith.truncf %69 : vector<2x8x32xf32> to vector<2x8x32xbf16>
    %71 = vector.shape_cast %61 : vector<16x32xf32> to vector<2x8x32xf32>
    %72 = arith.truncf %71 : vector<2x8x32xf32> to vector<2x8x32xbf16>
    %73 = vector.shape_cast %68 : vector<16x32xf32> to vector<2x8x32xf32>
    %74 = arith.truncf %73 : vector<2x8x32xf32> to vector<2x8x32xbf16>
    "tpu.trace_start"() <{level = 10 : i32, message = "bqd,bkd->bqk"}> : () -> ()
    %cst_49 = arith.constant dense<0.000000e+00> : vector<2x8x8xf32>
    %75 = tpu.matmul %70, %72, %cst_49 {dimension_numbers = #tpu.dot_dimension_numbers<[2], [2], [1], [1], [0, 0, 0, 1, 1, 1], [0], [0]>} : vector<2x8x32xbf16>, vector<2x8x32xbf16>, vector<2x8x8xf32> -> vector<2x8x8xf32>
    "tpu.trace_stop"() : () -> ()
    %cst_50 = arith.constant 0.176776692 : f32
    %76 = vector.broadcast %cst_50 : f32 to vector<2x8x8xf32>
    %77 = arith.mulf %75, %76 : vector<2x8x8xf32>
    %cst_51 = arith.constant dense<0xFF800000> : vector<2x8xf32>
    %78 = vector.multi_reduction <maximumf>, %77, %cst_51 [2] : vector<2x8x8xf32> to vector<2x8xf32>
    %79 = vector.shape_cast %78 : vector<2x8xf32> to vector<2x8x1xf32>
    %80 = vector.broadcast %79 : vector<2x8x1xf32> to vector<2x8x8xf32>
    %81 = arith.subf %77, %80 : vector<2x8x8xf32>
    %82 = math.exp %81 : vector<2x8x8xf32>
    %cst_52 = arith.constant dense<0.000000e+00> : vector<2x8xf32>
    %83 = vector.multi_reduction <add>, %82, %cst_52 [2] : vector<2x8x8xf32> to vector<2x8xf32>
    %84 = vector.shape_cast %83 : vector<2x8xf32> to vector<2x8x1xf32>
    %85 = tpu.reciprocal %84 {approx = true} : vector<2x8x1xf32> -> vector<2x8x1xf32>
    %86 = vector.broadcast %85 : vector<2x8x1xf32> to vector<2x8x8xf32>
    %87 = arith.mulf %82, %86 : vector<2x8x8xf32>
    %88 = arith.truncf %87 : vector<2x8x8xf32> to vector<2x8x8xbf16>
    "tpu.trace_start"() <{level = 10 : i32, message = "bqk,bkd->bqd"}> : () -> ()
    %cst_53 = arith.constant dense<0.000000e+00> : vector<2x8x32xf32>
    %89 = tpu.matmul %88, %74, %cst_53 {dimension_numbers = #tpu.dot_dimension_numbers<[2], [1], [1], [2], [0, 0, 0, 1, 1, 2], [0], [0]>} : vector<2x8x8xbf16>, vector<2x8x32xbf16>, vector<2x8x32xf32> -> vector<2x8x32xf32>
    "tpu.trace_stop"() : () -> ()
    %90 = vector.shape_cast %89 : vector<2x8x32xf32> to vector<16x32xf32>
    %91 = arith.truncf %90 : vector<16x32xf32> to vector<16x32xbf16>
    %c0_54 = arith.constant 0 : index
    %c32 = arith.constant 32 : index
    %92 = vector.load %arg19[%c0_54, %c32] : memref<16x128xbf16, #tpu.memory_space<vmem>>, vector<16x32xbf16>
    tpu.vector_store %arg19[%c0_54, %c32], %91 {strides = array<i32>} : memref<16x128xbf16, #tpu.memory_space<vmem>>, vector<16x32xbf16>,
    %c2 = arith.constant 2 : index
    %c0_55 = arith.constant 0 : index
    %c0_56 = arith.constant 0 : index
    %93 = vector.load %arg2[%c2, %c0_55, %c0_56] : memref<4x128x32xbf16, #tpu.memory_space<vmem>>, vector<1x128x32xbf16>
    %94 = vector.shape_cast %93 : vector<1x128x32xbf16> to vector<128x32xbf16>
    %cst_57 = arith.constant dense<0.000000e+00> : vector<16x32xf32>
    %95 = tpu.matmul %2, %94, %cst_57 {dimension_numbers = #tpu.dot_dimension_numbers<[1], [0], [0], [1], [0, 0, 1, 1], [], []>} : vector<16x128xbf16>, vector<128x32xbf16>, vector<16x32xf32> -> vector<16x32xf32>
    %c2_58 = arith.constant 2 : index
    %c0_59 = arith.constant 0 : index
    %c0_60 = arith.constant 0 : index
    %96 = vector.load %arg3[%c2_58, %c0_59, %c0_60] : memref<4x1x32xf32, #tpu.memory_space<vmem>>, vector<1x1x32xf32>
    %97 = vector.shape_cast %96 : vector<1x1x32xf32> to vector<1x32xf32>
    %98 = vector.broadcast %97 : vector<1x32xf32> to vector<16x32xf32>
    %99 = arith.addf %95, %98 : vector<16x32xf32>
    %c2_61 = arith.constant 2 : index
    %c0_62 = arith.constant 0 : index
    %c0_63 = arith.constant 0 : index
    %100 = vector.load %arg4[%c2_61, %c0_62, %c0_63] : memref<4x128x32xbf16, #tpu.memory_space<vmem>>, vector<1x128x32xbf16>
    %101 = vector.shape_cast %100 : vector<1x128x32xbf16> to vector<128x32xbf16>
    %cst_64 = arith.constant dense<0.000000e+00> : vector<16x32xf32>
    %102 = tpu.matmul %2, %101, %cst_64 {dimension_numbers = #tpu.dot_dimension_numbers<[1], [0], [0], [1], [0, 0, 1, 1], [], []>} : vector<16x128xbf16>, vector<128x32xbf16>, vector<16x32xf32> -> vector<16x32xf32>
    %c2_65 = arith.constant 2 : index
    %c0_66 = arith.constant 0 : index
    %c0_67 = arith.constant 0 : index
    %103 = vector.load %arg5[%c2_65, %c0_66, %c0_67] : memref<4x1x32xf32, #tpu.memory_space<vmem>>, vector<1x1x32xf32>
    %104 = vector.shape_cast %103 : vector<1x1x32xf32> to vector<1x32xf32>
    %105 = vector.broadcast %104 : vector<1x32xf32> to vector<16x32xf32>
    %106 = arith.addf %102, %105 : vector<16x32xf32>
    %c2_68 = arith.constant 2 : index
    %c0_69 = arith.constant 0 : index
    %c0_70 = arith.constant 0 : index
    %107 = vector.load %arg6[%c2_68, %c0_69, %c0_70] : memref<4x128x32xbf16, #tpu.memory_space<vmem>>, vector<1x128x32xbf16>
    %108 = vector.shape_cast %107 : vector<1x128x32xbf16> to vector<128x32xbf16>
    %cst_71 = arith.constant dense<0.000000e+00> : vector<16x32xf32>
    %109 = tpu.matmul %2, %108, %cst_71 {dimension_numbers = #tpu.dot_dimension_numbers<[1], [0], [0], [1], [0, 0, 1, 1], [], []>} : vector<16x128xbf16>, vector<128x32xbf16>, vector<16x32xf32> -> vector<16x32xf32>
    %c2_72 = arith.constant 2 : index
    %c0_73 = arith.constant 0 : index
    %c0_74 = arith.constant 0 : index
    %110 = vector.load %arg7[%c2_72, %c0_73, %c0_74] : memref<4x1x32xf32, #tpu.memory_space<vmem>>, vector<1x1x32xf32>
    %111 = vector.shape_cast %110 : vector<1x1x32xf32> to vector<1x32xf32>
    %112 = vector.broadcast %111 : vector<1x32xf32> to vector<16x32xf32>
    %113 = arith.addf %109, %112 : vector<16x32xf32>
    %114 = vector.shape_cast %99 : vector<16x32xf32> to vector<2x8x32xf32>
    %115 = arith.truncf %114 : vector<2x8x32xf32> to vector<2x8x32xbf16>
    %116 = vector.shape_cast %106 : vector<16x32xf32> to vector<2x8x32xf32>
    %117 = arith.truncf %116 : vector<2x8x32xf32> to vector<2x8x32xbf16>
    %118 = vector.shape_cast %113 : vector<16x32xf32> to vector<2x8x32xf32>
    %119 = arith.truncf %118 : vector<2x8x32xf32> to vector<2x8x32xbf16>
    "tpu.trace_start"() <{level = 10 : i32, message = "bqd,bkd->bqk"}> : () -> ()
    %cst_75 = arith.constant dense<0.000000e+00> : vector<2x8x8xf32>
    %120 = tpu.matmul %115, %117, %cst_75 {dimension_numbers = #tpu.dot_dimension_numbers<[2], [2], [1], [1], [0, 0, 0, 1, 1, 1], [0], [0]>} : vector<2x8x32xbf16>, vector<2x8x32xbf16>, vector<2x8x8xf32> -> vector<2x8x8xf32>
    "tpu.trace_stop"() : () -> ()
    %cst_76 = arith.constant 0.176776692 : f32
    %121 = vector.broadcast %cst_76 : f32 to vector<2x8x8xf32>
    %122 = arith.mulf %120, %121 : vector<2x8x8xf32>
    %cst_77 = arith.constant dense<0xFF800000> : vector<2x8xf32>
    %123 = vector.multi_reduction <maximumf>, %122, %cst_77 [2] : vector<2x8x8xf32> to vector<2x8xf32>
    %124 = vector.shape_cast %123 : vector<2x8xf32> to vector<2x8x1xf32>
    %125 = vector.broadcast %124 : vector<2x8x1xf32> to vector<2x8x8xf32>
    %126 = arith.subf %122, %125 : vector<2x8x8xf32>
    %127 = math.exp %126 : vector<2x8x8xf32>
    %cst_78 = arith.constant dense<0.000000e+00> : vector<2x8xf32>
    %128 = vector.multi_reduction <add>, %127, %cst_78 [2] : vector<2x8x8xf32> to vector<2x8xf32>
    %129 = vector.shape_cast %128 : vector<2x8xf32> to vector<2x8x1xf32>
    %130 = tpu.reciprocal %129 {approx = true} : vector<2x8x1xf32> -> vector<2x8x1xf32>
    %131 = vector.broadcast %130 : vector<2x8x1xf32> to vector<2x8x8xf32>
    %132 = arith.mulf %127, %131 : vector<2x8x8xf32>
    %133 = arith.truncf %132 : vector<2x8x8xf32> to vector<2x8x8xbf16>
    "tpu.trace_start"() <{level = 10 : i32, message = "bqk,bkd->bqd"}> : () -> ()
    %cst_79 = arith.constant dense<0.000000e+00> : vector<2x8x32xf32>
    %134 = tpu.matmul %133, %119, %cst_79 {dimension_numbers = #tpu.dot_dimension_numbers<[2], [1], [1], [2], [0, 0, 0, 1, 1, 2], [0], [0]>} : vector<2x8x8xbf16>, vector<2x8x32xbf16>, vector<2x8x32xf32> -> vector<2x8x32xf32>
    "tpu.trace_stop"() : () -> ()
    %135 = vector.shape_cast %134 : vector<2x8x32xf32> to vector<16x32xf32>
    %136 = arith.truncf %135 : vector<16x32xf32> to vector<16x32xbf16>
    %c0_80 = arith.constant 0 : index
    %c64 = arith.constant 64 : index
    %137 = vector.load %arg19[%c0_80, %c64] : memref<16x128xbf16, #tpu.memory_space<vmem>>, vector<16x32xbf16>
    tpu.vector_store %arg19[%c0_80, %c64], %136 {strides = array<i32>} : memref<16x128xbf16, #tpu.memory_space<vmem>>, vector<16x32xbf16>,
    %c3 = arith.constant 3 : index
    %c0_81 = arith.constant 0 : index
    %c0_82 = arith.constant 0 : index
    %138 = vector.load %arg2[%c3, %c0_81, %c0_82] : memref<4x128x32xbf16, #tpu.memory_space<vmem>>, vector<1x128x32xbf16>
    %139 = vector.shape_cast %138 : vector<1x128x32xbf16> to vector<128x32xbf16>
    %cst_83 = arith.constant dense<0.000000e+00> : vector<16x32xf32>
    %140 = tpu.matmul %2, %139, %cst_83 {dimension_numbers = #tpu.dot_dimension_numbers<[1], [0], [0], [1], [0, 0, 1, 1], [], []>} : vector<16x128xbf16>, vector<128x32xbf16>, vector<16x32xf32> -> vector<16x32xf32>
    %c3_84 = arith.constant 3 : index
    %c0_85 = arith.constant 0 : index
    %c0_86 = arith.constant 0 : index
    %141 = vector.load %arg3[%c3_84, %c0_85, %c0_86] : memref<4x1x32xf32, #tpu.memory_space<vmem>>, vector<1x1x32xf32>
    %142 = vector.shape_cast %141 : vector<1x1x32xf32> to vector<1x32xf32>
    %143 = vector.broadcast %142 : vector<1x32xf32> to vector<16x32xf32>
    %144 = arith.addf %140, %143 : vector<16x32xf32>
    %c3_87 = arith.constant 3 : index
    %c0_88 = arith.constant 0 : index
    %c0_89 = arith.constant 0 : index
    %145 = vector.load %arg4[%c3_87, %c0_88, %c0_89] : memref<4x128x32xbf16, #tpu.memory_space<vmem>>, vector<1x128x32xbf16>
    %146 = vector.shape_cast %145 : vector<1x128x32xbf16> to vector<128x32xbf16>
    %cst_90 = arith.constant dense<0.000000e+00> : vector<16x32xf32>
    %147 = tpu.matmul %2, %146, %cst_90 {dimension_numbers = #tpu.dot_dimension_numbers<[1], [0], [0], [1], [0, 0, 1, 1], [], []>} : vector<16x128xbf16>, vector<128x32xbf16>, vector<16x32xf32> -> vector<16x32xf32>
    %c3_91 = arith.constant 3 : index
    %c0_92 = arith.constant 0 : index
    %c0_93 = arith.constant 0 : index
    %148 = vector.load %arg5[%c3_91, %c0_92, %c0_93] : memref<4x1x32xf32, #tpu.memory_space<vmem>>, vector<1x1x32xf32>
    %149 = vector.shape_cast %148 : vector<1x1x32xf32> to vector<1x32xf32>
    %150 = vector.broadcast %149 : vector<1x32xf32> to vector<16x32xf32>
    %151 = arith.addf %147, %150 : vector<16x32xf32>
    %c3_94 = arith.constant 3 : index
    %c0_95 = arith.constant 0 : index
    %c0_96 = arith.constant 0 : index
    %152 = vector.load %arg6[%c3_94, %c0_95, %c0_96] : memref<4x128x32xbf16, #tpu.memory_space<vmem>>, vector<1x128x32xbf16>
    %153 = vector.shape_cast %152 : vector<1x128x32xbf16> to vector<128x32xbf16>
    %cst_97 = arith.constant dense<0.000000e+00> : vector<16x32xf32>
    %154 = tpu.matmul %2, %153, %cst_97 {dimension_numbers = #tpu.dot_dimension_numbers<[1], [0], [0], [1], [0, 0, 1, 1], [], []>} : vector<16x128xbf16>, vector<128x32xbf16>, vector<16x32xf32> -> vector<16x32xf32>
    %c3_98 = arith.constant 3 : index
    %c0_99 = arith.constant 0 : index
    %c0_100 = arith.constant 0 : index
    %155 = vector.load %arg7[%c3_98, %c0_99, %c0_100] : memref<4x1x32xf32, #tpu.memory_space<vmem>>, vector<1x1x32xf32>
    %156 = vector.shape_cast %155 : vector<1x1x32xf32> to vector<1x32xf32>
    %157 = vector.broadcast %156 : vector<1x32xf32> to vector<16x32xf32>
    %158 = arith.addf %154, %157 : vector<16x32xf32>
    %159 = vector.shape_cast %144 : vector<16x32xf32> to vector<2x8x32xf32>
    %160 = arith.truncf %159 : vector<2x8x32xf32> to vector<2x8x32xbf16>
    %161 = vector.shape_cast %151 : vector<16x32xf32> to vector<2x8x32xf32>
    %162 = arith.truncf %161 : vector<2x8x32xf32> to vector<2x8x32xbf16>
    %163 = vector.shape_cast %158 : vector<16x32xf32> to vector<2x8x32xf32>
    %164 = arith.truncf %163 : vector<2x8x32xf32> to vector<2x8x32xbf16>
    "tpu.trace_start"() <{level = 10 : i32, message = "bqd,bkd->bqk"}> : () -> ()
    %cst_101 = arith.constant dense<0.000000e+00> : vector<2x8x8xf32>
    %165 = tpu.matmul %160, %162, %cst_101 {dimension_numbers = #tpu.dot_dimension_numbers<[2], [2], [1], [1], [0, 0, 0, 1, 1, 1], [0], [0]>} : vector<2x8x32xbf16>, vector<2x8x32xbf16>, vector<2x8x8xf32> -> vector<2x8x8xf32>
    "tpu.trace_stop"() : () -> ()
    %cst_102 = arith.constant 0.176776692 : f32
    %166 = vector.broadcast %cst_102 : f32 to vector<2x8x8xf32>
    %167 = arith.mulf %165, %166 : vector<2x8x8xf32>
    %cst_103 = arith.constant dense<0xFF800000> : vector<2x8xf32>
    %168 = vector.multi_reduction <maximumf>, %167, %cst_103 [2] : vector<2x8x8xf32> to vector<2x8xf32>
    %169 = vector.shape_cast %168 : vector<2x8xf32> to vector<2x8x1xf32>
    %170 = vector.broadcast %169 : vector<2x8x1xf32> to vector<2x8x8xf32>
    %171 = arith.subf %167, %170 : vector<2x8x8xf32>
    %172 = math.exp %171 : vector<2x8x8xf32>
    %cst_104 = arith.constant dense<0.000000e+00> : vector<2x8xf32>
    %173 = vector.multi_reduction <add>, %172, %cst_104 [2] : vector<2x8x8xf32> to vector<2x8xf32>
    %174 = vector.shape_cast %173 : vector<2x8xf32> to vector<2x8x1xf32>
    %175 = tpu.reciprocal %174 {approx = true} : vector<2x8x1xf32> -> vector<2x8x1xf32>
    %176 = vector.broadcast %175 : vector<2x8x1xf32> to vector<2x8x8xf32>
    %177 = arith.mulf %172, %176 : vector<2x8x8xf32>
    %178 = arith.truncf %177 : vector<2x8x8xf32> to vector<2x8x8xbf16>
    "tpu.trace_start"() <{level = 10 : i32, message = "bqk,bkd->bqd"}> : () -> ()
    %cst_105 = arith.constant dense<0.000000e+00> : vector<2x8x32xf32>
    %179 = tpu.matmul %178, %164, %cst_105 {dimension_numbers = #tpu.dot_dimension_numbers<[2], [1], [1], [2], [0, 0, 0, 1, 1, 2], [0], [0]>} : vector<2x8x8xbf16>, vector<2x8x32xbf16>, vector<2x8x32xf32> -> vector<2x8x32xf32>
    "tpu.trace_stop"() : () -> ()
    %180 = vector.shape_cast %179 : vector<2x8x32xf32> to vector<16x32xf32>
    %181 = arith.truncf %180 : vector<16x32xf32> to vector<16x32xbf16>
    %c0_106 = arith.constant 0 : index
    %c96 = arith.constant 96 : index
    %182 = vector.load %arg19[%c0_106, %c96] : memref<16x128xbf16, #tpu.memory_space<vmem>>, vector<16x32xbf16>
    tpu.vector_store %arg19[%c0_106, %c96], %181 {strides = array<i32>} : memref<16x128xbf16, #tpu.memory_space<vmem>>, vector<16x32xbf16>,
    %c0_107 = arith.constant 0 : index
    %c0_108 = arith.constant 0 : index
    %183 = vector.load %arg19[%c0_107, %c0_108] : memref<16x128xbf16, #tpu.memory_space<vmem>>, vector<16x128xbf16>
    %c0_109 = arith.constant 0 : index
    %c0_110 = arith.constant 0 : index
    %184 = vector.load %arg8[%c0_109, %c0_110] : memref<128x128xbf16, #tpu.memory_space<vmem>>, vector<128x128xbf16>
    %cst_111 = arith.constant dense<0.000000e+00> : vector<16x128xf32>
    %185 = tpu.matmul %183, %184, %cst_111 {dimension_numbers = #tpu.dot_dimension_numbers<[1], [0], [0], [1], [0, 0, 1, 1], [], []>} : vector<16x128xbf16>, vector<128x128xbf16>, vector<16x128xf32> -> vector<16x128xf32>
    %c0_112 = arith.constant 0 : index
    %c0_113 = arith.constant 0 : index
    %186 = vector.load %arg9[%c0_112, %c0_113] : memref<1x128xf32, #tpu.memory_space<vmem>>, vector<1x128xf32>
    %187 = vector.broadcast %186 : vector<1x128xf32> to vector<16x128xf32>
    %188 = arith.addf %185, %187 : vector<16x128xf32>
    %189 = arith.addf %1, %188 : vector<16x128xf32>
    %cst_114 = arith.constant dense<0.000000e+00> : vector<16xf32>
    %190 = vector.multi_reduction <add>, %189, %cst_114 [1] : vector<16x128xf32> to vector<16xf32>
    %191 = vector.shape_cast %190 : vector<16xf32> to vector<16x1xf32>
    %cst_115 = arith.constant 1.280000e+02 : f32
    %192 = vector.broadcast %cst_115 : f32 to vector<16x1xf32>
    %193 = arith.divf %191, %192 : vector<16x1xf32>
    %194 = vector.broadcast %193 : vector<16x1xf32> to vector<16x128xf32>
    %195 = arith.subf %189, %194 : vector<16x128xf32>
    %196 = arith.mulf %195, %195 : vector<16x128xf32>
    %cst_116 = arith.constant dense<0.000000e+00> : vector<16xf32>
    %197 = vector.multi_reduction <add>, %196, %cst_116 [1] : vector<16x128xf32> to vector<16xf32>
    %198 = vector.shape_cast %197 : vector<16xf32> to vector<16x1xf32>
    %cst_117 = arith.constant 1.280000e+02 : f32
    %199 = vector.broadcast %cst_117 : f32 to vector<16x1xf32>
    %200 = arith.divf %198, %199 : vector<16x1xf32>
    %201 = vector.broadcast %193 : vector<16x1xf32> to vector<16x128xf32>
    %202 = arith.subf %189, %201 : vector<16x128xf32>
    %cst_118 = arith.constant 9.99999974E-6 : f32
    %203 = vector.broadcast %cst_118 : f32 to vector<16x1xf32>
    %204 = arith.addf %200, %203 : vector<16x1xf32>
    %205 = math.rsqrt %204 : vector<16x1xf32>
    %206 = vector.broadcast %205 : vector<16x1xf32> to vector<16x128xf32>
    %207 = arith.mulf %202, %206 : vector<16x128xf32>
    %c0_119 = arith.constant 0 : index
    %c0_120 = arith.constant 0 : index
    %208 = vector.load %arg10[%c0_119, %c0_120] : memref<1x128xf32, #tpu.memory_space<vmem>>, vector<1x128xf32>
    %209 = vector.broadcast %208 : vector<1x128xf32> to vector<16x128xf32>
    %210 = arith.mulf %207, %209 : vector<16x128xf32>
    %c0_121 = arith.constant 0 : index
    %c0_122 = arith.constant 0 : index
    %211 = vector.load %arg11[%c0_121, %c0_122] : memref<1x128xf32, #tpu.memory_space<vmem>>, vector<1x128xf32>
    %212 = vector.broadcast %211 : vector<1x128xf32> to vector<16x128xf32>
    %213 = arith.addf %210, %212 : vector<16x128xf32>
    %214 = arith.truncf %213 : vector<16x128xf32> to vector<16x128xbf16>
    %cst_123 = arith.constant 0.000000e+00 : f32
    %215 = vector.broadcast %cst_123 : f32 to vector<16x128xf32>
    %c0_124 = arith.constant 0 : index
    %c0_125 = arith.constant 0 : index
    %216 = vector.load %arg12[%c0_124, %c0_125] : memref<128x256xbf16, #tpu.memory_space<vmem>>, vector<128x256xbf16>
    %cst_126 = arith.constant dense<0.000000e+00> : vector<16x256xf32>
    %217 = tpu.matmul %214, %216, %cst_126 {dimension_numbers = #tpu.dot_dimension_numbers<[1], [0], [0], [1], [0, 0, 1, 1], [], []>} : vector<16x128xbf16>, vector<128x256xbf16>, vector<16x256xf32> -> vector<16x256xf32>
    %c0_127 = arith.constant 0 : index
    %c0_128 = arith.constant 0 : index
    %218 = vector.load %arg13[%c0_127, %c0_128] : memref<1x256xf32, #tpu.memory_space<vmem>>, vector<1x256xf32>
    %219 = vector.broadcast %218 : vector<1x256xf32> to vector<16x256xf32>
    %220 = arith.addf %217, %219 : vector<16x256xf32>
    %cst_129 = arith.constant 0.000000e+00 : f32
    %221 = vector.broadcast %cst_129 : f32 to vector<16x256xf32>
    %222 = arith.maximumf %220, %221 : vector<16x256xf32>
    %223 = arith.truncf %222 : vector<16x256xf32> to vector<16x256xbf16>
    %c0_130 = arith.constant 0 : index
    %c0_131 = arith.constant 0 : index
    %224 = vector.load %arg14[%c0_130, %c0_131] : memref<256x128xbf16, #tpu.memory_space<vmem>>, vector<256x128xbf16>
    %cst_132 = arith.constant dense<0.000000e+00> : vector<16x128xf32>
    %225 = tpu.matmul %223, %224, %cst_132 {dimension_numbers = #tpu.dot_dimension_numbers<[1], [0], [0], [1], [0, 0, 1, 1], [], []>} : vector<16x256xbf16>, vector<256x128xbf16>, vector<16x128xf32> -> vector<16x128xf32>
    %226 = arith.addf %215, %225 : vector<16x128xf32>
    %c0_133 = arith.constant 0 : index
    %c0_134 = arith.constant 0 : index
    %227 = vector.load %arg15[%c0_133, %c0_134] : memref<1x128xf32, #tpu.memory_space<vmem>>, vector<1x128xf32>
    %228 = vector.broadcast %227 : vector<1x128xf32> to vector<16x128xf32>
    %229 = arith.addf %226, %228 : vector<16x128xf32>
    %230 = arith.addf %213, %229 : vector<16x128xf32>
    %cst_135 = arith.constant dense<0.000000e+00> : vector<16xf32>
    %231 = vector.multi_reduction <add>, %230, %cst_135 [1] : vector<16x128xf32> to vector<16xf32>
    %232 = vector.shape_cast %231 : vector<16xf32> to vector<16x1xf32>
    %cst_136 = arith.constant 1.280000e+02 : f32
    %233 = vector.broadcast %cst_136 : f32 to vector<16x1xf32>
    %234 = arith.divf %232, %233 : vector<16x1xf32>
    %235 = vector.broadcast %234 : vector<16x1xf32> to vector<16x128xf32>
    %236 = arith.subf %230, %235 : vector<16x128xf32>
    %237 = arith.mulf %236, %236 : vector<16x128xf32>
    %cst_137 = arith.constant dense<0.000000e+00> : vector<16xf32>
    %238 = vector.multi_reduction <add>, %237, %cst_137 [1] : vector<16x128xf32> to vector<16xf32>
    %239 = vector.shape_cast %238 : vector<16xf32> to vector<16x1xf32>
    %cst_138 = arith.constant 1.280000e+02 : f32
    %240 = vector.broadcast %cst_138 : f32 to vector<16x1xf32>
    %241 = arith.divf %239, %240 : vector<16x1xf32>
    %242 = vector.broadcast %234 : vector<16x1xf32> to vector<16x128xf32>
    %243 = arith.subf %230, %242 : vector<16x128xf32>
    %cst_139 = arith.constant 9.99999974E-6 : f32
    %244 = vector.broadcast %cst_139 : f32 to vector<16x1xf32>
    %245 = arith.addf %241, %244 : vector<16x1xf32>
    %246 = math.rsqrt %245 : vector<16x1xf32>
    %247 = vector.broadcast %246 : vector<16x1xf32> to vector<16x128xf32>
    %248 = arith.mulf %243, %247 : vector<16x128xf32>
    %c0_140 = arith.constant 0 : index
    %c0_141 = arith.constant 0 : index
    %249 = vector.load %arg16[%c0_140, %c0_141] : memref<1x128xf32, #tpu.memory_space<vmem>>, vector<1x128xf32>
    %250 = vector.broadcast %249 : vector<1x128xf32> to vector<16x128xf32>
    %251 = arith.mulf %248, %250 : vector<16x128xf32>
    %c0_142 = arith.constant 0 : index
    %c0_143 = arith.constant 0 : index
    %252 = vector.load %arg17[%c0_142, %c0_143] : memref<1x128xf32, #tpu.memory_space<vmem>>, vector<1x128xf32>
    %253 = vector.broadcast %252 : vector<1x128xf32> to vector<16x128xf32>
    %254 = arith.addf %251, %253 : vector<16x128xf32>
    %255 = vector.shape_cast %254 : vector<16x128xf32> to vector<2x8x128xf32>
    %c0_144 = arith.constant 0 : index
    %c0_145 = arith.constant 0 : index
    %c0_146 = arith.constant 0 : index
    %256 = vector.load %arg18[%c0_144, %c0_145, %c0_146] : memref<2x8x128xf32, #tpu.memory_space<vmem>>, vector<2x8x128xf32>
    tpu.vector_store %arg18[%c0_144, %c0_145, %c0_146], %255 {strides = array<i32>} : memref<2x8x128xf32, #tpu.memory_space<vmem>>, vector<2x8x128xf32>,
    return
  }
  func.func @transform_0(%arg0: i32) -> (i32, i32, i32) {
    %c0_i32 = arith.constant 0 : i32
    %c0_i32_0 = arith.constant 0 : i32
    %c0_i32_1 = arith.constant 0 : i32
    return %arg0, %c0_i32, %c0_i32_0 : i32, i32, i32
  }
  func.func @transform_1(%arg0: i32) -> (i32, i32, i32) {
    %c0_i32 = arith.constant 0 : i32
    %c0_i32_0 = arith.constant 0 : i32
    %c0_i32_1 = arith.constant 0 : i32
    %c0_i32_2 = arith.constant 0 : i32
    return %c0_i32, %c0_i32_0, %c0_i32_1 : i32, i32, i32
  }
  func.func @transform_2(%arg0: i32) -> (i32, i32, i32) {
    %c0_i32 = arith.constant 0 : i32
    %c0_i32_0 = arith.constant 0 : i32
    %c0_i32_1 = arith.constant 0 : i32
    %c0_i32_2 = arith.constant 0 : i32
    return %c0_i32, %c0_i32_0, %c0_i32_1 : i32, i32, i32
  }
  func.func @transform_3(%arg0: i32) -> (i32, i32, i32) {
    %c0_i32 = arith.constant 0 : i32
    %c0_i32_0 = arith.constant 0 : i32
    %c0_i32_1 = arith.constant 0 : i32
    %c0_i32_2 = arith.constant 0 : i32
    return %c0_i32, %c0_i32_0, %c0_i32_1 : i32, i32, i32
  }
  func.func @transform_4(%arg0: i32) -> (i32, i32, i32) {
    %c0_i32 = arith.constant 0 : i32
    %c0_i32_0 = arith.constant 0 : i32
    %c0_i32_1 = arith.constant 0 : i32
    %c0_i32_2 = arith.constant 0 : i32
    return %c0_i32, %c0_i32_0, %c0_i32_1 : i32, i32, i32
  }
  func.func @transform_5(%arg0: i32) -> (i32, i32, i32) {
    %c0_i32 = arith.constant 0 : i32
    %c0_i32_0 = arith.constant 0 : i32
    %c0_i32_1 = arith.constant 0 : i32
    %c0_i32_2 = arith.constant 0 : i32
    return %c0_i32, %c0_i32_0, %c0_i32_1 : i32, i32, i32
  }
  func.func @transform_6(%arg0: i32) -> (i32, i32, i32) {
    %c0_i32 = arith.constant 0 : i32
    %c0_i32_0 = arith.constant 0 : i32
    %c0_i32_1 = arith.constant 0 : i32
    %c0_i32_2 = arith.constant 0 : i32
    return %c0_i32, %c0_i32_0, %c0_i32_1 : i32, i32, i32
  }
  func.func @transform_7(%arg0: i32) -> (i32, i32) {
    %c0_i32 = arith.constant 0 : i32
    %c0_i32_0 = arith.constant 0 : i32
    %c0_i32_1 = arith.constant 0 : i32
    return %c0_i32, %c0_i32_0 : i32, i32
  }
  func.func @transform_8(%arg0: i32) -> (i32, i32) {
    %c0_i32 = arith.constant 0 : i32
    %c0_i32_0 = arith.constant 0 : i32
    %c0_i32_1 = arith.constant 0 : i32
    return %c0_i32, %c0_i32_0 : i32, i32
  }
  func.func @transform_9(%arg0: i32) -> (i32, i32) {
    %c0_i32 = arith.constant 0 : i32
    %c0_i32_0 = arith.constant 0 : i32
    %c0_i32_1 = arith.constant 0 : i32
    return %c0_i32, %c0_i32_0 : i32, i32
  }
  func.func @transform_10(%arg0: i32) -> (i32, i32) {
    %c0_i32 = arith.constant 0 : i32
    %c0_i32_0 = arith.constant 0 : i32
    %c0_i32_1 = arith.constant 0 : i32
    return %c0_i32, %c0_i32_0 : i32, i32
  }
  func.func @transform_11(%arg0: i32) -> (i32, i32) {
    %c0_i32 = arith.constant 0 : i32
    %c0_i32_0 = arith.constant 0 : i32
    %c0_i32_1 = arith.constant 0 : i32
    return %c0_i32, %c0_i32_0 : i32, i32
  }
  func.func @transform_12(%arg0: i32) -> (i32, i32) {
    %c0_i32 = arith.constant 0 : i32
    %c0_i32_0 = arith.constant 0 : i32
    %c0_i32_1 = arith.constant 0 : i32
    return %c0_i32, %c0_i32_0 : i32, i32
  }
  func.func @transform_13(%arg0: i32) -> (i32, i32) {
    %c0_i32 = arith.constant 0 : i32
    %c0_i32_0 = arith.constant 0 : i32
    %c0_i32_1 = arith.constant 0 : i32
    return %c0_i32, %c0_i32_0 : i32, i32
  }
  func.func @transform_14(%arg0: i32) -> (i32, i32) {
    %c0_i32 = arith.constant 0 : i32
    %c0_i32_0 = arith.constant 0 : i32
    %c0_i32_1 = arith.constant 0 : i32
    return %c0_i32, %c0_i32_0 : i32, i32
  }
  func.func @transform_15(%arg0: i32) -> (i32, i32) {
    %c0_i32 = arith.constant 0 : i32
    %c0_i32_0 = arith.constant 0 : i32
    %c0_i32_1 = arith.constant 0 : i32
    return %c0_i32, %c0_i32_0 : i32, i32
  }
  func.func @transform_16(%arg0: i32) -> (i32, i32) {
    %c0_i32 = arith.constant 0 : i32
    %c0_i32_0 = arith.constant 0 : i32
    %c0_i32_1 = arith.constant 0 : i32
    return %c0_i32, %c0_i32_0 : i32, i32
  }
  func.func @transform_17(%arg0: i32) -> (i32, i32, i32) {
    %c0_i32 = arith.constant 0 : i32
    %c0_i32_0 = arith.constant 0 : i32
    %c0_i32_1 = arith.constant 0 : i32
    return %arg0, %c0_i32, %c0_i32_0 : i32, i32, i32
  }
}

</mosaic_0001>

<llo_original>
// kernel: tpu_custom_call.1
$region0: #{tpu_custom_call.1}
  #allocation0 [shape = 'u32[]', space=smem, size = 0x4, offset = 0x4, fixed_abs, tag = 'smem constant byte address 0x4 - core index']
  #allocation1 [shape = 'u32[144,128]{1,0:T(1,128)}', space=vmem, size = 0x12000, scoped, tag = 'internal scratch']
  #allocation2 [shape = 'bf16[16,128]{1,0:T(8,128)(2,1)}', space=vmem, size = 0x1000, scoped, tag = 'scratch operand']
  %s0 = inlined_call_operand.vmem [shape: f32[4,8,128], index: 0, kind: input, shape index: {}]
  %s1 = inlined_call_operand.vmem [shape: bf16[4,128,32], index: 1, kind: input, shape index: {}]
  %s2 = inlined_call_operand.vmem [shape: f32[4,1,32], index: 2, kind: input, shape index: {}]
  %s3 = inlined_call_operand.vmem [shape: bf16[4,128,32], index: 3, kind: input, shape index: {}]
  %s4 = inlined_call_operand.vmem [shape: f32[4,1,32], index: 4, kind: input, shape index: {}]
  %s5 = inlined_call_operand.vmem [shape: bf16[4,128,32], index: 5, kind: input, shape index: {}]
  %s6 = inlined_call_operand.vmem [shape: f32[4,1,32], index: 6, kind: input, shape index: {}]
  %s7 = inlined_call_operand.vmem [shape: bf16[128,128], index: 7, kind: input, shape index: {}]
  %s8 = inlined_call_operand.vmem [shape: f32[1,128], index: 8, kind: input, shape index: {}]
  %s9 = inlined_call_operand.vmem [shape: f32[1,128], index: 9, kind: input, shape index: {}]
  %s10 = inlined_call_operand.vmem [shape: f32[1,128], index: 10, kind: input, shape index: {}]
  %s11 = inlined_call_operand.vmem [shape: bf16[128,256], index: 11, kind: input, shape index: {}]
  %s12 = inlined_call_operand.vmem [shape: f32[1,256], index: 12, kind: input, shape index: {}]
  %s13 = inlined_call_operand.vmem [shape: bf16[256,128], index: 13, kind: input, shape index: {}]
  %s14 = inlined_call_operand.vmem [shape: f32[1,128], index: 14, kind: input, shape index: {}]
  %s15 = inlined_call_operand.vmem [shape: f32[1,128], index: 15, kind: input, shape index: {}]
  %s16 = inlined_call_operand.vmem [shape: f32[1,128], index: 16, kind: input, shape index: {}]
  %s17 = inlined_call_operand.hbm [shape: f32[4,8,128], index: 17, kind: output, shape index: {}]
  %s18 = sld [smem:[#allocation0]]
  $region101: #{tpu_custom_call.1} parent=0
    _
  %s20 = ssub.s32 1, %s18
  %s21 = scalar_select 0, %s20, %s18
  $region1: #{tpu_custom_call.1} parent=0
    #allocation3 [shape = 'u8[16384]{0}', space=vmem, size = 0x4000, scoped, tag = 'output window, operand 0']
    #allocation4 [shape = 's32[2]{0}', space=sflag, size = 0x8, scoped, tag = 'scoped memory for tpu_custom_call.1']
    %22 = vsyncpa [#allocation4], 0
    %s23 = scalar_lea.sflag [#allocation4], 1
    %24 = vsyncpa %s23, 0
    loop: start=0, step=1, limit=4
    $region2: #{tpu_custom_call.1} parent=1 // loop_pre_header
      _
    $region3: #{tpu_custom_call.1} parent=1 // loop_header
      %s26 = sphi 0, %s30
      %p27 = scmp.ge.s32.totalorder %s26, 4
      %s36 = sphi 0, %s38
      %s39 = sphi 0, %s36
      %s40 = sphi 0, %s39
      %s56 = sphi 0, %s40
      %s60 = sphi 0, %s60
      %s62 = sphi 0, %s60
      %s63 = sphi 0, %s62
      %s77 = sphi 0, %s63
      %s81 = sphi 0, %s81
      %s83 = sphi 0, %s81
      %s84 = sphi 0, %s83
      %s98 = sphi 0, %s84
      %s102 = sphi 0, %s102
      %s104 = sphi 0, %s102
      %s105 = sphi 0, %s104
      %s119 = sphi 0, %s105
      %s123 = sphi 0, %s123
      %s125 = sphi 0, %s123
      %s126 = sphi 0, %s125
      %s140 = sphi 0, %s126
      %s144 = sphi 0, %s144
      %s146 = sphi 0, %s144
      %s147 = sphi 0, %s146
      %s161 = sphi 0, %s147
      %s165 = sphi 0, %s165
      %s167 = sphi 0, %s165
      %s168 = sphi 0, %s167
      %s182 = sphi 0, %s168
      %s186 = sphi 0, %s186
      %s188 = sphi 0, %s186
      %s189 = sphi 0, %s188
      %s203 = sphi 0, %s189
      %s207 = sphi 0, %s207
      %s209 = sphi 0, %s207
      %s210 = sphi 0, %s209
      %s224 = sphi 0, %s210
      %s228 = sphi 0, %s228
      %s230 = sphi 0, %s228
      %s231 = sphi 0, %s230
      %s245 = sphi 0, %s231
      %s249 = sphi 0, %s249
      %s251 = sphi 0, %s249
      %s252 = sphi 0, %s251
      %s266 = sphi 0, %s252
      %s270 = sphi 0, %s270
      %s272 = sphi 0, %s270
      %s273 = sphi 0, %s272
      %s287 = sphi 0, %s273
      %s291 = sphi 0, %s291
      %s293 = sphi 0, %s291
      %s294 = sphi 0, %s293
      %s308 = sphi 0, %s294
      %s312 = sphi 0, %s312
      %s314 = sphi 0, %s312
      %s315 = sphi 0, %s314
      %s329 = sphi 0, %s315
      %s333 = sphi 0, %s333
      %s335 = sphi 0, %s333
      %s336 = sphi 0, %s335
      %s350 = sphi 0, %s336
      %s354 = sphi 0, %s354
      %s356 = sphi 0, %s354
      %s357 = sphi 0, %s356
      %s371 = sphi 0, %s357
      %s375 = sphi 0, %s375
      %s377 = sphi 0, %s375
      %s378 = sphi 0, %s377
      %s392 = sphi 0, %s378
      %s398 = sphi 0, %s400
      %s401 = sphi 0, %s398
      %s402 = sphi 0, %s401
      %s418 = sphi 0, %s402
    $region4: #{tpu_custom_call.1} parent=1 // loop_header_branch
      %29 = sbr.rel (%p27) target = $region8
    $region5: #{tpu_custom_call.1} parent=1 // loop_body
      %s31 = ssub.s32 %s26, 1
      %s32 = ssub.s32 %s26, 2
      %s33 = sadd.s32 %s26, 1
      %s34 = ssub.s32 %s26, %s33
      %p35 = scmp.eq.s32.totalorder %s34, 0
      %s37 = sadd.s32 %s36, 1
      %s38 = scalar_select %p35, %s36, %s37
      %p41 = pneg %p35
      %p42 = scmp.eq.s32.totalorder %s26, 1
      %p43 = por %p41, %p42
      %p44 = scmp.ne.s32.totalorder %s36, %s39
      %p45 = scmp.eq.s32.totalorder %s26, 0
      %p46 = por %p44, %p45
      %p47 = scmp.ne.s32.totalorder %s36, %s39
      %p48 = scmp.eq.s32.totalorder %s31, 1
      %p49 = por %p47, %p48
      %p50 = scmp.ne.s32.totalorder %s39, %s40
      %p51 = scmp.eq.s32.totalorder %s31, 0
      %p52 = por %p50, %p51
      %p53 = scmp.ne.s32.totalorder %s39, %s40
      %p54 = scmp.eq.s32.totalorder %s32, 1
      %p55 = por %p53, %p54
      %p57 = scmp.ne.s32.totalorder %s40, %s56
      %p58 = scmp.eq.s32.totalorder %s32, 0
      %p59 = por %p57, %p58
      %s61 = sadd.s32 %s60, 1
      %p64 = scmp.eq.s32.totalorder %s26, 1
      %p65 = scmp.ne.s32.totalorder %s60, %s62
      %p66 = scmp.eq.s32.totalorder %s26, 0
      %p67 = por %p65, %p66
      %p68 = scmp.ne.s32.totalorder %s60, %s62
      %p69 = scmp.eq.s32.totalorder %s31, 1
      %p70 = por %p68, %p69
      %p71 = scmp.ne.s32.totalorder %s62, %s63
      %p72 = scmp.eq.s32.totalorder %s31, 0
      %p73 = por %p71, %p72
      %p74 = scmp.ne.s32.totalorder %s62, %s63
      %p75 = scmp.eq.s32.totalorder %s32, 1
      %p76 = por %p74, %p75
      %p78 = scmp.ne.s32.totalorder %s63, %s77
      %p79 = scmp.eq.s32.totalorder %s32, 0
      %p80 = por %p78, %p79
      %s82 = sadd.s32 %s81, 1
      %p85 = scmp.eq.s32.totalorder %s26, 1
      %p86 = scmp.ne.s32.totalorder %s81, %s83
      %p87 = scmp.eq.s32.totalorder %s26, 0
      %p88 = por %p86, %p87
      %p89 = scmp.ne.s32.totalorder %s81, %s83
      %p90 = scmp.eq.s32.totalorder %s31, 1
      %p91 = por %p89, %p90
      %p92 = scmp.ne.s32.totalorder %s83, %s84
      %p93 = scmp.eq.s32.totalorder %s31, 0
      %p94 = por %p92, %p93
      %p95 = scmp.ne.s32.totalorder %s83, %s84
      %p96 = scmp.eq.s32.totalorder %s32, 1
      %p97 = por %p95, %p96
      %p99 = scmp.ne.s32.totalorder %s84, %s98
      %p100 = scmp.eq.s32.totalorder %s32, 0
      %p101 = por %p99, %p100
      %s103 = sadd.s32 %s102, 1
      %p106 = scmp.eq.s32.totalorder %s26, 1
      %p107 = scmp.ne.s32.totalorder %s102, %s104
      %p108 = scmp.eq.s32.totalorder %s26, 0
      %p109 = por %p107, %p108
      %p110 = scmp.ne.s32.totalorder %s102, %s104
      %p111 = scmp.eq.s32.totalorder %s31, 1
      %p112 = por %p110, %p111
      %p113 = scmp.ne.s32.totalorder %s104, %s105
      %p114 = scmp.eq.s32.totalorder %s31, 0
      %p115 = por %p113, %p114
      %p116 = scmp.ne.s32.totalorder %s104, %s105
      %p117 = scmp.eq.s32.totalorder %s32, 1
      %p118 = por %p116, %p117
      %p120 = scmp.ne.s32.totalorder %s105, %s119
      %p121 = scmp.eq.s32.totalorder %s32, 0
      %p122 = por %p120, %p121
      %s124 = sadd.s32 %s123, 1
      %p127 = scmp.eq.s32.totalorder %s26, 1
      %p128 = scmp.ne.s32.totalorder %s123, %s125
      %p129 = scmp.eq.s32.totalorder %s26, 0
      %p130 = por %p128, %p129
      %p131 = scmp.ne.s32.totalorder %s123, %s125
      %p132 = scmp.eq.s32.totalorder %s31, 1
      %p133 = por %p131, %p132
      %p134 = scmp.ne.s32.totalorder %s125, %s126
      %p135 = scmp.eq.s32.totalorder %s31, 0
      %p136 = por %p134, %p135
      %p137 = scmp.ne.s32.totalorder %s125, %s126
      %p138 = scmp.eq.s32.totalorder %s32, 1
      %p139 = por %p137, %p138
      %p141 = scmp.ne.s32.totalorder %s126, %s140
      %p142 = scmp.eq.s32.totalorder %s32, 0
      %p143 = por %p141, %p142
      %s145 = sadd.s32 %s144, 1
      %p148 = scmp.eq.s32.totalorder %s26, 1
      %p149 = scmp.ne.s32.totalorder %s144, %s146
      %p150 = scmp.eq.s32.totalorder %s26, 0
      %p151 = por %p149, %p150
      %p152 = scmp.ne.s32.totalorder %s144, %s146
      %p153 = scmp.eq.s32.totalorder %s31, 1
      %p154 = por %p152, %p153
      %p155 = scmp.ne.s32.totalorder %s146, %s147
      %p156 = scmp.eq.s32.totalorder %s31, 0
      %p157 = por %p155, %p156
      %p158 = scmp.ne.s32.totalorder %s146, %s147
      %p159 = scmp.eq.s32.totalorder %s32, 1
      %p160 = por %p158, %p159
      %p162 = scmp.ne.s32.totalorder %s147, %s161
      %p163 = scmp.eq.s32.totalorder %s32, 0
      %p164 = por %p162, %p163
      %s166 = sadd.s32 %s165, 1
      %p169 = scmp.eq.s32.totalorder %s26, 1
      %p170 = scmp.ne.s32.totalorder %s165, %s167
      %p171 = scmp.eq.s32.totalorder %s26, 0
      %p172 = por %p170, %p171
      %p173 = scmp.ne.s32.totalorder %s165, %s167
      %p174 = scmp.eq.s32.totalorder %s31, 1
      %p175 = por %p173, %p174
      %p176 = scmp.ne.s32.totalorder %s167, %s168
      %p177 = scmp.eq.s32.totalorder %s31, 0
      %p178 = por %p176, %p177
      %p179 = scmp.ne.s32.totalorder %s167, %s168
      %p180 = scmp.eq.s32.totalorder %s32, 1
      %p181 = por %p179, %p180
      %p183 = scmp.ne.s32.totalorder %s168, %s182
      %p184 = scmp.eq.s32.totalorder %s32, 0
      %p185 = por %p183, %p184
      %s187 = sadd.s32 %s186, 1
      %p190 = scmp.eq.s32.totalorder %s26, 1
      %p191 = scmp.ne.s32.totalorder %s186, %s188
      %p192 = scmp.eq.s32.totalorder %s26, 0
      %p193 = por %p191, %p192
      %p194 = scmp.ne.s32.totalorder %s186, %s188
      %p195 = scmp.eq.s32.totalorder %s31, 1
      %p196 = por %p194, %p195
      %p197 = scmp.ne.s32.totalorder %s188, %s189
      %p198 = scmp.eq.s32.totalorder %s31, 0
      %p199 = por %p197, %p198
      %p200 = scmp.ne.s32.totalorder %s188, %s189
      %p201 = scmp.eq.s32.totalorder %s32, 1
      %p202 = por %p200, %p201
      %p204 = scmp.ne.s32.totalorder %s189, %s203
      %p205 = scmp.eq.s32.totalorder %s32, 0
      %p206 = por %p204, %p205
      %s208 = sadd.s32 %s207, 1
      %p211 = scmp.eq.s32.totalorder %s26, 1
      %p212 = scmp.ne.s32.totalorder %s207, %s209
      %p213 = scmp.eq.s32.totalorder %s26, 0
      %p214 = por %p212, %p213
      %p215 = scmp.ne.s32.totalorder %s207, %s209
      %p216 = scmp.eq.s32.totalorder %s31, 1
      %p217 = por %p215, %p216
      %p218 = scmp.ne.s32.totalorder %s209, %s210
      %p219 = scmp.eq.s32.totalorder %s31, 0
      %p220 = por %p218, %p219
      %p221 = scmp.ne.s32.totalorder %s209, %s210
      %p222 = scmp.eq.s32.totalorder %s32, 1
      %p223 = por %p221, %p222
      %p225 = scmp.ne.s32.totalorder %s210, %s224
      %p226 = scmp.eq.s32.totalorder %s32, 0
      %p227 = por %p225, %p226
      %s229 = sadd.s32 %s228, 1
      %p232 = scmp.eq.s32.totalorder %s26, 1
      %p233 = scmp.ne.s32.totalorder %s228, %s230
      %p234 = scmp.eq.s32.totalorder %s26, 0
      %p235 = por %p233, %p234
      %p236 = scmp.ne.s32.totalorder %s228, %s230
      %p237 = scmp.eq.s32.totalorder %s31, 1
      %p238 = por %p236, %p237
      %p239 = scmp.ne.s32.totalorder %s230, %s231
      %p240 = scmp.eq.s32.totalorder %s31, 0
      %p241 = por %p239, %p240
      %p242 = scmp.ne.s32.totalorder %s230, %s231
      %p243 = scmp.eq.s32.totalorder %s32, 1
      %p244 = por %p242, %p243
      %p246 = scmp.ne.s32.totalorder %s231, %s245
      %p247 = scmp.eq.s32.totalorder %s32, 0
      %p248 = por %p246, %p247
      %s250 = sadd.s32 %s249, 1
      %p253 = scmp.eq.s32.totalorder %s26, 1
      %p254 = scmp.ne.s32.totalorder %s249, %s251
      %p255 = scmp.eq.s32.totalorder %s26, 0
      %p256 = por %p254, %p255
      %p257 = scmp.ne.s32.totalorder %s249, %s251
      %p258 = scmp.eq.s32.totalorder %s31, 1
      %p259 = por %p257, %p258
      %p260 = scmp.ne.s32.totalorder %s251, %s252
      %p261 = scmp.eq.s32.totalorder %s31, 0
      %p262 = por %p260, %p261
      %p263 = scmp.ne.s32.totalorder %s251, %s252
      %p264 = scmp.eq.s32.totalorder %s32, 1
      %p265 = por %p263, %p264
      %p267 = scmp.ne.s32.totalorder %s252, %s266
      %p268 = scmp.eq.s32.totalorder %s32, 0
      %p269 = por %p267, %p268
      %s271 = sadd.s32 %s270, 1
      %p274 = scmp.eq.s32.totalorder %s26, 1
      %p275 = scmp.ne.s32.totalorder %s270, %s272
      %p276 = scmp.eq.s32.totalorder %s26, 0
      %p277 = por %p275, %p276
      %p278 = scmp.ne.s32.totalorder %s270, %s272
      %p279 = scmp.eq.s32.totalorder %s31, 1
      %p280 = por %p278, %p279
      %p281 = scmp.ne.s32.totalorder %s272, %s273
      %p282 = scmp.eq.s32.totalorder %s31, 0
      %p283 = por %p281, %p282
      %p284 = scmp.ne.s32.totalorder %s272, %s273
      %p285 = scmp.eq.s32.totalorder %s32, 1
      %p286 = por %p284, %p285
      %p288 = scmp.ne.s32.totalorder %s273, %s287
      %p289 = scmp.eq.s32.totalorder %s32, 0
      %p290 = por %p288, %p289
      %s292 = sadd.s32 %s291, 1
      %p295 = scmp.eq.s32.totalorder %s26, 1
      %p296 = scmp.ne.s32.totalorder %s291, %s293
      %p297 = scmp.eq.s32.totalorder %s26, 0
      %p298 = por %p296, %p297
      %p299 = scmp.ne.s32.totalorder %s291, %s293
      %p300 = scmp.eq.s32.totalorder %s31, 1
      %p301 = por %p299, %p300
      %p302 = scmp.ne.s32.totalorder %s293, %s294
      %p303 = scmp.eq.s32.totalorder %s31, 0
      %p304 = por %p302, %p303
      %p305 = scmp.ne.s32.totalorder %s293, %s294
      %p306 = scmp.eq.s32.totalorder %s32, 1
      %p307 = por %p305, %p306
      %p309 = scmp.ne.s32.totalorder %s294, %s308
      %p310 = scmp.eq.s32.totalorder %s32, 0
      %p311 = por %p309, %p310
      %s313 = sadd.s32 %s312, 1
      %p316 = scmp.eq.s32.totalorder %s26, 1
      %p317 = scmp.ne.s32.totalorder %s312, %s314
      %p318 = scmp.eq.s32.totalorder %s26, 0
      %p319 = por %p317, %p318
      %p320 = scmp.ne.s32.totalorder %s312, %s314
      %p321 = scmp.eq.s32.totalorder %s31, 1
      %p322 = por %p320, %p321
      %p323 = scmp.ne.s32.totalorder %s314, %s315
      %p324 = scmp.eq.s32.totalorder %s31, 0
      %p325 = por %p323, %p324
      %p326 = scmp.ne.s32.totalorder %s314, %s315
      %p327 = scmp.eq.s32.totalorder %s32, 1
      %p328 = por %p326, %p327
      %p330 = scmp.ne.s32.totalorder %s315, %s329
      %p331 = scmp.eq.s32.totalorder %s32, 0
      %p332 = por %p330, %p331
      %s334 = sadd.s32 %s333, 1
      %p337 = scmp.eq.s32.totalorder %s26, 1
      %p338 = scmp.ne.s32.totalorder %s333, %s335
      %p339 = scmp.eq.s32.totalorder %s26, 0
      %p340 = por %p338, %p339
      %p341 = scmp.ne.s32.totalorder %s333, %s335
      %p342 = scmp.eq.s32.totalorder %s31, 1
      %p343 = por %p341, %p342
      %p344 = scmp.ne.s32.totalorder %s335, %s336
      %p345 = scmp.eq.s32.totalorder %s31, 0
      %p346 = por %p344, %p345
      %p347 = scmp.ne.s32.totalorder %s335, %s336
      %p348 = scmp.eq.s32.totalorder %s32, 1
      %p349 = por %p347, %p348
      %p351 = scmp.ne.s32.totalorder %s336, %s350
      %p352 = scmp.eq.s32.totalorder %s32, 0
      %p353 = por %p351, %p352
      %s355 = sadd.s32 %s354, 1
      %p358 = scmp.eq.s32.totalorder %s26, 1
      %p359 = scmp.ne.s32.totalorder %s354, %s356
      %p360 = scmp.eq.s32.totalorder %s26, 0
      %p361 = por %p359, %p360
      %p362 = scmp.ne.s32.totalorder %s354, %s356
      %p363 = scmp.eq.s32.totalorder %s31, 1
      %p364 = por %p362, %p363
      %p365 = scmp.ne.s32.totalorder %s356, %s357
      %p366 = scmp.eq.s32.totalorder %s31, 0
      %p367 = por %p365, %p366
      %p368 = scmp.ne.s32.totalorder %s356, %s357
      %p369 = scmp.eq.s32.totalorder %s32, 1
      %p370 = por %p368, %p369
      %p372 = scmp.ne.s32.totalorder %s357, %s371
      %p373 = scmp.eq.s32.totalorder %s32, 0
      %p374 = por %p372, %p373
      %s376 = sadd.s32 %s375, 1
      %p379 = scmp.eq.s32.totalorder %s26, 1
      %p380 = scmp.ne.s32.totalorder %s375, %s377
      %p381 = scmp.eq.s32.totalorder %s26, 0
      %p382 = por %p380, %p381
      %p383 = scmp.ne.s32.totalorder %s375, %s377
      %p384 = scmp.eq.s32.totalorder %s31, 1
      %p385 = por %p383, %p384
      %p386 = scmp.ne.s32.totalorder %s377, %s378
      %p387 = scmp.eq.s32.totalorder %s31, 0
      %p388 = por %p386, %p387
      %p389 = scmp.ne.s32.totalorder %s377, %s378
      %p390 = scmp.eq.s32.totalorder %s32, 1
      %p391 = por %p389, %p390
      %p393 = scmp.ne.s32.totalorder %s378, %s392
      %p394 = scmp.eq.s32.totalorder %s32, 0
      %p395 = por %p393, %p394
      %s396 = ssub.s32 %s26, %s33
      %p397 = scmp.eq.s32.totalorder %s396, 0
      %s399 = sadd.s32 %s398, 1
      %s400 = scalar_select %p397, %s398, %s399
      %p403 = pneg %p397
      %p404 = scmp.eq.s32.totalorder %s26, 1
      %p405 = por %p403, %p404
      %p406 = scmp.ne.s32.totalorder %s398, %s401
      %p407 = scmp.eq.s32.totalorder %s26, 0
      %p408 = por %p406, %p407
      %p409 = scmp.ne.s32.totalorder %s398, %s401
      %p410 = scmp.eq.s32.totalorder %s31, 1
      %p411 = por %p409, %p410
      %p412 = scmp.ne.s32.totalorder %s401, %s402
      %p413 = scmp.eq.s32.totalorder %s31, 0
      %p414 = por %p412, %p413
      %p415 = scmp.ne.s32.totalorder %s401, %s402
      %p416 = scmp.eq.s32.totalorder %s32, 1
      %p417 = por %p415, %p416
      %p419 = scmp.ne.s32.totalorder %s402, %s418
      %p420 = scmp.eq.s32.totalorder %s32, 0
      %p421 = por %p419, %p420
      %p422 = scmp.le.s32.totalorder 1, %s26
      %p423 = scmp.lt.s32.totalorder %s26, 3
      %p424 = pnand %p422, %p423
      %p425 = pneg %p424
      // Predicated region
      $region9: #{tpu_custom_call.1} parent=5 // pred_check
        _
      $region10: #{tpu_custom_call.1} parent=5 // pred_check_branch
        %427 = sbr.rel (%p424) target = $region12
      $region11: #{tpu_custom_call.1} parent=5 // pred_region
        %s428 = ssub.s32 %s26, 1
        // Predicated region
        $region13: #{tpu_custom_call.1} parent=11 // pred_check
          %p429 = pneg %p73
        $region14: #{tpu_custom_call.1} parent=11 // pred_check_branch
          %431 = sbr.rel (%p429) target = $region16
        $region15: #{tpu_custom_call.1} parent=11 // pred_region
          _
        $region16: #{tpu_custom_call.1} parent=11 // pred_fallthru
          _
        // Predicated region
        $region17: #{tpu_custom_call.1} parent=11 // pred_check
          %p432 = pneg %p94
        $region18: #{tpu_custom_call.1} parent=11 // pred_check_branch
          %434 = sbr.rel (%p432) target = $region20
        $region19: #{tpu_custom_call.1} parent=11 // pred_region
          _
        $region20: #{tpu_custom_call.1} parent=11 // pred_fallthru
          _
        // Predicated region
        $region21: #{tpu_custom_call.1} parent=11 // pred_check
          %p435 = pneg %p115
        $region22: #{tpu_custom_call.1} parent=11 // pred_check_branch
          %437 = sbr.rel (%p435) target = $region24
        $region23: #{tpu_custom_call.1} parent=11 // pred_region
          _
        $region24: #{tpu_custom_call.1} parent=11 // pred_fallthru
          _
        // Predicated region
        $region25: #{tpu_custom_call.1} parent=11 // pred_check
          %p438 = pneg %p136
        $region26: #{tpu_custom_call.1} parent=11 // pred_check_branch
          %440 = sbr.rel (%p438) target = $region28
        $region27: #{tpu_custom_call.1} parent=11 // pred_region
          _
        $region28: #{tpu_custom_call.1} parent=11 // pred_fallthru
          _
        // Predicated region
        $region29: #{tpu_custom_call.1} parent=11 // pred_check
          %p441 = pneg %p157
        $region30: #{tpu_custom_call.1} parent=11 // pred_check_branch
          %443 = sbr.rel (%p441) target = $region32
        $region31: #{tpu_custom_call.1} parent=11 // pred_region
          _
        $region32: #{tpu_custom_call.1} parent=11 // pred_fallthru
          _
        // Predicated region
        $region33: #{tpu_custom_call.1} parent=11 // pred_check
          %p444 = pneg %p178
        $region34: #{tpu_custom_call.1} parent=11 // pred_check_branch
          %446 = sbr.rel (%p444) target = $region36
        $region35: #{tpu_custom_call.1} parent=11 // pred_region
          _
        $region36: #{tpu_custom_call.1} parent=11 // pred_fallthru
          _
        // Predicated region
        $region37: #{tpu_custom_call.1} parent=11 // pred_check
          %p447 = pneg %p199
        $region38: #{tpu_custom_call.1} parent=11 // pred_check_branch
          %449 = sbr.rel (%p447) target = $region40
        $region39: #{tpu_custom_call.1} parent=11 // pred_region
          _
        $region40: #{tpu_custom_call.1} parent=11 // pred_fallthru
          _
        // Predicated region
        $region41: #{tpu_custom_call.1} parent=11 // pred_check
          %p450 = pneg %p220
        $region42: #{tpu_custom_call.1} parent=11 // pred_check_branch
          %452 = sbr.rel (%p450) target = $region44
        $region43: #{tpu_custom_call.1} parent=11 // pred_region
          _
        $region44: #{tpu_custom_call.1} parent=11 // pred_fallthru
          _
        // Predicated region
        $region45: #{tpu_custom_call.1} parent=11 // pred_check
          %p453 = pneg %p241
        $region46: #{tpu_custom_call.1} parent=11 // pred_check_branch
          %455 = sbr.rel (%p453) target = $region48
        $region47: #{tpu_custom_call.1} parent=11 // pred_region
          _
        $region48: #{tpu_custom_call.1} parent=11 // pred_fallthru
          _
        // Predicated region
        $region49: #{tpu_custom_call.1} parent=11 // pred_check
          %p456 = pneg %p262
        $region50: #{tpu_custom_call.1} parent=11 // pred_check_branch
          %458 = sbr.rel (%p456) target = $region52
        $region51: #{tpu_custom_call.1} parent=11 // pred_region
          _
        $region52: #{tpu_custom_call.1} parent=11 // pred_fallthru
          _
        // Predicated region
        $region53: #{tpu_custom_call.1} parent=11 // pred_check
          %p459 = pneg %p283
        $region54: #{tpu_custom_call.1} parent=11 // pred_check_branch
          %461 = sbr.rel (%p459) target = $region56
        $region55: #{tpu_custom_call.1} parent=11 // pred_region
          _
        $region56: #{tpu_custom_call.1} parent=11 // pred_fallthru
          _
        // Predicated region
        $region57: #{tpu_custom_call.1} parent=11 // pred_check
          %p462 = pneg %p304
        $region58: #{tpu_custom_call.1} parent=11 // pred_check_branch
          %464 = sbr.rel (%p462) target = $region60
        $region59: #{tpu_custom_call.1} parent=11 // pred_region
          _
        $region60: #{tpu_custom_call.1} parent=11 // pred_fallthru
          _
        // Predicated region
        $region61: #{tpu_custom_call.1} parent=11 // pred_check
          %p465 = pneg %p325
        $region62: #{tpu_custom_call.1} parent=11 // pred_check_branch
          %467 = sbr.rel (%p465) target = $region64
        $region63: #{tpu_custom_call.1} parent=11 // pred_region
          _
        $region64: #{tpu_custom_call.1} parent=11 // pred_fallthru
          _
        // Predicated region
        $region65: #{tpu_custom_call.1} parent=11 // pred_check
          %p468 = pneg %p346
        $region66: #{tpu_custom_call.1} parent=11 // pred_check_branch
          %470 = sbr.rel (%p468) target = $region68
        $region67: #{tpu_custom_call.1} parent=11 // pred_region
          _
        $region68: #{tpu_custom_call.1} parent=11 // pred_fallthru
          _
        // Predicated region
        $region69: #{tpu_custom_call.1} parent=11 // pred_check
          %p471 = pneg %p367
        $region70: #{tpu_custom_call.1} parent=11 // pred_check_branch
          %473 = sbr.rel (%p471) target = $region72
        $region71: #{tpu_custom_call.1} parent=11 // pred_region
          _
        $region72: #{tpu_custom_call.1} parent=11 // pred_fallthru
          _
        // Predicated region
        $region73: #{tpu_custom_call.1} parent=11 // pred_check
          %p474 = pneg %p388
        $region74: #{tpu_custom_call.1} parent=11 // pred_check_branch
          %476 = sbr.rel (%p474) target = $region76
        $region75: #{tpu_custom_call.1} parent=11 // pred_region
          _
        $region76: #{tpu_custom_call.1} parent=11 // pred_fallthru
          _
      $region12: #{tpu_custom_call.1} parent=5 // pred_fallthru
        _
      %p477 = scmp.lt.s32.totalorder %s26, 2
      // Predicated region
      $region77: #{tpu_custom_call.1} parent=5 // pred_check
        %p478 = pneg %p477
      $region78: #{tpu_custom_call.1} parent=5 // pred_check_branch
        %480 = sbr.rel (%p478) target = $region80
      $region79: #{tpu_custom_call.1} parent=5 // pred_region
        // Predicated region
        $region81: #{tpu_custom_call.1} parent=79 // pred_check
          %p481 = pneg %p46
        $region82: #{tpu_custom_call.1} parent=79 // pred_check_branch
          %483 = sbr.rel (%p481) target = $region84
        $region83: #{tpu_custom_call.1} parent=79 // pred_region
          %s484 = smul.u32 2, %s26
          %p485 = scmp.lt.s32.totalorder %s484, 3
          %s486 = scalar_select %p485, %s484, 3
          %s487 = smul.addr %s486, 8
          %s488 = scalar_lea.vmem %s0, %s487
          %s489 = smul.u32 2, %s26
        $region84: #{tpu_custom_call.1} parent=79 // pred_fallthru
          _
      $region80: #{tpu_custom_call.1} parent=5 // pred_fallthru
        _
      %p490 = scmp.le.s32.totalorder 1, %s26
      %p491 = scmp.lt.s32.totalorder %s26, 3
      %p492 = pnand %p490, %p491
      %p493 = pneg %p492
      // Predicated region
      $region85: #{tpu_custom_call.1} parent=5 // pred_check
        _
      $region86: #{tpu_custom_call.1} parent=5 // pred_check_branch
        %495 = sbr.rel (%p492) target = $region88
      $region87: #{tpu_custom_call.1} parent=5 // pred_region
        %s496 = ssub.s32 %s26, 1
        %s497 = smul.u32 2, %s31
        %p498 = scmp.lt.s32.totalorder %s497, 3
        %s499 = scalar_select %p498, %s497, 3
        %s500 = smul.addr %s499, 8
        %s501 = scalar_lea.vmem %s0, %s500
        %p502 = pneg %p52
        %p503 = pneg %p49
        %p504 = pneg %p73
        %p505 = pneg %p70
        %p506 = pneg %p94
        %p507 = pneg %p91
        %p508 = pneg %p115
        %p509 = pneg %p112
        %p510 = pneg %p136
        %p511 = pneg %p133
        %p512 = pneg %p157
        %p513 = pneg %p154
        %p514 = pneg %p178
        %p515 = pneg %p175
        %p516 = pneg %p199
        %p517 = pneg %p196
        %p518 = pneg %p220
        %p519 = pneg %p217
        %p520 = pneg %p241
        %p521 = pneg %p238
        %p522 = pneg %p262
        %p523 = pneg %p259
        %p524 = pneg %p283
        %p525 = pneg %p280
        %p526 = pneg %p304
        %p527 = pneg %p301
        %p528 = pneg %p325
        %p529 = pneg %p322
        %p530 = pneg %p346
        %p531 = pneg %p343
        %p532 = pneg %p367
        %p533 = pneg %p364
        %p534 = pneg %p388
        %p535 = pneg %p385
        %p536 = pneg %p414
        %p537 = pneg %p411
        %s538 = sand.u32 %s401, 1
        %s539 = scalar_lea.sflag [#allocation4], %s538
        %s540 = sand.u32 %s401, 1
        %s541 = smul.addr %s540, 16
        %s542 = scalar_lea.vmem [#allocation3], %s541
        %s543 = smul.u32 2, %s31
        %p544 = scmp.lt.s32.totalorder %s543, 3
        %s545 = scalar_select %p544, %s543, 3
        %s546 = smul.addr %s545, 8
        %s547 = scalar_lea.vmem %s0, %s546
        %s548 = smul.u32 2, %s31
        %s549 = smul.u32 2, %s31
        %v551 = vld [vmem:[%s547] sm:$0xff]
        %v552 = vld [vmem:[%s547 + $0x8] sm:$0xff]
        %v553 = vpack.c.bf16 %v552, %v551
        %v554 = vld [vmem:[%s1] sm:$0xf]
        %v555 = vld [vmem:[%s1 + $0x4] sm:$0xf]
        %v556 = vld [vmem:[%s1 + $0x8] sm:$0xf]
        %v557 = vld [vmem:[%s1 + $0xc] sm:$0xf]
        %v558 = vld [vmem:[%s1 + $0x10] sm:$0xf]
        %v559 = vld [vmem:[%s1 + $0x14] sm:$0xf]
        %v560 = vld [vmem:[%s1 + $0x18] sm:$0xf]
        %v561 = vld [vmem:[%s1 + $0x1c] sm:$0xf]
        %v562 = vld [vmem:[%s1 + $0x20] sm:$0xf]
        %v563 = vld [vmem:[%s1 + $0x24] sm:$0xf]
        %v564 = vld [vmem:[%s1 + $0x28] sm:$0xf]
        %v565 = vld [vmem:[%s1 + $0x2c] sm:$0xf]
        %v566 = vld [vmem:[%s1 + $0x30] sm:$0xf]
        %v567 = vld [vmem:[%s1 + $0x34] sm:$0xf]
        %v568 = vld [vmem:[%s1 + $0x38] sm:$0xf]
        %v569 = vld [vmem:[%s1 + $0x3c] sm:$0xf]
        %v570 = vld [vmem:[%s2] sm:$0x1]
        %v572 = vlaneseq
        %v573 = vshrl.u32 %v572, 7
        %v574 = vsub.s32 0, %v573
        %v575 = vrot.slane %v570, %v574
        %v593 = vunpack.c.l.b16 %v554
        %v594 = vunpack.c.l.b16 %v555
        %v595 = vunpack.c.l.b16 %v556
        %v596 = vunpack.c.l.b16 %v557
        %v597 = vunpack.c.l.b16 %v558
        %v598 = vunpack.c.l.b16 %v559
        %v599 = vunpack.c.l.b16 %v560
        %v600 = vunpack.c.l.b16 %v561
        %v601 = vunpack.c.l.b16 %v562
        %v602 = vunpack.c.l.b16 %v563
        %v603 = vunpack.c.l.b16 %v564
        %v604 = vunpack.c.l.b16 %v565
        %v605 = vunpack.c.l.b16 %v566
        %v606 = vunpack.c.l.b16 %v567
        %v607 = vunpack.c.l.b16 %v568
        %v608 = vunpack.c.l.b16 %v569
        %v609 = vpack.c.b16 %v594, %v593
        %v610 = vpack.c.b16 %v596, %v595
        %v611 = vpack.c.b16 %v598, %v597
        %v612 = vpack.c.b16 %v600, %v599
        %v613 = vpack.c.b16 %v602, %v601
        %v614 = vpack.c.b16 %v604, %v603
        %v615 = vpack.c.b16 %v606, %v605
        %v616 = vpack.c.b16 %v608, %v607
        %625 = vmatprep.subr.bf16.mxu0 0
        %626 = vmatpush1.bf16.msra.mxu0 %v616
        %627 = vmatprep.subr.bf16.mxu0 0
        %628 = vmatpush1.bf16.msra.mxu0 %v615
        %629 = vmatprep.subr.bf16.mxu0 0
        %630 = vmatpush1.bf16.msra.mxu0 %v614
        %631 = vmatprep.subr.bf16.mxu0 0
        %632 = vmatpush1.bf16.msra.mxu0 %v613
        %633 = vmatprep.subr.bf16.mxu0 0
        %634 = vmatpush1.bf16.msra.mxu0 %v612
        %635 = vmatprep.subr.bf16.mxu0 0
        %636 = vmatpush1.bf16.msra.mxu0 %v611
        %637 = vmatprep.subr.bf16.mxu0 0
        %638 = vmatpush1.bf16.msra.mxu0 %v610
        %639 = vmatprep.subr.bf16.mxu0 0
        %640 = vmatpush1.bf16.msra.mxu0 %v609
        %641 = vmatprep.subr.bf16.mxu0 0
        %642 = vmatpush2.bf16.msra.mxu0 0
        %643 = vmatprep.subr.bf16.mxu0 0
        %644 = vmatpush2.bf16.msra.mxu0 0
        %645 = vmatprep.subr.bf16.mxu0 0
        %646 = vmatpush2.bf16.msra.mxu0 0
        %647 = vmatprep.subr.bf16.mxu0 0
        %648 = vmatpush2.bf16.msra.mxu0 0
        %649 = vmatprep.subr.bf16.mxu0 0
        %650 = vmatpush2.bf16.msra.mxu0 0
        %651 = vmatprep.subr.bf16.mxu0 0
        %652 = vmatpush2.bf16.msra.mxu0 0
        %653 = vmatprep.subr.bf16.mxu0 0
        %654 = vmatpush2.bf16.msra.mxu0 0
        %655 = vmatprep.subr.bf16.mxu0 0
        %656 = vmatpush2.bf16.msra.mxu0 0
        %657 = vmatprep.mubr.bf16.mxu0 0
        %658 = vmatmul.mubr.bf16.gmra.mxu0 %v553
        %v659 = vpop.f32.mrf.mxu0
        %v660 = vadd.f32 %v575, %v659
        %v661 = vpop.f32.mrf.mxu0
        %v662 = vpop.f32.mrf.mxu0
        %v663 = vadd.f32 %v575, %v662
        %v664 = vpop.f32.mrf.mxu0
        %665 = vdwg.mxu0
        %v666 = vld [vmem:[%s3] sm:$0xf]
        %v667 = vld [vmem:[%s3 + $0x4] sm:$0xf]
        %v668 = vld [vmem:[%s3 + $0x8] sm:$0xf]
        %v669 = vld [vmem:[%s3 + $0xc] sm:$0xf]
        %v670 = vld [vmem:[%s3 + $0x10] sm:$0xf]
        %v671 = vld [vmem:[%s3 + $0x14] sm:$0xf]
        %v672 = vld [vmem:[%s3 + $0x18] sm:$0xf]
        %v673 = vld [vmem:[%s3 + $0x1c] sm:$0xf]
        %v674 = vld [vmem:[%s3 + $0x20] sm:$0xf]
        %v675 = vld [vmem:[%s3 + $0x24] sm:$0xf]
        %v676 = vld [vmem:[%s3 + $0x28] sm:$0xf]
        %v677 = vld [vmem:[%s3 + $0x2c] sm:$0xf]
        %v678 = vld [vmem:[%s3 + $0x30] sm:$0xf]
        %v679 = vld [vmem:[%s3 + $0x34] sm:$0xf]
        %v680 = vld [vmem:[%s3 + $0x38] sm:$0xf]
        %v681 = vld [vmem:[%s3 + $0x3c] sm:$0xf]
        %v682 = vld [vmem:[%s4] sm:$0x1]
        %v684 = vlaneseq
        %v685 = vshrl.u32 %v684, 7
        %v686 = vsub.s32 0, %v685
        %v687 = vrot.slane %v682, %v686
        %v705 = vunpack.c.l.b16 %v666
        %v706 = vunpack.c.l.b16 %v667
        %v707 = vunpack.c.l.b16 %v668
        %v708 = vunpack.c.l.b16 %v669
        %v709 = vunpack.c.l.b16 %v670
        %v710 = vunpack.c.l.b16 %v671
        %v711 = vunpack.c.l.b16 %v672
        %v712 = vunpack.c.l.b16 %v673
        %v713 = vunpack.c.l.b16 %v674
        %v714 = vunpack.c.l.b16 %v675
        %v715 = vunpack.c.l.b16 %v676
        %v716 = vunpack.c.l.b16 %v677
        %v717 = vunpack.c.l.b16 %v678
        %v718 = vunpack.c.l.b16 %v679
        %v719 = vunpack.c.l.b16 %v680
        %v720 = vunpack.c.l.b16 %v681
        %v721 = vpack.c.b16 %v706, %v705
        %v722 = vpack.c.b16 %v708, %v707
        %v723 = vpack.c.b16 %v710, %v709
        %v724 = vpack.c.b16 %v712, %v711
        %v725 = vpack.c.b16 %v714, %v713
        %v726 = vpack.c.b16 %v716, %v715
        %v727 = vpack.c.b16 %v718, %v717
        %v728 = vpack.c.b16 %v720, %v719
        %737 = vmatprep.subr.bf16.mxu0 0
        %738 = vmatpush1.bf16.msra.mxu0 %v728
        %739 = vmatprep.subr.bf16.mxu0 0
        %740 = vmatpush1.bf16.msra.mxu0 %v727
        %741 = vmatprep.subr.bf16.mxu0 0
        %742 = vmatpush1.bf16.msra.mxu0 %v726
        %743 = vmatprep.subr.bf16.mxu0 0
        %744 = vmatpush1.bf16.msra.mxu0 %v725
        %745 = vmatprep.subr.bf16.mxu0 0
        %746 = vmatpush1.bf16.msra.mxu0 %v724
        %747 = vmatprep.subr.bf16.mxu0 0
        %748 = vmatpush1.bf16.msra.mxu0 %v723
        %749 = vmatprep.subr.bf16.mxu0 0
        %750 = vmatpush1.bf16.msra.mxu0 %v722
        %751 = vmatprep.subr.bf16.mxu0 0
        %752 = vmatpush1.bf16.msra.mxu0 %v721
        %753 = vmatprep.subr.bf16.mxu0 0
        %754 = vmatpush2.bf16.msra.mxu0 0
        %755 = vmatprep.subr.bf16.mxu0 0
        %756 = vmatpush2.bf16.msra.mxu0 0
        %757 = vmatprep.subr.bf16.mxu0 0
        %758 = vmatpush2.bf16.msra.mxu0 0
        %759 = vmatprep.subr.bf16.mxu0 0
        %760 = vmatpush2.bf16.msra.mxu0 0
        %761 = vmatprep.subr.bf16.mxu0 0
        %762 = vmatpush2.bf16.msra.mxu0 0
        %763 = vmatprep.subr.bf16.mxu0 0
        %764 = vmatpush2.bf16.msra.mxu0 0
        %765 = vmatprep.subr.bf16.mxu0 0
        %766 = vmatpush2.bf16.msra.mxu0 0
        %767 = vmatprep.subr.bf16.mxu0 0
        %768 = vmatpush2.bf16.msra.mxu0 0
        %769 = vmatprep.mubr.bf16.mxu0 0
        %770 = vmatmul.mubr.bf16.gmra.mxu0 %v553
        %v771 = vpop.f32.mrf.mxu0
        %v772 = vadd.f32 %v687, %v771
        %v773 = vpop.f32.mrf.mxu0
        %v774 = vpop.f32.mrf.mxu0
        %v775 = vadd.f32 %v687, %v774
        %v776 = vpop.f32.mrf.mxu0
        %777 = vdwg.mxu0
        %v778 = vld [vmem:[%s5] sm:$0xf]
        %v779 = vld [vmem:[%s5 + $0x4] sm:$0xf]
        %v780 = vld [vmem:[%s5 + $0x8] sm:$0xf]
        %v781 = vld [vmem:[%s5 + $0xc] sm:$0xf]
        %v782 = vld [vmem:[%s5 + $0x10] sm:$0xf]
        %v783 = vld [vmem:[%s5 + $0x14] sm:$0xf]
        %v784 = vld [vmem:[%s5 + $0x18] sm:$0xf]
        %v785 = vld [vmem:[%s5 + $0x1c] sm:$0xf]
        %v786 = vld [vmem:[%s5 + $0x20] sm:$0xf]
        %v787 = vld [vmem:[%s5 + $0x24] sm:$0xf]
        %v788 = vld [vmem:[%s5 + $0x28] sm:$0xf]
        %v789 = vld [vmem:[%s5 + $0x2c] sm:$0xf]
        %v790 = vld [vmem:[%s5 + $0x30] sm:$0xf]
        %v791 = vld [vmem:[%s5 + $0x34] sm:$0xf]
        %v792 = vld [vmem:[%s5 + $0x38] sm:$0xf]
        %v793 = vld [vmem:[%s5 + $0x3c] sm:$0xf]
        %v794 = vld [vmem:[%s6] sm:$0x1]
        %v796 = vlaneseq
        %v797 = vshrl.u32 %v796, 7
        %v798 = vsub.s32 0, %v797
        %v799 = vrot.slane %v794, %v798
        %v817 = vunpack.c.l.b16 %v778
        %v818 = vunpack.c.l.b16 %v779
        %v819 = vunpack.c.l.b16 %v780
        %v820 = vunpack.c.l.b16 %v781
        %v821 = vunpack.c.l.b16 %v782
        %v822 = vunpack.c.l.b16 %v783
        %v823 = vunpack.c.l.b16 %v784
        %v824 = vunpack.c.l.b16 %v785
        %v825 = vunpack.c.l.b16 %v786
        %v826 = vunpack.c.l.b16 %v787
        %v827 = vunpack.c.l.b16 %v788
        %v828 = vunpack.c.l.b16 %v789
        %v829 = vunpack.c.l.b16 %v790
        %v830 = vunpack.c.l.b16 %v791
        %v831 = vunpack.c.l.b16 %v792
        %v832 = vunpack.c.l.b16 %v793
        %v833 = vpack.c.b16 %v818, %v817
        %v834 = vpack.c.b16 %v820, %v819
        %v835 = vpack.c.b16 %v822, %v821
        %v836 = vpack.c.b16 %v824, %v823
        %v837 = vpack.c.b16 %v826, %v825
        %v838 = vpack.c.b16 %v828, %v827
        %v839 = vpack.c.b16 %v830, %v829
        %v840 = vpack.c.b16 %v832, %v831
        %849 = vmatprep.subr.bf16.mxu0 0
        %850 = vmatpush1.bf16.msra.mxu0 %v840
        %851 = vmatprep.subr.bf16.mxu0 0
        %852 = vmatpush1.bf16.msra.mxu0 %v839
        %853 = vmatprep.subr.bf16.mxu0 0
        %854 = vmatpush1.bf16.msra.mxu0 %v838
        %855 = vmatprep.subr.bf16.mxu0 0
        %856 = vmatpush1.bf16.msra.mxu0 %v837
        %857 = vmatprep.subr.bf16.mxu0 0
        %858 = vmatpush1.bf16.msra.mxu0 %v836
        %859 = vmatprep.subr.bf16.mxu0 0
        %860 = vmatpush1.bf16.msra.mxu0 %v835
        %861 = vmatprep.subr.bf16.mxu0 0
        %862 = vmatpush1.bf16.msra.mxu0 %v834
        %863 = vmatprep.subr.bf16.mxu0 0
        %864 = vmatpush1.bf16.msra.mxu0 %v833
        %865 = vmatprep.subr.bf16.mxu0 0
        %866 = vmatpush2.bf16.msra.mxu0 0
        %867 = vmatprep.subr.bf16.mxu0 0
        %868 = vmatpush2.bf16.msra.mxu0 0
        %869 = vmatprep.subr.bf16.mxu0 0
        %870 = vmatpush2.bf16.msra.mxu0 0
        %871 = vmatprep.subr.bf16.mxu0 0
        %872 = vmatpush2.bf16.msra.mxu0 0
        %873 = vmatprep.subr.bf16.mxu0 0
        %874 = vmatpush2.bf16.msra.mxu0 0
        %875 = vmatprep.subr.bf16.mxu0 0
        %876 = vmatpush2.bf16.msra.mxu0 0
        %877 = vmatprep.subr.bf16.mxu0 0
        %878 = vmatpush2.bf16.msra.mxu0 0
        %879 = vmatprep.subr.bf16.mxu0 0
        %880 = vmatpush2.bf16.msra.mxu0 0
        %881 = vmatprep.mubr.bf16.mxu0 0
        %882 = vmatmul.mubr.bf16.gmra.mxu0 %v553
        %v883 = vpop.f32.mrf.mxu0
        %v884 = vadd.f32 %v799, %v883
        %v885 = vpop.f32.mrf.mxu0
        %v886 = vpop.f32.mrf.mxu0
        %v887 = vadd.f32 %v799, %v886
        %v888 = vpop.f32.mrf.mxu0
        %889 = vdwg.mxu0
        %v890 = vpack.c.bf16 %v660, %v660
        %v891 = vpack.c.bf16 %v663, %v663
        %v892 = vpack.c.bf16 %v772, %v772
        %v893 = vpack.c.bf16 %v775, %v775
        %v894 = vpack.c.bf16 %v884, %v884
        %v895 = vpack.c.bf16 %v887, %v887
        %vm896 = vcmask 261120
        %v898 = vsel %vm896, %v890, 0
        %v901 = vsel %vm896, %v892, 0
        %903 = vmatprep.subr.bf16.mxu0 0
        %904 = vmatpush1.bf16.xpose.msra.mxu0 0
        %905 = vmatprep.subr.bf16.mxu0 0
        %906 = vmatpush1.bf16.xpose.msra.mxu0 0
        %907 = vmatprep.subr.bf16.mxu0 0
        %908 = vmatpush1.bf16.xpose.msra.mxu0 0
        %909 = vmatprep.subr.bf16.mxu0 0
        %910 = vmatpush1.bf16.xpose.msra.mxu0 0
        %911 = vmatprep.subr.bf16.mxu0 0
        %912 = vmatpush1.bf16.xpose.msra.mxu0 0
        %913 = vmatprep.subr.bf16.mxu0 0
        %914 = vmatpush1.bf16.xpose.msra.mxu0 0
        %915 = vmatprep.subr.bf16.mxu0 0
        %916 = vmatpush1.bf16.xpose.msra.mxu0 0
        %917 = vmatprep.subr.bf16.mxu0 0
        %918 = vmatpush1.bf16.xpose.msra.mxu0 %v901
        %919 = vmatprep.subr.bf16.mxu0 0
        %920 = vmatpush2.bf16.xpose.msra.mxu0 0
        %921 = vmatprep.subr.bf16.mxu0 0
        %922 = vmatpush2.bf16.xpose.msra.mxu0 0
        %923 = vmatprep.subr.bf16.mxu0 0
        %924 = vmatpush2.bf16.xpose.msra.mxu0 0
        %925 = vmatprep.subr.bf16.mxu0 0
        %926 = vmatpush2.bf16.xpose.msra.mxu0 0
        %927 = vmatprep.subr.bf16.mxu0 0
        %928 = vmatpush2.bf16.xpose.msra.mxu0 0
        %929 = vmatprep.subr.bf16.mxu0 0
        %930 = vmatpush2.bf16.xpose.msra.mxu0 0
        %931 = vmatprep.subr.bf16.mxu0 0
        %932 = vmatpush2.bf16.xpose.msra.mxu0 0
        %933 = vmatprep.subr.bf16.mxu0 0
        %934 = vmatpush2.bf16.xpose.msra.mxu0 0
        %935 = vmatprep.mubr.bf16.mxu0 0
        %936 = vmatmul.mubr.bf16.gmra.mxu0 %v898
        %v937 = vpop.f32.mrf.mxu0
        %v938 = vadd.f32 0.0, %v937
        %v939 = vpop.f32.mrf.mxu0
        %v940 = vpop.f32.mrf.mxu0
        %v941 = vpop.f32.mrf.mxu0
        %942 = vdwg.mxu0
        %v944 = vsel %vm896, %v891, 0
        %v947 = vsel %vm896, %v893, 0
        %949 = vmatprep.subr.bf16.mxu0 0
        %950 = vmatpush1.bf16.xpose.msra.mxu0 0
        %951 = vmatprep.subr.bf16.mxu0 0
        %952 = vmatpush1.bf16.xpose.msra.mxu0 0
        %953 = vmatprep.subr.bf16.mxu0 0
        %954 = vmatpush1.bf16.xpose.msra.mxu0 0
        %955 = vmatprep.subr.bf16.mxu0 0
        %956 = vmatpush1.bf16.xpose.msra.mxu0 0
        %957 = vmatprep.subr.bf16.mxu0 0
        %958 = vmatpush1.bf16.xpose.msra.mxu0 0
        %959 = vmatprep.subr.bf16.mxu0 0
        %960 = vmatpush1.bf16.xpose.msra.mxu0 0
        %961 = vmatprep.subr.bf16.mxu0 0
        %962 = vmatpush1.bf16.xpose.msra.mxu0 0
        %963 = vmatprep.subr.bf16.mxu0 0
        %964 = vmatpush1.bf16.xpose.msra.mxu0 %v947
        %965 = vmatprep.subr.bf16.mxu0 0
        %966 = vmatpush2.bf16.xpose.msra.mxu0 0
        %967 = vmatprep.subr.bf16.mxu0 0
        %968 = vmatpush2.bf16.xpose.msra.mxu0 0
        %969 = vmatprep.subr.bf16.mxu0 0
        %970 = vmatpush2.bf16.xpose.msra.mxu0 0
        %971 = vmatprep.subr.bf16.mxu0 0
        %972 = vmatpush2.bf16.xpose.msra.mxu0 0
        %973 = vmatprep.subr.bf16.mxu0 0
        %974 = vmatpush2.bf16.xpose.msra.mxu0 0
        %975 = vmatprep.subr.bf16.mxu0 0
        %976 = vmatpush2.bf16.xpose.msra.mxu0 0
        %977 = vmatprep.subr.bf16.mxu0 0
        %978 = vmatpush2.bf16.xpose.msra.mxu0 0
        %979 = vmatprep.subr.bf16.mxu0 0
        %980 = vmatpush2.bf16.xpose.msra.mxu0 0
        %981 = vmatprep.mubr.bf16.mxu0 0
        %982 = vmatmul.mubr.bf16.gmra.mxu0 %v944
        %v983 = vpop.f32.mrf.mxu0
        %v984 = vadd.f32 0.0, %v983
        %v985 = vpop.f32.mrf.mxu0
        %v986 = vpop.f32.mrf.mxu0
        %v987 = vpop.f32.mrf.mxu0
        %988 = vdwg.mxu0
        %v989 = vmul.f32 %v938, 0.17677669
        %v990 = vmul.f32 %v984, 0.17677669
        %vm991 = vcmask 64512
        %v992 = vsel %vm991, %v989, -inf
        %993 = vmax.xlane.f32.xlu0 %v992
        %v994 = vpop.xlane.xlu0 %993
        %v995 = vsel %vm991, %v990, -inf
        %996 = vmax.xlane.f32.xlu0 %v995
        %v997 = vpop.xlane.xlu0 %996
        %v998 = vsub.f32 %v989, %v994
        %v999 = vsub.f32 %v990, %v997
        %v1000 = vmul.f32 %v998, 1.442695
        %v1001 = vpow.pop %v1000
        %v1002 = vmul.f32 %v999, 1.442695
        %v1003 = vpow.pop %v1002
        %v1004 = vsel %vm991, %v1001, 0.0
        %1005 = vadd.xlane.f32.xlu0 %v1004
        %v1006 = vpop.xlane.xlu0 %1005
        %v1007 = vsel %vm991, %v1003, 0.0
        %1008 = vadd.xlane.f32.xlu0 %v1007
        %v1009 = vpop.xlane.xlu0 %1008
        %v1010 = vrcp.pop %v1006
        %v1011 = vrcp.pop %v1009
        %v1012 = vmul.f32 %v1001, %v1010
        %v1013 = vmul.f32 %v1003, %v1011
        %v1014 = vpack.c.bf16 %v1012, %v1012
        %v1015 = vpack.c.bf16 %v1013, %v1013
        %v1017 = vsel %vm991, %v1014, 0
        %vm1019 = vcmask 1043456
        %v1021 = vsel %vm1019, %v894, 0
        %1023 = vmatprep.subr.bf16.mxu0 0
        %1024 = vmatpush1.bf16.msra.mxu0 0
        %1025 = vmatprep.subr.bf16.mxu0 0
        %1026 = vmatpush1.bf16.msra.mxu0 0
        %1027 = vmatprep.subr.bf16.mxu0 0
        %1028 = vmatpush1.bf16.msra.mxu0 0
        %1029 = vmatprep.subr.bf16.mxu0 0
        %1030 = vmatpush1.bf16.msra.mxu0 0
        %1031 = vmatprep.subr.bf16.mxu0 0
        %1032 = vmatpush1.bf16.msra.mxu0 0
        %1033 = vmatprep.subr.bf16.mxu0 0
        %1034 = vmatpush1.bf16.msra.mxu0 0
        %1035 = vmatprep.subr.bf16.mxu0 0
        %1036 = vmatpush1.bf16.msra.mxu0 0
        %1037 = vmatprep.subr.bf16.mxu0 0
        %1038 = vmatpush1.bf16.msra.mxu0 %v1021
        %1039 = vmatprep.subr.bf16.mxu0 0
        %1040 = vmatpush2.bf16.msra.mxu0 0
        %1041 = vmatprep.subr.bf16.mxu0 0
        %1042 = vmatpush2.bf16.msra.mxu0 0
        %1043 = vmatprep.subr.bf16.mxu0 0
        %1044 = vmatpush2.bf16.msra.mxu0 0
        %1045 = vmatprep.subr.bf16.mxu0 0
        %1046 = vmatpush2.bf16.msra.mxu0 0
        %1047 = vmatprep.subr.bf16.mxu0 0
        %1048 = vmatpush2.bf16.msra.mxu0 0
        %1049 = vmatprep.subr.bf16.mxu0 0
        %1050 = vmatpush2.bf16.msra.mxu0 0
        %1051 = vmatprep.subr.bf16.mxu0 0
        %1052 = vmatpush2.bf16.msra.mxu0 0
        %1053 = vmatprep.subr.bf16.mxu0 0
        %1054 = vmatpush2.bf16.msra.mxu0 0
        %1055 = vmatprep.mubr.bf16.mxu0 0
        %1056 = vmatmul.mubr.bf16.gmra.mxu0 %v1017
        %v1057 = vpop.f32.mrf.mxu0
        %v1058 = vadd.f32 0.0, %v1057
        %v1059 = vpop.f32.mrf.mxu0
        %v1060 = vpop.f32.mrf.mxu0
        %v1061 = vpop.f32.mrf.mxu0
        %1062 = vdwg.mxu0
        %v1064 = vsel %vm991, %v1015, 0
        %v1067 = vsel %vm1019, %v895, 0
        %1069 = vmatprep.subr.bf16.mxu0 0
        %1070 = vmatpush1.bf16.msra.mxu0 0
        %1071 = vmatprep.subr.bf16.mxu0 0
        %1072 = vmatpush1.bf16.msra.mxu0 0
        %1073 = vmatprep.subr.bf16.mxu0 0
        %1074 = vmatpush1.bf16.msra.mxu0 0
        %1075 = vmatprep.subr.bf16.mxu0 0
        %1076 = vmatpush1.bf16.msra.mxu0 0
        %1077 = vmatprep.subr.bf16.mxu0 0
        %1078 = vmatpush1.bf16.msra.mxu0 0
        %1079 = vmatprep.subr.bf16.mxu0 0
        %1080 = vmatpush1.bf16.msra.mxu0 0
        %1081 = vmatprep.subr.bf16.mxu0 0
        %1082 = vmatpush1.bf16.msra.mxu0 0
        %1083 = vmatprep.subr.bf16.mxu0 0
        %1084 = vmatpush1.bf16.msra.mxu0 %v1067
        %1085 = vmatprep.subr.bf16.mxu0 0
        %1086 = vmatpush2.bf16.msra.mxu0 0
        %1087 = vmatprep.subr.bf16.mxu0 0
        %1088 = vmatpush2.bf16.msra.mxu0 0
        %1089 = vmatprep.subr.bf16.mxu0 0
        %1090 = vmatpush2.bf16.msra.mxu0 0
        %1091 = vmatprep.subr.bf16.mxu0 0
        %1092 = vmatpush2.bf16.msra.mxu0 0
        %1093 = vmatprep.subr.bf16.mxu0 0
        %1094 = vmatpush2.bf16.msra.mxu0 0
        %1095 = vmatprep.subr.bf16.mxu0 0
        %1096 = vmatpush2.bf16.msra.mxu0 0
        %1097 = vmatprep.subr.bf16.mxu0 0
        %1098 = vmatpush2.bf16.msra.mxu0 0
        %1099 = vmatprep.subr.bf16.mxu0 0
        %1100 = vmatpush2.bf16.msra.mxu0 0
        %1101 = vmatprep.mubr.bf16.mxu0 0
        %1102 = vmatmul.mubr.bf16.gmra.mxu0 %v1064
        %v1103 = vpop.f32.mrf.mxu0
        %v1104 = vadd.f32 0.0, %v1103
        %v1105 = vpop.f32.mrf.mxu0
        %v1106 = vpop.f32.mrf.mxu0
        %v1107 = vpop.f32.mrf.mxu0
        %1108 = vdwg.mxu0
        %v1109 = vpack.c.bf16 %v1104, %v1058
        %v1111 = vunpack.c.l.b16 %v1109
        %v1112 = vunpack.c.h.b16 %v1109
        %v1113 = vpack.c.b16 %v1111, %v1111
        %v1114 = vpack.c.b16 %v1112, %v1112
        %vm1117 = vcmask 257024
        %1118 = vst.msk [vmem:[#allocation2] sm:$0xf] %vm1117, %v1113
        %1119 = vst.msk [vmem:[#allocation2 + $0x4] sm:$0xf] %vm1117, %v1114
        %s1120 = scalar_lea.vmem %s1, 64
        %v1121 = vld [vmem:[%s1120] sm:$0xf]
        %v1122 = vld [vmem:[%s1120 + $0x4] sm:$0xf]
        %v1123 = vld [vmem:[%s1120 + $0x8] sm:$0xf]
        %v1124 = vld [vmem:[%s1120 + $0xc] sm:$0xf]
        %v1125 = vld [vmem:[%s1120 + $0x10] sm:$0xf]
        %v1126 = vld [vmem:[%s1120 + $0x14] sm:$0xf]
        %v1127 = vld [vmem:[%s1120 + $0x18] sm:$0xf]
        %v1128 = vld [vmem:[%s1120 + $0x1c] sm:$0xf]
        %v1129 = vld [vmem:[%s1120 + $0x20] sm:$0xf]
        %v1130 = vld [vmem:[%s1120 + $0x24] sm:$0xf]
        %v1131 = vld [vmem:[%s1120 + $0x28] sm:$0xf]
        %v1132 = vld [vmem:[%s1120 + $0x2c] sm:$0xf]
        %v1133 = vld [vmem:[%s1120 + $0x30] sm:$0xf]
        %v1134 = vld [vmem:[%s1120 + $0x34] sm:$0xf]
        %v1135 = vld [vmem:[%s1120 + $0x38] sm:$0xf]
        %v1136 = vld [vmem:[%s1120 + $0x3c] sm:$0xf]
        %s1137 = scalar_lea.vmem %s2, 1
        %v1138 = vld [vmem:[%s1137] sm:$0x1]
        %v1140 = vlaneseq
        %v1141 = vshrl.u32 %v1140, 7
        %v1142 = vsub.s32 0, %v1141
        %v1143 = vrot.slane %v1138, %v1142
        %v1161 = vunpack.c.l.b16 %v1121
        %v1162 = vunpack.c.l.b16 %v1122
        %v1163 = vunpack.c.l.b16 %v1123
        %v1164 = vunpack.c.l.b16 %v1124
        %v1165 = vunpack.c.l.b16 %v1125
        %v1166 = vunpack.c.l.b16 %v1126
        %v1167 = vunpack.c.l.b16 %v1127
        %v1168 = vunpack.c.l.b16 %v1128
        %v1169 = vunpack.c.l.b16 %v1129
        %v1170 = vunpack.c.l.b16 %v1130
        %v1171 = vunpack.c.l.b16 %v1131
        %v1172 = vunpack.c.l.b16 %v1132
        %v1173 = vunpack.c.l.b16 %v1133
        %v1174 = vunpack.c.l.b16 %v1134
        %v1175 = vunpack.c.l.b16 %v1135
        %v1176 = vunpack.c.l.b16 %v1136
        %v1177 = vpack.c.b16 %v1162, %v1161
        %v1178 = vpack.c.b16 %v1164, %v1163
        %v1179 = vpack.c.b16 %v1166, %v1165
        %v1180 = vpack.c.b16 %v1168, %v1167
        %v1181 = vpack.c.b16 %v1170, %v1169
        %v1182 = vpack.c.b16 %v1172, %v1171
        %v1183 = vpack.c.b16 %v1174, %v1173
        %v1184 = vpack.c.b16 %v1176, %v1175
        %1193 = vmatprep.subr.bf16.mxu0 0
        %1194 = vmatpush1.bf16.msra.mxu0 %v1184
        %1195 = vmatprep.subr.bf16.mxu0 0
        %1196 = vmatpush1.bf16.msra.mxu0 %v1183
        %1197 = vmatprep.subr.bf16.mxu0 0
        %1198 = vmatpush1.bf16.msra.mxu0 %v1182
        %1199 = vmatprep.subr.bf16.mxu0 0
        %1200 = vmatpush1.bf16.msra.mxu0 %v1181
        %1201 = vmatprep.subr.bf16.mxu0 0
        %1202 = vmatpush1.bf16.msra.mxu0 %v1180
        %1203 = vmatprep.subr.bf16.mxu0 0
        %1204 = vmatpush1.bf16.msra.mxu0 %v1179
        %1205 = vmatprep.subr.bf16.mxu0 0
        %1206 = vmatpush1.bf16.msra.mxu0 %v1178
        %1207 = vmatprep.subr.bf16.mxu0 0
        %1208 = vmatpush1.bf16.msra.mxu0 %v1177
        %1209 = vmatprep.subr.bf16.mxu0 0
        %1210 = vmatpush2.bf16.msra.mxu0 0
        %1211 = vmatprep.subr.bf16.mxu0 0
        %1212 = vmatpush2.bf16.msra.mxu0 0
        %1213 = vmatprep.subr.bf16.mxu0 0
        %1214 = vmatpush2.bf16.msra.mxu0 0
        %1215 = vmatprep.subr.bf16.mxu0 0
        %1216 = vmatpush2.bf16.msra.mxu0 0
        %1217 = vmatprep.subr.bf16.mxu0 0
        %1218 = vmatpush2.bf16.msra.mxu0 0
        %1219 = vmatprep.subr.bf16.mxu0 0
        %1220 = vmatpush2.bf16.msra.mxu0 0
        %1221 = vmatprep.subr.bf16.mxu0 0
        %1222 = vmatpush2.bf16.msra.mxu0 0
        %1223 = vmatprep.subr.bf16.mxu0 0
        %1224 = vmatpush2.bf16.msra.mxu0 0
        %1225 = vmatprep.mubr.bf16.mxu0 0
        %1226 = vmatmul.mubr.bf16.gmra.mxu0 %v553
        %v1227 = vpop.f32.mrf.mxu0
        %v1228 = vadd.f32 %v1143, %v1227
        %v1229 = vpop.f32.mrf.mxu0
        %v1230 = vpop.f32.mrf.mxu0
        %v1231 = vadd.f32 %v1143, %v1230
        %v1232 = vpop.f32.mrf.mxu0
        %1233 = vdwg.mxu0
        %s1234 = scalar_lea.vmem %s3, 64
        %v1235 = vld [vmem:[%s1234] sm:$0xf]
        %v1236 = vld [vmem:[%s1234 + $0x4] sm:$0xf]
        %v1237 = vld [vmem:[%s1234 + $0x8] sm:$0xf]
        %v1238 = vld [vmem:[%s1234 + $0xc] sm:$0xf]
        %v1239 = vld [vmem:[%s1234 + $0x10] sm:$0xf]
        %v1240 = vld [vmem:[%s1234 + $0x14] sm:$0xf]
        %v1241 = vld [vmem:[%s1234 + $0x18] sm:$0xf]
        %v1242 = vld [vmem:[%s1234 + $0x1c] sm:$0xf]
        %v1243 = vld [vmem:[%s1234 + $0x20] sm:$0xf]
        %v1244 = vld [vmem:[%s1234 + $0x24] sm:$0xf]
        %v1245 = vld [vmem:[%s1234 + $0x28] sm:$0xf]
        %v1246 = vld [vmem:[%s1234 + $0x2c] sm:$0xf]
        %v1247 = vld [vmem:[%s1234 + $0x30] sm:$0xf]
        %v1248 = vld [vmem:[%s1234 + $0x34] sm:$0xf]
        %v1249 = vld [vmem:[%s1234 + $0x38] sm:$0xf]
        %v1250 = vld [vmem:[%s1234 + $0x3c] sm:$0xf]
        %s1251 = scalar_lea.vmem %s4, 1
        %v1252 = vld [vmem:[%s1251] sm:$0x1]
        %v1254 = vlaneseq
        %v1255 = vshrl.u32 %v1254, 7
        %v1256 = vsub.s32 0, %v1255
        %v1257 = vrot.slane %v1252, %v1256
        %v1275 = vunpack.c.l.b16 %v1235
        %v1276 = vunpack.c.l.b16 %v1236
        %v1277 = vunpack.c.l.b16 %v1237
        %v1278 = vunpack.c.l.b16 %v1238
        %v1279 = vunpack.c.l.b16 %v1239
        %v1280 = vunpack.c.l.b16 %v1240
        %v1281 = vunpack.c.l.b16 %v1241
        %v1282 = vunpack.c.l.b16 %v1242
        %v1283 = vunpack.c.l.b16 %v1243
        %v1284 = vunpack.c.l.b16 %v1244
        %v1285 = vunpack.c.l.b16 %v1245
        %v1286 = vunpack.c.l.b16 %v1246
        %v1287 = vunpack.c.l.b16 %v1247
        %v1288 = vunpack.c.l.b16 %v1248
        %v1289 = vunpack.c.l.b16 %v1249
        %v1290 = vunpack.c.l.b16 %v1250
        %v1291 = vpack.c.b16 %v1276, %v1275
        %v1292 = vpack.c.b16 %v1278, %v1277
        %v1293 = vpack.c.b16 %v1280, %v1279
        %v1294 = vpack.c.b16 %v1282, %v1281
        %v1295 = vpack.c.b16 %v1284, %v1283
        %v1296 = vpack.c.b16 %v1286, %v1285
        %v1297 = vpack.c.b16 %v1288, %v1287
        %v1298 = vpack.c.b16 %v1290, %v1289
        %1307 = vmatprep.subr.bf16.mxu0 0
        %1308 = vmatpush1.bf16.msra.mxu0 %v1298
        %1309 = vmatprep.subr.bf16.mxu0 0
        %1310 = vmatpush1.bf16.msra.mxu0 %v1297
        %1311 = vmatprep.subr.bf16.mxu0 0
        %1312 = vmatpush1.bf16.msra.mxu0 %v1296
        %1313 = vmatprep.subr.bf16.mxu0 0
        %1314 = vmatpush1.bf16.msra.mxu0 %v1295
        %1315 = vmatprep.subr.bf16.mxu0 0
        %1316 = vmatpush1.bf16.msra.mxu0 %v1294
        %1317 = vmatprep.subr.bf16.mxu0 0
        %1318 = vmatpush1.bf16.msra.mxu0 %v1293
        %1319 = vmatprep.subr.bf16.mxu0 0
        %1320 = vmatpush1.bf16.msra.mxu0 %v1292
        %1321 = vmatprep.subr.bf16.mxu0 0
        %1322 = vmatpush1.bf16.msra.mxu0 %v1291
        %1323 = vmatprep.subr.bf16.mxu0 0
        %1324 = vmatpush2.bf16.msra.mxu0 0
        %1325 = vmatprep.subr.bf16.mxu0 0
        %1326 = vmatpush2.bf16.msra.mxu0 0
        %1327 = vmatprep.subr.bf16.mxu0 0
        %1328 = vmatpush2.bf16.msra.mxu0 0
        %1329 = vmatprep.subr.bf16.mxu0 0
        %1330 = vmatpush2.bf16.msra.mxu0 0
        %1331 = vmatprep.subr.bf16.mxu0 0
        %1332 = vmatpush2.bf16.msra.mxu0 0
        %1333 = vmatprep.subr.bf16.mxu0 0
        %1334 = vmatpush2.bf16.msra.mxu0 0
        %1335 = vmatprep.subr.bf16.mxu0 0
        %1336 = vmatpush2.bf16.msra.mxu0 0
        %1337 = vmatprep.subr.bf16.mxu0 0
        %1338 = vmatpush2.bf16.msra.mxu0 0
        %1339 = vmatprep.mubr.bf16.mxu0 0
        %1340 = vmatmul.mubr.bf16.gmra.mxu0 %v553
        %v1341 = vpop.f32.mrf.mxu0
        %v1342 = vadd.f32 %v1257, %v1341
        %v1343 = vpop.f32.mrf.mxu0
        %v1344 = vpop.f32.mrf.mxu0
        %v1345 = vadd.f32 %v1257, %v1344
        %v1346 = vpop.f32.mrf.mxu0
        %1347 = vdwg.mxu0
        %s1348 = scalar_lea.vmem %s5, 64
        %v1349 = vld [vmem:[%s1348] sm:$0xf]
        %v1350 = vld [vmem:[%s1348 + $0x4] sm:$0xf]
        %v1351 = vld [vmem:[%s1348 + $0x8] sm:$0xf]
        %v1352 = vld [vmem:[%s1348 + $0xc] sm:$0xf]
        %v1353 = vld [vmem:[%s1348 + $0x10] sm:$0xf]
        %v1354 = vld [vmem:[%s1348 + $0x14] sm:$0xf]
        %v1355 = vld [vmem:[%s1348 + $0x18] sm:$0xf]
        %v1356 = vld [vmem:[%s1348 + $0x1c] sm:$0xf]
        %v1357 = vld [vmem:[%s1348 + $0x20] sm:$0xf]
        %v1358 = vld [vmem:[%s1348 + $0x24] sm:$0xf]
        %v1359 = vld [vmem:[%s1348 + $0x28] sm:$0xf]
        %v1360 = vld [vmem:[%s1348 + $0x2c] sm:$0xf]
        %v1361 = vld [vmem:[%s1348 + $0x30] sm:$0xf]
        %v1362 = vld [vmem:[%s1348 + $0x34] sm:$0xf]
        %v1363 = vld [vmem:[%s1348 + $0x38] sm:$0xf]
        %v1364 = vld [vmem:[%s1348 + $0x3c] sm:$0xf]
        %s1365 = scalar_lea.vmem %s6, 1
        %v1366 = vld [vmem:[%s1365] sm:$0x1]
        %v1368 = vlaneseq
        %v1369 = vshrl.u32 %v1368, 7
        %v1370 = vsub.s32 0, %v1369
        %v1371 = vrot.slane %v1366, %v1370
        %v1389 = vunpack.c.l.b16 %v1349
        %v1390 = vunpack.c.l.b16 %v1350
        %v1391 = vunpack.c.l.b16 %v1351
        %v1392 = vunpack.c.l.b16 %v1352
        %v1393 = vunpack.c.l.b16 %v1353
        %v1394 = vunpack.c.l.b16 %v1354
        %v1395 = vunpack.c.l.b16 %v1355
        %v1396 = vunpack.c.l.b16 %v1356
        %v1397 = vunpack.c.l.b16 %v1357
        %v1398 = vunpack.c.l.b16 %v1358
        %v1399 = vunpack.c.l.b16 %v1359
        %v1400 = vunpack.c.l.b16 %v1360
        %v1401 = vunpack.c.l.b16 %v1361
        %v1402 = vunpack.c.l.b16 %v1362
        %v1403 = vunpack.c.l.b16 %v1363
        %v1404 = vunpack.c.l.b16 %v1364
        %v1405 = vpack.c.b16 %v1390, %v1389
        %v1406 = vpack.c.b16 %v1392, %v1391
        %v1407 = vpack.c.b16 %v1394, %v1393
        %v1408 = vpack.c.b16 %v1396, %v1395
        %v1409 = vpack.c.b16 %v1398, %v1397
        %v1410 = vpack.c.b16 %v1400, %v1399
        %v1411 = vpack.c.b16 %v1402, %v1401
        %v1412 = vpack.c.b16 %v1404, %v1403
        %1421 = vmatprep.subr.bf16.mxu0 0
        %1422 = vmatpush1.bf16.msra.mxu0 %v1412
        %1423 = vmatprep.subr.bf16.mxu0 0
        %1424 = vmatpush1.bf16.msra.mxu0 %v1411
        %1425 = vmatprep.subr.bf16.mxu0 0
        %1426 = vmatpush1.bf16.msra.mxu0 %v1410
        %1427 = vmatprep.subr.bf16.mxu0 0
        %1428 = vmatpush1.bf16.msra.mxu0 %v1409
        %1429 = vmatprep.subr.bf16.mxu0 0
        %1430 = vmatpush1.bf16.msra.mxu0 %v1408
        %1431 = vmatprep.subr.bf16.mxu0 0
        %1432 = vmatpush1.bf16.msra.mxu0 %v1407
        %1433 = vmatprep.subr.bf16.mxu0 0
        %1434 = vmatpush1.bf16.msra.mxu0 %v1406
        %1435 = vmatprep.subr.bf16.mxu0 0
        %1436 = vmatpush1.bf16.msra.mxu0 %v1405
        %1437 = vmatprep.subr.bf16.mxu0 0
        %1438 = vmatpush2.bf16.msra.mxu0 0
        %1439 = vmatprep.subr.bf16.mxu0 0
        %1440 = vmatpush2.bf16.msra.mxu0 0
        %1441 = vmatprep.subr.bf16.mxu0 0
        %1442 = vmatpush2.bf16.msra.mxu0 0
        %1443 = vmatprep.subr.bf16.mxu0 0
        %1444 = vmatpush2.bf16.msra.mxu0 0
        %1445 = vmatprep.subr.bf16.mxu0 0
        %1446 = vmatpush2.bf16.msra.mxu0 0
        %1447 = vmatprep.subr.bf16.mxu0 0
        %1448 = vmatpush2.bf16.msra.mxu0 0
        %1449 = vmatprep.subr.bf16.mxu0 0
        %1450 = vmatpush2.bf16.msra.mxu0 0
        %1451 = vmatprep.subr.bf16.mxu0 0
        %1452 = vmatpush2.bf16.msra.mxu0 0
        %1453 = vmatprep.mubr.bf16.mxu0 0
        %1454 = vmatmul.mubr.bf16.gmra.mxu0 %v553
        %v1455 = vpop.f32.mrf.mxu0
        %v1456 = vadd.f32 %v1371, %v1455
        %v1457 = vpop.f32.mrf.mxu0
        %v1458 = vpop.f32.mrf.mxu0
        %v1459 = vadd.f32 %v1371, %v1458
        %v1460 = vpop.f32.mrf.mxu0
        %1461 = vdwg.mxu0
        %v1462 = vpack.c.bf16 %v1228, %v1228
        %v1463 = vpack.c.bf16 %v1231, %v1231
        %v1464 = vpack.c.bf16 %v1342, %v1342
        %v1465 = vpack.c.bf16 %v1345, %v1345
        %v1466 = vpack.c.bf16 %v1456, %v1456
        %v1467 = vpack.c.bf16 %v1459, %v1459
        %v1469 = vsel %vm896, %v1462, 0
        %v1472 = vsel %vm896, %v1464, 0
        %1474 = vmatprep.subr.bf16.mxu0 0
        %1475 = vmatpush1.bf16.xpose.msra.mxu0 0
        %1476 = vmatprep.subr.bf16.mxu0 0
        %1477 = vmatpush1.bf16.xpose.msra.mxu0 0
        %1478 = vmatprep.subr.bf16.mxu0 0
        %1479 = vmatpush1.bf16.xpose.msra.mxu0 0
        %1480 = vmatprep.subr.bf16.mxu0 0
        %1481 = vmatpush1.bf16.xpose.msra.mxu0 0
        %1482 = vmatprep.subr.bf16.mxu0 0
        %1483 = vmatpush1.bf16.xpose.msra.mxu0 0
        %1484 = vmatprep.subr.bf16.mxu0 0
        %1485 = vmatpush1.bf16.xpose.msra.mxu0 0
        %1486 = vmatprep.subr.bf16.mxu0 0
        %1487 = vmatpush1.bf16.xpose.msra.mxu0 0
        %1488 = vmatprep.subr.bf16.mxu0 0
        %1489 = vmatpush1.bf16.xpose.msra.mxu0 %v1472
        %1490 = vmatprep.subr.bf16.mxu0 0
        %1491 = vmatpush2.bf16.xpose.msra.mxu0 0
        %1492 = vmatprep.subr.bf16.mxu0 0
        %1493 = vmatpush2.bf16.xpose.msra.mxu0 0
        %1494 = vmatprep.subr.bf16.mxu0 0
        %1495 = vmatpush2.bf16.xpose.msra.mxu0 0
        %1496 = vmatprep.subr.bf16.mxu0 0
        %1497 = vmatpush2.bf16.xpose.msra.mxu0 0
        %1498 = vmatprep.subr.bf16.mxu0 0
        %1499 = vmatpush2.bf16.xpose.msra.mxu0 0
        %1500 = vmatprep.subr.bf16.mxu0 0
        %1501 = vmatpush2.bf16.xpose.msra.mxu0 0
        %1502 = vmatprep.subr.bf16.mxu0 0
        %1503 = vmatpush2.bf16.xpose.msra.mxu0 0
        %1504 = vmatprep.subr.bf16.mxu0 0
        %1505 = vmatpush2.bf16.xpose.msra.mxu0 0
        %1506 = vmatprep.mubr.bf16.mxu0 0
        %1507 = vmatmul.mubr.bf16.gmra.mxu0 %v1469
        %v1508 = vpop.f32.mrf.mxu0
        %v1509 = vadd.f32 0.0, %v1508
        %v1510 = vpop.f32.mrf.mxu0
        %v1511 = vpop.f32.mrf.mxu0
        %v1512 = vpop.f32.mrf.mxu0
        %1513 = vdwg.mxu0
        %v1515 = vsel %vm896, %v1463, 0
        %v1518 = vsel %vm896, %v1465, 0
        %1520 = vmatprep.subr.bf16.mxu0 0
        %1521 = vmatpush1.bf16.xpose.msra.mxu0 0
        %1522 = vmatprep.subr.bf16.mxu0 0
        %1523 = vmatpush1.bf16.xpose.msra.mxu0 0
        %1524 = vmatprep.subr.bf16.mxu0 0
        %1525 = vmatpush1.bf16.xpose.msra.mxu0 0
        %1526 = vmatprep.subr.bf16.mxu0 0
        %1527 = vmatpush1.bf16.xpose.msra.mxu0 0
        %1528 = vmatprep.subr.bf16.mxu0 0
        %1529 = vmatpush1.bf16.xpose.msra.mxu0 0
        %1530 = vmatprep.subr.bf16.mxu0 0
        %1531 = vmatpush1.bf16.xpose.msra.mxu0 0
        %1532 = vmatprep.subr.bf16.mxu0 0
        %1533 = vmatpush1.bf16.xpose.msra.mxu0 0
        %1534 = vmatprep.subr.bf16.mxu0 0
        %1535 = vmatpush1.bf16.xpose.msra.mxu0 %v1518
        %1536 = vmatprep.subr.bf16.mxu0 0
        %1537 = vmatpush2.bf16.xpose.msra.mxu0 0
        %1538 = vmatprep.subr.bf16.mxu0 0
        %1539 = vmatpush2.bf16.xpose.msra.mxu0 0
        %1540 = vmatprep.subr.bf16.mxu0 0
        %1541 = vmatpush2.bf16.xpose.msra.mxu0 0
        %1542 = vmatprep.subr.bf16.mxu0 0
        %1543 = vmatpush2.bf16.xpose.msra.mxu0 0
        %1544 = vmatprep.subr.bf16.mxu0 0
        %1545 = vmatpush2.bf16.xpose.msra.mxu0 0
        %1546 = vmatprep.subr.bf16.mxu0 0
        %1547 = vmatpush2.bf16.xpose.msra.mxu0 0
        %1548 = vmatprep.subr.bf16.mxu0 0
        %1549 = vmatpush2.bf16.xpose.msra.mxu0 0
        %1550 = vmatprep.subr.bf16.mxu0 0
        %1551 = vmatpush2.bf16.xpose.msra.mxu0 0
        %1552 = vmatprep.mubr.bf16.mxu0 0
        %1553 = vmatmul.mubr.bf16.gmra.mxu0 %v1515
        %v1554 = vpop.f32.mrf.mxu0
        %v1555 = vadd.f32 0.0, %v1554
        %v1556 = vpop.f32.mrf.mxu0
        %v1557 = vpop.f32.mrf.mxu0
        %v1558 = vpop.f32.mrf.mxu0
        %1559 = vdwg.mxu0
        %v1560 = vmul.f32 %v1509, 0.17677669
        %v1561 = vmul.f32 %v1555, 0.17677669
        %v1562 = vsel %vm991, %v1560, -inf
        %1563 = vmax.xlane.f32.xlu0 %v1562
        %v1564 = vpop.xlane.xlu0 %1563
        %v1565 = vsel %vm991, %v1561, -inf
        %1566 = vmax.xlane.f32.xlu0 %v1565
        %v1567 = vpop.xlane.xlu0 %1566
        %v1568 = vsub.f32 %v1560, %v1564
        %v1569 = vsub.f32 %v1561, %v1567
        %v1570 = vmul.f32 %v1568, 1.442695
        %v1571 = vpow.pop %v1570
        %v1572 = vmul.f32 %v1569, 1.442695
        %v1573 = vpow.pop %v1572
        %v1574 = vsel %vm991, %v1571, 0.0
        %1575 = vadd.xlane.f32.xlu0 %v1574
        %v1576 = vpop.xlane.xlu0 %1575
        %v1577 = vsel %vm991, %v1573, 0.0
        %1578 = vadd.xlane.f32.xlu0 %v1577
        %v1579 = vpop.xlane.xlu0 %1578
        %v1580 = vrcp.pop %v1576
        %v1581 = vrcp.pop %v1579
        %v1582 = vmul.f32 %v1571, %v1580
        %v1583 = vmul.f32 %v1573, %v1581
        %v1584 = vpack.c.bf16 %v1582, %v1582
        %v1585 = vpack.c.bf16 %v1583, %v1583
        %v1587 = vsel %vm991, %v1584, 0
        %v1590 = vsel %vm1019, %v1466, 0
        %1592 = vmatprep.subr.bf16.mxu0 0
        %1593 = vmatpush1.bf16.msra.mxu0 0
        %1594 = vmatprep.subr.bf16.mxu0 0
        %1595 = vmatpush1.bf16.msra.mxu0 0
        %1596 = vmatprep.subr.bf16.mxu0 0
        %1597 = vmatpush1.bf16.msra.mxu0 0
        %1598 = vmatprep.subr.bf16.mxu0 0
        %1599 = vmatpush1.bf16.msra.mxu0 0
        %1600 = vmatprep.subr.bf16.mxu0 0
        %1601 = vmatpush1.bf16.msra.mxu0 0
        %1602 = vmatprep.subr.bf16.mxu0 0
        %1603 = vmatpush1.bf16.msra.mxu0 0
        %1604 = vmatprep.subr.bf16.mxu0 0
        %1605 = vmatpush1.bf16.msra.mxu0 0
        %1606 = vmatprep.subr.bf16.mxu0 0
        %1607 = vmatpush1.bf16.msra.mxu0 %v1590
        %1608 = vmatprep.subr.bf16.mxu0 0
        %1609 = vmatpush2.bf16.msra.mxu0 0
        %1610 = vmatprep.subr.bf16.mxu0 0
        %1611 = vmatpush2.bf16.msra.mxu0 0
        %1612 = vmatprep.subr.bf16.mxu0 0
        %1613 = vmatpush2.bf16.msra.mxu0 0
        %1614 = vmatprep.subr.bf16.mxu0 0
        %1615 = vmatpush2.bf16.msra.mxu0 0
        %1616 = vmatprep.subr.bf16.mxu0 0
        %1617 = vmatpush2.bf16.msra.mxu0 0
        %1618 = vmatprep.subr.bf16.mxu0 0
        %1619 = vmatpush2.bf16.msra.mxu0 0
        %1620 = vmatprep.subr.bf16.mxu0 0
        %1621 = vmatpush2.bf16.msra.mxu0 0
        %1622 = vmatprep.subr.bf16.mxu0 0
        %1623 = vmatpush2.bf16.msra.mxu0 0
        %1624 = vmatprep.mubr.bf16.mxu0 0
        %1625 = vmatmul.mubr.bf16.gmra.mxu0 %v1587
        %v1626 = vpop.f32.mrf.mxu0
        %v1627 = vadd.f32 0.0, %v1626
        %v1628 = vpop.f32.mrf.mxu0
        %v1629 = vpop.f32.mrf.mxu0
        %v1630 = vpop.f32.mrf.mxu0
        %1631 = vdwg.mxu0
        %v1633 = vsel %vm991, %v1585, 0
        %v1636 = vsel %vm1019, %v1467, 0
        %1638 = vmatprep.subr.bf16.mxu0 0
        %1639 = vmatpush1.bf16.msra.mxu0 0
        %1640 = vmatprep.subr.bf16.mxu0 0
        %1641 = vmatpush1.bf16.msra.mxu0 0
        %1642 = vmatprep.subr.bf16.mxu0 0
        %1643 = vmatpush1.bf16.msra.mxu0 0
        %1644 = vmatprep.subr.bf16.mxu0 0
        %1645 = vmatpush1.bf16.msra.mxu0 0
        %1646 = vmatprep.subr.bf16.mxu0 0
        %1647 = vmatpush1.bf16.msra.mxu0 0
        %1648 = vmatprep.subr.bf16.mxu0 0
        %1649 = vmatpush1.bf16.msra.mxu0 0
        %1650 = vmatprep.subr.bf16.mxu0 0
        %1651 = vmatpush1.bf16.msra.mxu0 0
        %1652 = vmatprep.subr.bf16.mxu0 0
        %1653 = vmatpush1.bf16.msra.mxu0 %v1636
        %1654 = vmatprep.subr.bf16.mxu0 0
        %1655 = vmatpush2.bf16.msra.mxu0 0
        %1656 = vmatprep.subr.bf16.mxu0 0
        %1657 = vmatpush2.bf16.msra.mxu0 0
        %1658 = vmatprep.subr.bf16.mxu0 0
        %1659 = vmatpush2.bf16.msra.mxu0 0
        %1660 = vmatprep.subr.bf16.mxu0 0
        %1661 = vmatpush2.bf16.msra.mxu0 0
        %1662 = vmatprep.subr.bf16.mxu0 0
        %1663 = vmatpush2.bf16.msra.mxu0 0
        %1664 = vmatprep.subr.bf16.mxu0 0
        %1665 = vmatpush2.bf16.msra.mxu0 0
        %1666 = vmatprep.subr.bf16.mxu0 0
        %1667 = vmatpush2.bf16.msra.mxu0 0
        %1668 = vmatprep.subr.bf16.mxu0 0
        %1669 = vmatpush2.bf16.msra.mxu0 0
        %1670 = vmatprep.mubr.bf16.mxu0 0
        %1671 = vmatmul.mubr.bf16.gmra.mxu0 %v1633
        %v1672 = vpop.f32.mrf.mxu0
        %v1673 = vadd.f32 0.0, %v1672
        %v1674 = vpop.f32.mrf.mxu0
        %v1675 = vpop.f32.mrf.mxu0
        %v1676 = vpop.f32.mrf.mxu0
        %1677 = vdwg.mxu0
        %v1678 = vpack.c.bf16 %v1673, %v1627
        %v1680 = vunpack.c.l.b16 %v1678
        %v1681 = vunpack.c.h.b16 %v1678
        %v1682 = vpack.c.b16 %v1680, %v1680
        %v1683 = vpack.c.b16 %v1681, %v1681
        %1684 = vrot.lane.b32.xlu0 %v1682, 32
        %v1685 = vpop.permute.xlu0 %1684
        %1686 = vrot.lane.b32.xlu0 %v1683, 32
        %v1687 = vpop.permute.xlu0 %1686
        %vm1690 = vcmask 519424
        %1691 = vst.msk [vmem:[#allocation2] sm:$0xf] %vm1690, %v1685
        %1692 = vst.msk [vmem:[#allocation2 + $0x4] sm:$0xf] %vm1690, %v1687
        %s1693 = scalar_lea.vmem %s1, 128
        %v1694 = vld [vmem:[%s1693] sm:$0xf]
        %v1695 = vld [vmem:[%s1693 + $0x4] sm:$0xf]
        %v1696 = vld [vmem:[%s1693 + $0x8] sm:$0xf]
        %v1697 = vld [vmem:[%s1693 + $0xc] sm:$0xf]
        %v1698 = vld [vmem:[%s1693 + $0x10] sm:$0xf]
        %v1699 = vld [vmem:[%s1693 + $0x14] sm:$0xf]
        %v1700 = vld [vmem:[%s1693 + $0x18] sm:$0xf]
        %v1701 = vld [vmem:[%s1693 + $0x1c] sm:$0xf]
        %v1702 = vld [vmem:[%s1693 + $0x20] sm:$0xf]
        %v1703 = vld [vmem:[%s1693 + $0x24] sm:$0xf]
        %v1704 = vld [vmem:[%s1693 + $0x28] sm:$0xf]
        %v1705 = vld [vmem:[%s1693 + $0x2c] sm:$0xf]
        %v1706 = vld [vmem:[%s1693 + $0x30] sm:$0xf]
        %v1707 = vld [vmem:[%s1693 + $0x34] sm:$0xf]
        %v1708 = vld [vmem:[%s1693 + $0x38] sm:$0xf]
        %v1709 = vld [vmem:[%s1693 + $0x3c] sm:$0xf]
        %s1710 = scalar_lea.vmem %s2, 2
        %v1711 = vld [vmem:[%s1710] sm:$0x1]
        %v1713 = vlaneseq
        %v1714 = vshrl.u32 %v1713, 7
        %v1715 = vsub.s32 0, %v1714
        %v1716 = vrot.slane %v1711, %v1715
        %v1734 = vunpack.c.l.b16 %v1694
        %v1735 = vunpack.c.l.b16 %v1695
        %v1736 = vunpack.c.l.b16 %v1696
        %v1737 = vunpack.c.l.b16 %v1697
        %v1738 = vunpack.c.l.b16 %v1698
        %v1739 = vunpack.c.l.b16 %v1699
        %v1740 = vunpack.c.l.b16 %v1700
        %v1741 = vunpack.c.l.b16 %v1701
        %v1742 = vunpack.c.l.b16 %v1702
        %v1743 = vunpack.c.l.b16 %v1703
        %v1744 = vunpack.c.l.b16 %v1704
        %v1745 = vunpack.c.l.b16 %v1705
        %v1746 = vunpack.c.l.b16 %v1706
        %v1747 = vunpack.c.l.b16 %v1707
        %v1748 = vunpack.c.l.b16 %v1708
        %v1749 = vunpack.c.l.b16 %v1709
        %v1750 = vpack.c.b16 %v1735, %v1734
        %v1751 = vpack.c.b16 %v1737, %v1736
        %v1752 = vpack.c.b16 %v1739, %v1738
        %v1753 = vpack.c.b16 %v1741, %v1740
        %v1754 = vpack.c.b16 %v1743, %v1742
        %v1755 = vpack.c.b16 %v1745, %v1744
        %v1756 = vpack.c.b16 %v1747, %v1746
        %v1757 = vpack.c.b16 %v1749, %v1748
        %1766 = vmatprep.subr.bf16.mxu0 0
        %1767 = vmatpush1.bf16.msra.mxu0 %v1757
        %1768 = vmatprep.subr.bf16.mxu0 0
        %1769 = vmatpush1.bf16.msra.mxu0 %v1756
        %1770 = vmatprep.subr.bf16.mxu0 0
        %1771 = vmatpush1.bf16.msra.mxu0 %v1755
        %1772 = vmatprep.subr.bf16.mxu0 0
        %1773 = vmatpush1.bf16.msra.mxu0 %v1754
        %1774 = vmatprep.subr.bf16.mxu0 0
        %1775 = vmatpush1.bf16.msra.mxu0 %v1753
        %1776 = vmatprep.subr.bf16.mxu0 0
        %1777 = vmatpush1.bf16.msra.mxu0 %v1752
        %1778 = vmatprep.subr.bf16.mxu0 0
        %1779 = vmatpush1.bf16.msra.mxu0 %v1751
        %1780 = vmatprep.subr.bf16.mxu0 0
        %1781 = vmatpush1.bf16.msra.mxu0 %v1750
        %1782 = vmatprep.subr.bf16.mxu0 0
        %1783 = vmatpush2.bf16.msra.mxu0 0
        %1784 = vmatprep.subr.bf16.mxu0 0
        %1785 = vmatpush2.bf16.msra.mxu0 0
        %1786 = vmatprep.subr.bf16.mxu0 0
        %1787 = vmatpush2.bf16.msra.mxu0 0
        %1788 = vmatprep.subr.bf16.mxu0 0
        %1789 = vmatpush2.bf16.msra.mxu0 0
        %1790 = vmatprep.subr.bf16.mxu0 0
        %1791 = vmatpush2.bf16.msra.mxu0 0
        %1792 = vmatprep.subr.bf16.mxu0 0
        %1793 = vmatpush2.bf16.msra.mxu0 0
        %1794 = vmatprep.subr.bf16.mxu0 0
        %1795 = vmatpush2.bf16.msra.mxu0 0
        %1796 = vmatprep.subr.bf16.mxu0 0
        %1797 = vmatpush2.bf16.msra.mxu0 0
        %1798 = vmatprep.mubr.bf16.mxu0 0
        %1799 = vmatmul.mubr.bf16.gmra.mxu0 %v553
        %v1800 = vpop.f32.mrf.mxu0
        %v1801 = vadd.f32 %v1716, %v1800
        %v1802 = vpop.f32.mrf.mxu0
        %v1803 = vpop.f32.mrf.mxu0
        %v1804 = vadd.f32 %v1716, %v1803
        %v1805 = vpop.f32.mrf.mxu0
        %1806 = vdwg.mxu0
        %s1807 = scalar_lea.vmem %s3, 128
        %v1808 = vld [vmem:[%s1807] sm:$0xf]
        %v1809 = vld [vmem:[%s1807 + $0x4] sm:$0xf]
        %v1810 = vld [vmem:[%s1807 + $0x8] sm:$0xf]
        %v1811 = vld [vmem:[%s1807 + $0xc] sm:$0xf]
        %v1812 = vld [vmem:[%s1807 + $0x10] sm:$0xf]
        %v1813 = vld [vmem:[%s1807 + $0x14] sm:$0xf]
        %v1814 = vld [vmem:[%s1807 + $0x18] sm:$0xf]
        %v1815 = vld [vmem:[%s1807 + $0x1c] sm:$0xf]
        %v1816 = vld [vmem:[%s1807 + $0x20] sm:$0xf]
        %v1817 = vld [vmem:[%s1807 + $0x24] sm:$0xf]
        %v1818 = vld [vmem:[%s1807 + $0x28] sm:$0xf]
        %v1819 = vld [vmem:[%s1807 + $0x2c] sm:$0xf]
        %v1820 = vld [vmem:[%s1807 + $0x30] sm:$0xf]
        %v1821 = vld [vmem:[%s1807 + $0x34] sm:$0xf]
        %v1822 = vld [vmem:[%s1807 + $0x38] sm:$0xf]
        %v1823 = vld [vmem:[%s1807 + $0x3c] sm:$0xf]
        %s1824 = scalar_lea.vmem %s4, 2
        %v1825 = vld [vmem:[%s1824] sm:$0x1]
        %v1827 = vlaneseq
        %v1828 = vshrl.u32 %v1827, 7
        %v1829 = vsub.s32 0, %v1828
        %v1830 = vrot.slane %v1825, %v1829
        %v1848 = vunpack.c.l.b16 %v1808
        %v1849 = vunpack.c.l.b16 %v1809
        %v1850 = vunpack.c.l.b16 %v1810
        %v1851 = vunpack.c.l.b16 %v1811
        %v1852 = vunpack.c.l.b16 %v1812
        %v1853 = vunpack.c.l.b16 %v1813
        %v1854 = vunpack.c.l.b16 %v1814
        %v1855 = vunpack.c.l.b16 %v1815
        %v1856 = vunpack.c.l.b16 %v1816
        %v1857 = vunpack.c.l.b16 %v1817
        %v1858 = vunpack.c.l.b16 %v1818
        %v1859 = vunpack.c.l.b16 %v1819
        %v1860 = vunpack.c.l.b16 %v1820
        %v1861 = vunpack.c.l.b16 %v1821
        %v1862 = vunpack.c.l.b16 %v1822
        %v1863 = vunpack.c.l.b16 %v1823
        %v1864 = vpack.c.b16 %v1849, %v1848
        %v1865 = vpack.c.b16 %v1851, %v1850
        %v1866 = vpack.c.b16 %v1853, %v1852
        %v1867 = vpack.c.b16 %v1855, %v1854
        %v1868 = vpack.c.b16 %v1857, %v1856
        %v1869 = vpack.c.b16 %v1859, %v1858
        %v1870 = vpack.c.b16 %v1861, %v1860
        %v1871 = vpack.c.b16 %v1863, %v1862
        %1880 = vmatprep.subr.bf16.mxu0 0
        %1881 = vmatpush1.bf16.msra.mxu0 %v1871
        %1882 = vmatprep.subr.bf16.mxu0 0
        %1883 = vmatpush1.bf16.msra.mxu0 %v1870
        %1884 = vmatprep.subr.bf16.mxu0 0
        %1885 = vmatpush1.bf16.msra.mxu0 %v1869
        %1886 = vmatprep.subr.bf16.mxu0 0
        %1887 = vmatpush1.bf16.msra.mxu0 %v1868
        %1888 = vmatprep.subr.bf16.mxu0 0
        %1889 = vmatpush1.bf16.msra.mxu0 %v1867
        %1890 = vmatprep.subr.bf16.mxu0 0
        %1891 = vmatpush1.bf16.msra.mxu0 %v1866
        %1892 = vmatprep.subr.bf16.mxu0 0
        %1893 = vmatpush1.bf16.msra.mxu0 %v1865
        %1894 = vmatprep.subr.bf16.mxu0 0
        %1895 = vmatpush1.bf16.msra.mxu0 %v1864
        %1896 = vmatprep.subr.bf16.mxu0 0
        %1897 = vmatpush2.bf16.msra.mxu0 0
        %1898 = vmatprep.subr.bf16.mxu0 0
        %1899 = vmatpush2.bf16.msra.mxu0 0
        %1900 = vmatprep.subr.bf16.mxu0 0
        %1901 = vmatpush2.bf16.msra.mxu0 0
        %1902 = vmatprep.subr.bf16.mxu0 0
        %1903 = vmatpush2.bf16.msra.mxu0 0
        %1904 = vmatprep.subr.bf16.mxu0 0
        %1905 = vmatpush2.bf16.msra.mxu0 0
        %1906 = vmatprep.subr.bf16.mxu0 0
        %1907 = vmatpush2.bf16.msra.mxu0 0
        %1908 = vmatprep.subr.bf16.mxu0 0
        %1909 = vmatpush2.bf16.msra.mxu0 0
        %1910 = vmatprep.subr.bf16.mxu0 0
        %1911 = vmatpush2.bf16.msra.mxu0 0
        %1912 = vmatprep.mubr.bf16.mxu0 0
        %1913 = vmatmul.mubr.bf16.gmra.mxu0 %v553
        %v1914 = vpop.f32.mrf.mxu0
        %v1915 = vadd.f32 %v1830, %v1914
        %v1916 = vpop.f32.mrf.mxu0
        %v1917 = vpop.f32.mrf.mxu0
        %v1918 = vadd.f32 %v1830, %v1917
        %v1919 = vpop.f32.mrf.mxu0
        %1920 = vdwg.mxu0
        %s1921 = scalar_lea.vmem %s5, 128
        %v1922 = vld [vmem:[%s1921] sm:$0xf]
        %v1923 = vld [vmem:[%s1921 + $0x4] sm:$0xf]
        %v1924 = vld [vmem:[%s1921 + $0x8] sm:$0xf]
        %v1925 = vld [vmem:[%s1921 + $0xc] sm:$0xf]
        %v1926 = vld [vmem:[%s1921 + $0x10] sm:$0xf]
        %v1927 = vld [vmem:[%s1921 + $0x14] sm:$0xf]
        %v1928 = vld [vmem:[%s1921 + $0x18] sm:$0xf]
        %v1929 = vld [vmem:[%s1921 + $0x1c] sm:$0xf]
        %v1930 = vld [vmem:[%s1921 + $0x20] sm:$0xf]
        %v1931 = vld [vmem:[%s1921 + $0x24] sm:$0xf]
        %v1932 = vld [vmem:[%s1921 + $0x28] sm:$0xf]
        %v1933 = vld [vmem:[%s1921 + $0x2c] sm:$0xf]
        %v1934 = vld [vmem:[%s1921 + $0x30] sm:$0xf]
        %v1935 = vld [vmem:[%s1921 + $0x34] sm:$0xf]
        %v1936 = vld [vmem:[%s1921 + $0x38] sm:$0xf]
        %v1937 = vld [vmem:[%s1921 + $0x3c] sm:$0xf]
        %s1938 = scalar_lea.vmem %s6, 2
        %v1939 = vld [vmem:[%s1938] sm:$0x1]
        %v1941 = vlaneseq
        %v1942 = vshrl.u32 %v1941, 7
        %v1943 = vsub.s32 0, %v1942
        %v1944 = vrot.slane %v1939, %v1943
        %v1962 = vunpack.c.l.b16 %v1922
        %v1963 = vunpack.c.l.b16 %v1923
        %v1964 = vunpack.c.l.b16 %v1924
        %v1965 = vunpack.c.l.b16 %v1925
        %v1966 = vunpack.c.l.b16 %v1926
        %v1967 = vunpack.c.l.b16 %v1927
        %v1968 = vunpack.c.l.b16 %v1928
        %v1969 = vunpack.c.l.b16 %v1929
        %v1970 = vunpack.c.l.b16 %v1930
        %v1971 = vunpack.c.l.b16 %v1931
        %v1972 = vunpack.c.l.b16 %v1932
        %v1973 = vunpack.c.l.b16 %v1933
        %v1974 = vunpack.c.l.b16 %v1934
        %v1975 = vunpack.c.l.b16 %v1935
        %v1976 = vunpack.c.l.b16 %v1936
        %v1977 = vunpack.c.l.b16 %v1937
        %v1978 = vpack.c.b16 %v1963, %v1962
        %v1979 = vpack.c.b16 %v1965, %v1964
        %v1980 = vpack.c.b16 %v1967, %v1966
        %v1981 = vpack.c.b16 %v1969, %v1968
        %v1982 = vpack.c.b16 %v1971, %v1970
        %v1983 = vpack.c.b16 %v1973, %v1972
        %v1984 = vpack.c.b16 %v1975, %v1974
        %v1985 = vpack.c.b16 %v1977, %v1976
        %1994 = vmatprep.subr.bf16.mxu0 0
        %1995 = vmatpush1.bf16.msra.mxu0 %v1985
        %1996 = vmatprep.subr.bf16.mxu0 0
        %1997 = vmatpush1.bf16.msra.mxu0 %v1984
        %1998 = vmatprep.subr.bf16.mxu0 0
        %1999 = vmatpush1.bf16.msra.mxu0 %v1983
        %2000 = vmatprep.subr.bf16.mxu0 0
        %2001 = vmatpush1.bf16.msra.mxu0 %v1982
        %2002 = vmatprep.subr.bf16.mxu0 0
        %2003 = vmatpush1.bf16.msra.mxu0 %v1981
        %2004 = vmatprep.subr.bf16.mxu0 0
        %2005 = vmatpush1.bf16.msra.mxu0 %v1980
        %2006 = vmatprep.subr.bf16.mxu0 0
        %2007 = vmatpush1.bf16.msra.mxu0 %v1979
        %2008 = vmatprep.subr.bf16.mxu0 0
        %2009 = vmatpush1.bf16.msra.mxu0 %v1978
        %2010 = vmatprep.subr.bf16.mxu0 0
        %2011 = vmatpush2.bf16.msra.mxu0 0
        %2012 = vmatprep.subr.bf16.mxu0 0
        %2013 = vmatpush2.bf16.msra.mxu0 0
        %2014 = vmatprep.subr.bf16.mxu0 0
        %2015 = vmatpush2.bf16.msra.mxu0 0
        %2016 = vmatprep.subr.bf16.mxu0 0
        %2017 = vmatpush2.bf16.msra.mxu0 0
        %2018 = vmatprep.subr.bf16.mxu0 0
        %2019 = vmatpush2.bf16.msra.mxu0 0
        %2020 = vmatprep.subr.bf16.mxu0 0
        %2021 = vmatpush2.bf16.msra.mxu0 0
        %2022 = vmatprep.subr.bf16.mxu0 0
        %2023 = vmatpush2.bf16.msra.mxu0 0
        %2024 = vmatprep.subr.bf16.mxu0 0
        %2025 = vmatpush2.bf16.msra.mxu0 0
        %2026 = vmatprep.mubr.bf16.mxu0 0
        %2027 = vmatmul.mubr.bf16.gmra.mxu0 %v553
        %v2028 = vpop.f32.mrf.mxu0
        %v2029 = vadd.f32 %v1944, %v2028
        %v2030 = vpop.f32.mrf.mxu0
        %v2031 = vpop.f32.mrf.mxu0
        %v2032 = vadd.f32 %v1944, %v2031
        %v2033 = vpop.f32.mrf.mxu0
        %2034 = vdwg.mxu0
        %v2035 = vpack.c.bf16 %v1801, %v1801
        %v2036 = vpack.c.bf16 %v1804, %v1804
        %v2037 = vpack.c.bf16 %v1915, %v1915
        %v2038 = vpack.c.bf16 %v1918, %v1918
        %v2039 = vpack.c.bf16 %v2029, %v2029
        %v2040 = vpack.c.bf16 %v2032, %v2032
        %v2042 = vsel %vm896, %v2035, 0
        %v2045 = vsel %vm896, %v2037, 0
        %2047 = vmatprep.subr.bf16.mxu0 0
        %2048 = vmatpush1.bf16.xpose.msra.mxu0 0
        %2049 = vmatprep.subr.bf16.mxu0 0
        %2050 = vmatpush1.bf16.xpose.msra.mxu0 0
        %2051 = vmatprep.subr.bf16.mxu0 0
        %2052 = vmatpush1.bf16.xpose.msra.mxu0 0
        %2053 = vmatprep.subr.bf16.mxu0 0
        %2054 = vmatpush1.bf16.xpose.msra.mxu0 0
        %2055 = vmatprep.subr.bf16.mxu0 0
        %2056 = vmatpush1.bf16.xpose.msra.mxu0 0
        %2057 = vmatprep.subr.bf16.mxu0 0
        %2058 = vmatpush1.bf16.xpose.msra.mxu0 0
        %2059 = vmatprep.subr.bf16.mxu0 0
        %2060 = vmatpush1.bf16.xpose.msra.mxu0 0
        %2061 = vmatprep.subr.bf16.mxu0 0
        %2062 = vmatpush1.bf16.xpose.msra.mxu0 %v2045
        %2063 = vmatprep.subr.bf16.mxu0 0
        %2064 = vmatpush2.bf16.xpose.msra.mxu0 0
        %2065 = vmatprep.subr.bf16.mxu0 0
        %2066 = vmatpush2.bf16.xpose.msra.mxu0 0
        %2067 = vmatprep.subr.bf16.mxu0 0
        %2068 = vmatpush2.bf16.xpose.msra.mxu0 0
        %2069 = vmatprep.subr.bf16.mxu0 0
        %2070 = vmatpush2.bf16.xpose.msra.mxu0 0
        %2071 = vmatprep.subr.bf16.mxu0 0
        %2072 = vmatpush2.bf16.xpose.msra.mxu0 0
        %2073 = vmatprep.subr.bf16.mxu0 0
        %2074 = vmatpush2.bf16.xpose.msra.mxu0 0
        %2075 = vmatprep.subr.bf16.mxu0 0
        %2076 = vmatpush2.bf16.xpose.msra.mxu0 0
        %2077 = vmatprep.subr.bf16.mxu0 0
        %2078 = vmatpush2.bf16.xpose.msra.mxu0 0
        %2079 = vmatprep.mubr.bf16.mxu0 0
        %2080 = vmatmul.mubr.bf16.gmra.mxu0 %v2042
        %v2081 = vpop.f32.mrf.mxu0
        %v2082 = vadd.f32 0.0, %v2081
        %v2083 = vpop.f32.mrf.mxu0
        %v2084 = vpop.f32.mrf.mxu0
        %v2085 = vpop.f32.mrf.mxu0
        %2086 = vdwg.mxu0
        %v2088 = vsel %vm896, %v2036, 0
        %v2091 = vsel %vm896, %v2038, 0
        %2093 = vmatprep.subr.bf16.mxu0 0
        %2094 = vmatpush1.bf16.xpose.msra.mxu0 0
        %2095 = vmatprep.subr.bf16.mxu0 0
        %2096 = vmatpush1.bf16.xpose.msra.mxu0 0
        %2097 = vmatprep.subr.bf16.mxu0 0
        %2098 = vmatpush1.bf16.xpose.msra.mxu0 0
        %2099 = vmatprep.subr.bf16.mxu0 0
        %2100 = vmatpush1.bf16.xpose.msra.mxu0 0
        %2101 = vmatprep.subr.bf16.mxu0 0
        %2102 = vmatpush1.bf16.xpose.msra.mxu0 0
        %2103 = vmatprep.subr.bf16.mxu0 0
        %2104 = vmatpush1.bf16.xpose.msra.mxu0 0
        %2105 = vmatprep.subr.bf16.mxu0 0
        %2106 = vmatpush1.bf16.xpose.msra.mxu0 0
        %2107 = vmatprep.subr.bf16.mxu0 0
        %2108 = vmatpush1.bf16.xpose.msra.mxu0 %v2091
        %2109 = vmatprep.subr.bf16.mxu0 0
        %2110 = vmatpush2.bf16.xpose.msra.mxu0 0
        %2111 = vmatprep.subr.bf16.mxu0 0
        %2112 = vmatpush2.bf16.xpose.msra.mxu0 0
        %2113 = vmatprep.subr.bf16.mxu0 0
        %2114 = vmatpush2.bf16.xpose.msra.mxu0 0
        %2115 = vmatprep.subr.bf16.mxu0 0
        %2116 = vmatpush2.bf16.xpose.msra.mxu0 0
        %2117 = vmatprep.subr.bf16.mxu0 0
        %2118 = vmatpush2.bf16.xpose.msra.mxu0 0
        %2119 = vmatprep.subr.bf16.mxu0 0
        %2120 = vmatpush2.bf16.xpose.msra.mxu0 0
        %2121 = vmatprep.subr.bf16.mxu0 0
        %2122 = vmatpush2.bf16.xpose.msra.mxu0 0
        %2123 = vmatprep.subr.bf16.mxu0 0
        %2124 = vmatpush2.bf16.xpose.msra.mxu0 0
        %2125 = vmatprep.mubr.bf16.mxu0 0
        %2126 = vmatmul.mubr.bf16.gmra.mxu0 %v2088
        %v2127 = vpop.f32.mrf.mxu0
        %v2128 = vadd.f32 0.0, %v2127
        %v2129 = vpop.f32.mrf.mxu0
        %v2130 = vpop.f32.mrf.mxu0
        %v2131 = vpop.f32.mrf.mxu0
        %2132 = vdwg.mxu0
        %v2133 = vmul.f32 %v2082, 0.17677669
        %v2134 = vmul.f32 %v2128, 0.17677669
        %v2135 = vsel %vm991, %v2133, -inf
        %2136 = vmax.xlane.f32.xlu0 %v2135
        %v2137 = vpop.xlane.xlu0 %2136
        %v2138 = vsel %vm991, %v2134, -inf
        %2139 = vmax.xlane.f32.xlu0 %v2138
        %v2140 = vpop.xlane.xlu0 %2139
        %v2141 = vsub.f32 %v2133, %v2137
        %v2142 = vsub.f32 %v2134, %v2140
        %v2143 = vmul.f32 %v2141, 1.442695
        %v2144 = vpow.pop %v2143
        %v2145 = vmul.f32 %v2142, 1.442695
        %v2146 = vpow.pop %v2145
        %v2147 = vsel %vm991, %v2144, 0.0
        %2148 = vadd.xlane.f32.xlu0 %v2147
        %v2149 = vpop.xlane.xlu0 %2148
        %v2150 = vsel %vm991, %v2146, 0.0
        %2151 = vadd.xlane.f32.xlu0 %v2150
        %v2152 = vpop.xlane.xlu0 %2151
        %v2153 = vrcp.pop %v2149
        %v2154 = vrcp.pop %v2152
        %v2155 = vmul.f32 %v2144, %v2153
        %v2156 = vmul.f32 %v2146, %v2154
        %v2157 = vpack.c.bf16 %v2155, %v2155
        %v2158 = vpack.c.bf16 %v2156, %v2156
        %v2160 = vsel %vm991, %v2157, 0
        %v2163 = vsel %vm1019, %v2039, 0
        %2165 = vmatprep.subr.bf16.mxu0 0
        %2166 = vmatpush1.bf16.msra.mxu0 0
        %2167 = vmatprep.subr.bf16.mxu0 0
        %2168 = vmatpush1.bf16.msra.mxu0 0
        %2169 = vmatprep.subr.bf16.mxu0 0
        %2170 = vmatpush1.bf16.msra.mxu0 0
        %2171 = vmatprep.subr.bf16.mxu0 0
        %2172 = vmatpush1.bf16.msra.mxu0 0
        %2173 = vmatprep.subr.bf16.mxu0 0
        %2174 = vmatpush1.bf16.msra.mxu0 0
        %2175 = vmatprep.subr.bf16.mxu0 0
        %2176 = vmatpush1.bf16.msra.mxu0 0
        %2177 = vmatprep.subr.bf16.mxu0 0
        %2178 = vmatpush1.bf16.msra.mxu0 0
        %2179 = vmatprep.subr.bf16.mxu0 0
        %2180 = vmatpush1.bf16.msra.mxu0 %v2163
        %2181 = vmatprep.subr.bf16.mxu0 0
        %2182 = vmatpush2.bf16.msra.mxu0 0
        %2183 = vmatprep.subr.bf16.mxu0 0
        %2184 = vmatpush2.bf16.msra.mxu0 0
        %2185 = vmatprep.subr.bf16.mxu0 0
        %2186 = vmatpush2.bf16.msra.mxu0 0
        %2187 = vmatprep.subr.bf16.mxu0 0
        %2188 = vmatpush2.bf16.msra.mxu0 0
        %2189 = vmatprep.subr.bf16.mxu0 0
        %2190 = vmatpush2.bf16.msra.mxu0 0
        %2191 = vmatprep.subr.bf16.mxu0 0
        %2192 = vmatpush2.bf16.msra.mxu0 0
        %2193 = vmatprep.subr.bf16.mxu0 0
        %2194 = vmatpush2.bf16.msra.mxu0 0
        %2195 = vmatprep.subr.bf16.mxu0 0
        %2196 = vmatpush2.bf16.msra.mxu0 0
        %2197 = vmatprep.mubr.bf16.mxu0 0
        %2198 = vmatmul.mubr.bf16.gmra.mxu0 %v2160
        %v2199 = vpop.f32.mrf.mxu0
        %v2200 = vadd.f32 0.0, %v2199
        %v2201 = vpop.f32.mrf.mxu0
        %v2202 = vpop.f32.mrf.mxu0
        %v2203 = vpop.f32.mrf.mxu0
        %2204 = vdwg.mxu0
        %v2206 = vsel %vm991, %v2158, 0
        %v2209 = vsel %vm1019, %v2040, 0
        %2211 = vmatprep.subr.bf16.mxu0 0
        %2212 = vmatpush1.bf16.msra.mxu0 0
        %2213 = vmatprep.subr.bf16.mxu0 0
        %2214 = vmatpush1.bf16.msra.mxu0 0
        %2215 = vmatprep.subr.bf16.mxu0 0
        %2216 = vmatpush1.bf16.msra.mxu0 0
        %2217 = vmatprep.subr.bf16.mxu0 0
        %2218 = vmatpush1.bf16.msra.mxu0 0
        %2219 = vmatprep.subr.bf16.mxu0 0
        %2220 = vmatpush1.bf16.msra.mxu0 0
        %2221 = vmatprep.subr.bf16.mxu0 0
        %2222 = vmatpush1.bf16.msra.mxu0 0
        %2223 = vmatprep.subr.bf16.mxu0 0
        %2224 = vmatpush1.bf16.msra.mxu0 0
        %2225 = vmatprep.subr.bf16.mxu0 0
        %2226 = vmatpush1.bf16.msra.mxu0 %v2209
        %2227 = vmatprep.subr.bf16.mxu0 0
        %2228 = vmatpush2.bf16.msra.mxu0 0
        %2229 = vmatprep.subr.bf16.mxu0 0
        %2230 = vmatpush2.bf16.msra.mxu0 0
        %2231 = vmatprep.subr.bf16.mxu0 0
        %2232 = vmatpush2.bf16.msra.mxu0 0
        %2233 = vmatprep.subr.bf16.mxu0 0
        %2234 = vmatpush2.bf16.msra.mxu0 0
        %2235 = vmatprep.subr.bf16.mxu0 0
        %2236 = vmatpush2.bf16.msra.mxu0 0
        %2237 = vmatprep.subr.bf16.mxu0 0
        %2238 = vmatpush2.bf16.msra.mxu0 0
        %2239 = vmatprep.subr.bf16.mxu0 0
        %2240 = vmatpush2.bf16.msra.mxu0 0
        %2241 = vmatprep.subr.bf16.mxu0 0
        %2242 = vmatpush2.bf16.msra.mxu0 0
        %2243 = vmatprep.mubr.bf16.mxu0 0
        %2244 = vmatmul.mubr.bf16.gmra.mxu0 %v2206
        %v2245 = vpop.f32.mrf.mxu0
        %v2246 = vadd.f32 0.0, %v2245
        %v2247 = vpop.f32.mrf.mxu0
        %v2248 = vpop.f32.mrf.mxu0
        %v2249 = vpop.f32.mrf.mxu0
        %2250 = vdwg.mxu0
        %v2251 = vpack.c.bf16 %v2246, %v2200
        %v2253 = vunpack.c.l.b16 %v2251
        %v2254 = vunpack.c.h.b16 %v2251
        %v2255 = vpack.c.b16 %v2253, %v2253
        %v2256 = vpack.c.b16 %v2254, %v2254
        %2257 = vrot.lane.b32.xlu0 %v2255, 64
        %v2258 = vpop.permute.xlu0 %2257
        %2259 = vrot.lane.b32.xlu0 %v2256, 64
        %v2260 = vpop.permute.xlu0 %2259
        %vm2263 = vcmask 781824
        %2264 = vst.msk [vmem:[#allocation2] sm:$0xf] %vm2263, %v2258
        %2265 = vst.msk [vmem:[#allocation2 + $0x4] sm:$0xf] %vm2263, %v2260
        %s2266 = scalar_lea.vmem %s1, 192
        %v2267 = vld [vmem:[%s2266] sm:$0xf]
        %v2268 = vld [vmem:[%s2266 + $0x4] sm:$0xf]
        %v2269 = vld [vmem:[%s2266 + $0x8] sm:$0xf]
        %v2270 = vld [vmem:[%s2266 + $0xc] sm:$0xf]
        %v2271 = vld [vmem:[%s2266 + $0x10] sm:$0xf]
        %v2272 = vld [vmem:[%s2266 + $0x14] sm:$0xf]
        %v2273 = vld [vmem:[%s2266 + $0x18] sm:$0xf]
        %v2274 = vld [vmem:[%s2266 + $0x1c] sm:$0xf]
        %v2275 = vld [vmem:[%s2266 + $0x20] sm:$0xf]
        %v2276 = vld [vmem:[%s2266 + $0x24] sm:$0xf]
        %v2277 = vld [vmem:[%s2266 + $0x28] sm:$0xf]
        %v2278 = vld [vmem:[%s2266 + $0x2c] sm:$0xf]
        %v2279 = vld [vmem:[%s2266 + $0x30] sm:$0xf]
        %v2280 = vld [vmem:[%s2266 + $0x34] sm:$0xf]
        %v2281 = vld [vmem:[%s2266 + $0x38] sm:$0xf]
        %v2282 = vld [vmem:[%s2266 + $0x3c] sm:$0xf]
        %s2283 = scalar_lea.vmem %s2, 3
        %v2284 = vld [vmem:[%s2283] sm:$0x1]
        %v2286 = vlaneseq
        %v2287 = vshrl.u32 %v2286, 7
        %v2288 = vsub.s32 0, %v2287
        %v2289 = vrot.slane %v2284, %v2288
        %v2307 = vunpack.c.l.b16 %v2267
        %v2308 = vunpack.c.l.b16 %v2268
        %v2309 = vunpack.c.l.b16 %v2269
        %v2310 = vunpack.c.l.b16 %v2270
        %v2311 = vunpack.c.l.b16 %v2271
        %v2312 = vunpack.c.l.b16 %v2272
        %v2313 = vunpack.c.l.b16 %v2273
        %v2314 = vunpack.c.l.b16 %v2274
        %v2315 = vunpack.c.l.b16 %v2275
        %v2316 = vunpack.c.l.b16 %v2276
        %v2317 = vunpack.c.l.b16 %v2277
        %v2318 = vunpack.c.l.b16 %v2278
        %v2319 = vunpack.c.l.b16 %v2279
        %v2320 = vunpack.c.l.b16 %v2280
        %v2321 = vunpack.c.l.b16 %v2281
        %v2322 = vunpack.c.l.b16 %v2282
        %v2323 = vpack.c.b16 %v2308, %v2307
        %v2324 = vpack.c.b16 %v2310, %v2309
        %v2325 = vpack.c.b16 %v2312, %v2311
        %v2326 = vpack.c.b16 %v2314, %v2313
        %v2327 = vpack.c.b16 %v2316, %v2315
        %v2328 = vpack.c.b16 %v2318, %v2317
        %v2329 = vpack.c.b16 %v2320, %v2319
        %v2330 = vpack.c.b16 %v2322, %v2321
        %2339 = vmatprep.subr.bf16.mxu0 0
        %2340 = vmatpush1.bf16.msra.mxu0 %v2330
        %2341 = vmatprep.subr.bf16.mxu0 0
        %2342 = vmatpush1.bf16.msra.mxu0 %v2329
        %2343 = vmatprep.subr.bf16.mxu0 0
        %2344 = vmatpush1.bf16.msra.mxu0 %v2328
        %2345 = vmatprep.subr.bf16.mxu0 0
        %2346 = vmatpush1.bf16.msra.mxu0 %v2327
        %2347 = vmatprep.subr.bf16.mxu0 0
        %2348 = vmatpush1.bf16.msra.mxu0 %v2326
        %2349 = vmatprep.subr.bf16.mxu0 0
        %2350 = vmatpush1.bf16.msra.mxu0 %v2325
        %2351 = vmatprep.subr.bf16.mxu0 0
        %2352 = vmatpush1.bf16.msra.mxu0 %v2324
        %2353 = vmatprep.subr.bf16.mxu0 0
        %2354 = vmatpush1.bf16.msra.mxu0 %v2323
        %2355 = vmatprep.subr.bf16.mxu0 0
        %2356 = vmatpush2.bf16.msra.mxu0 0
        %2357 = vmatprep.subr.bf16.mxu0 0
        %2358 = vmatpush2.bf16.msra.mxu0 0
        %2359 = vmatprep.subr.bf16.mxu0 0
        %2360 = vmatpush2.bf16.msra.mxu0 0
        %2361 = vmatprep.subr.bf16.mxu0 0
        %2362 = vmatpush2.bf16.msra.mxu0 0
        %2363 = vmatprep.subr.bf16.mxu0 0
        %2364 = vmatpush2.bf16.msra.mxu0 0
        %2365 = vmatprep.subr.bf16.mxu0 0
        %2366 = vmatpush2.bf16.msra.mxu0 0
        %2367 = vmatprep.subr.bf16.mxu0 0
        %2368 = vmatpush2.bf16.msra.mxu0 0
        %2369 = vmatprep.subr.bf16.mxu0 0
        %2370 = vmatpush2.bf16.msra.mxu0 0
        %2371 = vmatprep.mubr.bf16.mxu0 0
        %2372 = vmatmul.mubr.bf16.gmra.mxu0 %v553
        %v2373 = vpop.f32.mrf.mxu0
        %v2374 = vadd.f32 %v2289, %v2373
        %v2375 = vpop.f32.mrf.mxu0
        %v2376 = vpop.f32.mrf.mxu0
        %v2377 = vadd.f32 %v2289, %v2376
        %v2378 = vpop.f32.mrf.mxu0
        %2379 = vdwg.mxu0
        %s2380 = scalar_lea.vmem %s3, 192
        %v2381 = vld [vmem:[%s2380] sm:$0xf]
        %v2382 = vld [vmem:[%s2380 + $0x4] sm:$0xf]
        %v2383 = vld [vmem:[%s2380 + $0x8] sm:$0xf]
        %v2384 = vld [vmem:[%s2380 + $0xc] sm:$0xf]
        %v2385 = vld [vmem:[%s2380 + $0x10] sm:$0xf]
        %v2386 = vld [vmem:[%s2380 + $0x14] sm:$0xf]
        %v2387 = vld [vmem:[%s2380 + $0x18] sm:$0xf]
        %v2388 = vld [vmem:[%s2380 + $0x1c] sm:$0xf]
        %v2389 = vld [vmem:[%s2380 + $0x20] sm:$0xf]
        %v2390 = vld [vmem:[%s2380 + $0x24] sm:$0xf]
        %v2391 = vld [vmem:[%s2380 + $0x28] sm:$0xf]
        %v2392 = vld [vmem:[%s2380 + $0x2c] sm:$0xf]
        %v2393 = vld [vmem:[%s2380 + $0x30] sm:$0xf]
        %v2394 = vld [vmem:[%s2380 + $0x34] sm:$0xf]
        %v2395 = vld [vmem:[%s2380 + $0x38] sm:$0xf]
        %v2396 = vld [vmem:[%s2380 + $0x3c] sm:$0xf]
        %s2397 = scalar_lea.vmem %s4, 3
        %v2398 = vld [vmem:[%s2397] sm:$0x1]
        %v2400 = vlaneseq
        %v2401 = vshrl.u32 %v2400, 7
        %v2402 = vsub.s32 0, %v2401
        %v2403 = vrot.slane %v2398, %v2402
        %v2421 = vunpack.c.l.b16 %v2381
        %v2422 = vunpack.c.l.b16 %v2382
        %v2423 = vunpack.c.l.b16 %v2383
        %v2424 = vunpack.c.l.b16 %v2384
        %v2425 = vunpack.c.l.b16 %v2385
        %v2426 = vunpack.c.l.b16 %v2386
        %v2427 = vunpack.c.l.b16 %v2387
        %v2428 = vunpack.c.l.b16 %v2388
        %v2429 = vunpack.c.l.b16 %v2389
        %v2430 = vunpack.c.l.b16 %v2390
        %v2431 = vunpack.c.l.b16 %v2391
        %v2432 = vunpack.c.l.b16 %v2392
        %v2433 = vunpack.c.l.b16 %v2393
        %v2434 = vunpack.c.l.b16 %v2394
        %v2435 = vunpack.c.l.b16 %v2395
        %v2436 = vunpack.c.l.b16 %v2396
        %v2437 = vpack.c.b16 %v2422, %v2421
        %v2438 = vpack.c.b16 %v2424, %v2423
        %v2439 = vpack.c.b16 %v2426, %v2425
        %v2440 = vpack.c.b16 %v2428, %v2427
        %v2441 = vpack.c.b16 %v2430, %v2429
        %v2442 = vpack.c.b16 %v2432, %v2431
        %v2443 = vpack.c.b16 %v2434, %v2433
        %v2444 = vpack.c.b16 %v2436, %v2435
        %2453 = vmatprep.subr.bf16.mxu0 0
        %2454 = vmatpush1.bf16.msra.mxu0 %v2444
        %2455 = vmatprep.subr.bf16.mxu0 0
        %2456 = vmatpush1.bf16.msra.mxu0 %v2443
        %2457 = vmatprep.subr.bf16.mxu0 0
        %2458 = vmatpush1.bf16.msra.mxu0 %v2442
        %2459 = vmatprep.subr.bf16.mxu0 0
        %2460 = vmatpush1.bf16.msra.mxu0 %v2441
        %2461 = vmatprep.subr.bf16.mxu0 0
        %2462 = vmatpush1.bf16.msra.mxu0 %v2440
        %2463 = vmatprep.subr.bf16.mxu0 0
        %2464 = vmatpush1.bf16.msra.mxu0 %v2439
        %2465 = vmatprep.subr.bf16.mxu0 0
        %2466 = vmatpush1.bf16.msra.mxu0 %v2438
        %2467 = vmatprep.subr.bf16.mxu0 0
        %2468 = vmatpush1.bf16.msra.mxu0 %v2437
        %2469 = vmatprep.subr.bf16.mxu0 0
        %2470 = vmatpush2.bf16.msra.mxu0 0
        %2471 = vmatprep.subr.bf16.mxu0 0
        %2472 = vmatpush2.bf16.msra.mxu0 0
        %2473 = vmatprep.subr.bf16.mxu0 0
        %2474 = vmatpush2.bf16.msra.mxu0 0
        %2475 = vmatprep.subr.bf16.mxu0 0
        %2476 = vmatpush2.bf16.msra.mxu0 0
        %2477 = vmatprep.subr.bf16.mxu0 0
        %2478 = vmatpush2.bf16.msra.mxu0 0
        %2479 = vmatprep.subr.bf16.mxu0 0
        %2480 = vmatpush2.bf16.msra.mxu0 0
        %2481 = vmatprep.subr.bf16.mxu0 0
        %2482 = vmatpush2.bf16.msra.mxu0 0
        %2483 = vmatprep.subr.bf16.mxu0 0
        %2484 = vmatpush2.bf16.msra.mxu0 0
        %2485 = vmatprep.mubr.bf16.mxu0 0
        %2486 = vmatmul.mubr.bf16.gmra.mxu0 %v553
        %v2487 = vpop.f32.mrf.mxu0
        %v2488 = vadd.f32 %v2403, %v2487
        %v2489 = vpop.f32.mrf.mxu0
        %v2490 = vpop.f32.mrf.mxu0
        %v2491 = vadd.f32 %v2403, %v2490
        %v2492 = vpop.f32.mrf.mxu0
        %2493 = vdwg.mxu0
        %s2494 = scalar_lea.vmem %s5, 192
        %v2495 = vld [vmem:[%s2494] sm:$0xf]
        %v2496 = vld [vmem:[%s2494 + $0x4] sm:$0xf]
        %v2497 = vld [vmem:[%s2494 + $0x8] sm:$0xf]
        %v2498 = vld [vmem:[%s2494 + $0xc] sm:$0xf]
        %v2499 = vld [vmem:[%s2494 + $0x10] sm:$0xf]
        %v2500 = vld [vmem:[%s2494 + $0x14] sm:$0xf]
        %v2501 = vld [vmem:[%s2494 + $0x18] sm:$0xf]
        %v2502 = vld [vmem:[%s2494 + $0x1c] sm:$0xf]
        %v2503 = vld [vmem:[%s2494 + $0x20] sm:$0xf]
        %v2504 = vld [vmem:[%s2494 + $0x24] sm:$0xf]
        %v2505 = vld [vmem:[%s2494 + $0x28] sm:$0xf]
        %v2506 = vld [vmem:[%s2494 + $0x2c] sm:$0xf]
        %v2507 = vld [vmem:[%s2494 + $0x30] sm:$0xf]
        %v2508 = vld [vmem:[%s2494 + $0x34] sm:$0xf]
        %v2509 = vld [vmem:[%s2494 + $0x38] sm:$0xf]
        %v2510 = vld [vmem:[%s2494 + $0x3c] sm:$0xf]
        %s2511 = scalar_lea.vmem %s6, 3
        %v2512 = vld [vmem:[%s2511] sm:$0x1]
        %v2514 = vlaneseq
        %v2515 = vshrl.u32 %v2514, 7
        %v2516 = vsub.s32 0, %v2515
        %v2517 = vrot.slane %v2512, %v2516
        %v2535 = vunpack.c.l.b16 %v2495
        %v2536 = vunpack.c.l.b16 %v2496
        %v2537 = vunpack.c.l.b16 %v2497
        %v2538 = vunpack.c.l.b16 %v2498
        %v2539 = vunpack.c.l.b16 %v2499
        %v2540 = vunpack.c.l.b16 %v2500
        %v2541 = vunpack.c.l.b16 %v2501
        %v2542 = vunpack.c.l.b16 %v2502
        %v2543 = vunpack.c.l.b16 %v2503
        %v2544 = vunpack.c.l.b16 %v2504
        %v2545 = vunpack.c.l.b16 %v2505
        %v2546 = vunpack.c.l.b16 %v2506
        %v2547 = vunpack.c.l.b16 %v2507
        %v2548 = vunpack.c.l.b16 %v2508
        %v2549 = vunpack.c.l.b16 %v2509
        %v2550 = vunpack.c.l.b16 %v2510
        %v2551 = vpack.c.b16 %v2536, %v2535
        %v2552 = vpack.c.b16 %v2538, %v2537
        %v2553 = vpack.c.b16 %v2540, %v2539
        %v2554 = vpack.c.b16 %v2542, %v2541
        %v2555 = vpack.c.b16 %v2544, %v2543
        %v2556 = vpack.c.b16 %v2546, %v2545
        %v2557 = vpack.c.b16 %v2548, %v2547
        %v2558 = vpack.c.b16 %v2550, %v2549
        %2567 = vmatprep.subr.bf16.mxu0 0
        %2568 = vmatpush1.bf16.msra.mxu0 %v2558
        %2569 = vmatprep.subr.bf16.mxu0 0
        %2570 = vmatpush1.bf16.msra.mxu0 %v2557
        %2571 = vmatprep.subr.bf16.mxu0 0
        %2572 = vmatpush1.bf16.msra.mxu0 %v2556
        %2573 = vmatprep.subr.bf16.mxu0 0
        %2574 = vmatpush1.bf16.msra.mxu0 %v2555
        %2575 = vmatprep.subr.bf16.mxu0 0
        %2576 = vmatpush1.bf16.msra.mxu0 %v2554
        %2577 = vmatprep.subr.bf16.mxu0 0
        %2578 = vmatpush1.bf16.msra.mxu0 %v2553
        %2579 = vmatprep.subr.bf16.mxu0 0
        %2580 = vmatpush1.bf16.msra.mxu0 %v2552
        %2581 = vmatprep.subr.bf16.mxu0 0
        %2582 = vmatpush1.bf16.msra.mxu0 %v2551
        %2583 = vmatprep.subr.bf16.mxu0 0
        %2584 = vmatpush2.bf16.msra.mxu0 0
        %2585 = vmatprep.subr.bf16.mxu0 0
        %2586 = vmatpush2.bf16.msra.mxu0 0
        %2587 = vmatprep.subr.bf16.mxu0 0
        %2588 = vmatpush2.bf16.msra.mxu0 0
        %2589 = vmatprep.subr.bf16.mxu0 0
        %2590 = vmatpush2.bf16.msra.mxu0 0
        %2591 = vmatprep.subr.bf16.mxu0 0
        %2592 = vmatpush2.bf16.msra.mxu0 0
        %2593 = vmatprep.subr.bf16.mxu0 0
        %2594 = vmatpush2.bf16.msra.mxu0 0
        %2595 = vmatprep.subr.bf16.mxu0 0
        %2596 = vmatpush2.bf16.msra.mxu0 0
        %2597 = vmatprep.subr.bf16.mxu0 0
        %2598 = vmatpush2.bf16.msra.mxu0 0
        %2599 = vmatprep.mubr.bf16.mxu0 0
        %2600 = vmatmul.mubr.bf16.gmra.mxu0 %v553
        %v2601 = vpop.f32.mrf.mxu0
        %v2602 = vadd.f32 %v2517, %v2601
        %v2603 = vpop.f32.mrf.mxu0
        %v2604 = vpop.f32.mrf.mxu0
        %v2605 = vadd.f32 %v2517, %v2604
        %v2606 = vpop.f32.mrf.mxu0
        %2607 = vdwg.mxu0
        %v2608 = vpack.c.bf16 %v2374, %v2374
        %v2609 = vpack.c.bf16 %v2377, %v2377
        %v2610 = vpack.c.bf16 %v2488, %v2488
        %v2611 = vpack.c.bf16 %v2491, %v2491
        %v2612 = vpack.c.bf16 %v2602, %v2602
        %v2613 = vpack.c.bf16 %v2605, %v2605
        %v2615 = vsel %vm896, %v2608, 0
        %v2618 = vsel %vm896, %v2610, 0
        %2620 = vmatprep.subr.bf16.mxu0 0
        %2621 = vmatpush1.bf16.xpose.msra.mxu0 0
        %2622 = vmatprep.subr.bf16.mxu0 0
        %2623 = vmatpush1.bf16.xpose.msra.mxu0 0
        %2624 = vmatprep.subr.bf16.mxu0 0
        %2625 = vmatpush1.bf16.xpose.msra.mxu0 0
        %2626 = vmatprep.subr.bf16.mxu0 0
        %2627 = vmatpush1.bf16.xpose.msra.mxu0 0
        %2628 = vmatprep.subr.bf16.mxu0 0
        %2629 = vmatpush1.bf16.xpose.msra.mxu0 0
        %2630 = vmatprep.subr.bf16.mxu0 0
        %2631 = vmatpush1.bf16.xpose.msra.mxu0 0
        %2632 = vmatprep.subr.bf16.mxu0 0
        %2633 = vmatpush1.bf16.xpose.msra.mxu0 0
        %2634 = vmatprep.subr.bf16.mxu0 0
        %2635 = vmatpush1.bf16.xpose.msra.mxu0 %v2618
        %2636 = vmatprep.subr.bf16.mxu0 0
        %2637 = vmatpush2.bf16.xpose.msra.mxu0 0
        %2638 = vmatprep.subr.bf16.mxu0 0
        %2639 = vmatpush2.bf16.xpose.msra.mxu0 0
        %2640 = vmatprep.subr.bf16.mxu0 0
        %2641 = vmatpush2.bf16.xpose.msra.mxu0 0
        %2642 = vmatprep.subr.bf16.mxu0 0
        %2643 = vmatpush2.bf16.xpose.msra.mxu0 0
        %2644 = vmatprep.subr.bf16.mxu0 0
        %2645 = vmatpush2.bf16.xpose.msra.mxu0 0
        %2646 = vmatprep.subr.bf16.mxu0 0
        %2647 = vmatpush2.bf16.xpose.msra.mxu0 0
        %2648 = vmatprep.subr.bf16.mxu0 0
        %2649 = vmatpush2.bf16.xpose.msra.mxu0 0
        %2650 = vmatprep.subr.bf16.mxu0 0
        %2651 = vmatpush2.bf16.xpose.msra.mxu0 0
        %2652 = vmatprep.mubr.bf16.mxu0 0
        %2653 = vmatmul.mubr.bf16.gmra.mxu0 %v2615
        %v2654 = vpop.f32.mrf.mxu0
        %v2655 = vadd.f32 0.0, %v2654
        %v2656 = vpop.f32.mrf.mxu0
        %v2657 = vpop.f32.mrf.mxu0
        %v2658 = vpop.f32.mrf.mxu0
        %2659 = vdwg.mxu0
        %v2661 = vsel %vm896, %v2609, 0
        %v2664 = vsel %vm896, %v2611, 0
        %2666 = vmatprep.subr.bf16.mxu0 0
        %2667 = vmatpush1.bf16.xpose.msra.mxu0 0
        %2668 = vmatprep.subr.bf16.mxu0 0
        %2669 = vmatpush1.bf16.xpose.msra.mxu0 0
        %2670 = vmatprep.subr.bf16.mxu0 0
        %2671 = vmatpush1.bf16.xpose.msra.mxu0 0
        %2672 = vmatprep.subr.bf16.mxu0 0
        %2673 = vmatpush1.bf16.xpose.msra.mxu0 0
        %2674 = vmatprep.subr.bf16.mxu0 0
        %2675 = vmatpush1.bf16.xpose.msra.mxu0 0
        %2676 = vmatprep.subr.bf16.mxu0 0
        %2677 = vmatpush1.bf16.xpose.msra.mxu0 0
        %2678 = vmatprep.subr.bf16.mxu0 0
        %2679 = vmatpush1.bf16.xpose.msra.mxu0 0
        %2680 = vmatprep.subr.bf16.mxu0 0
        %2681 = vmatpush1.bf16.xpose.msra.mxu0 %v2664
        %2682 = vmatprep.subr.bf16.mxu0 0
        %2683 = vmatpush2.bf16.xpose.msra.mxu0 0
        %2684 = vmatprep.subr.bf16.mxu0 0
        %2685 = vmatpush2.bf16.xpose.msra.mxu0 0
        %2686 = vmatprep.subr.bf16.mxu0 0
        %2687 = vmatpush2.bf16.xpose.msra.mxu0 0
        %2688 = vmatprep.subr.bf16.mxu0 0
        %2689 = vmatpush2.bf16.xpose.msra.mxu0 0
        %2690 = vmatprep.subr.bf16.mxu0 0
        %2691 = vmatpush2.bf16.xpose.msra.mxu0 0
        %2692 = vmatprep.subr.bf16.mxu0 0
        %2693 = vmatpush2.bf16.xpose.msra.mxu0 0
        %2694 = vmatprep.subr.bf16.mxu0 0
        %2695 = vmatpush2.bf16.xpose.msra.mxu0 0
        %2696 = vmatprep.subr.bf16.mxu0 0
        %2697 = vmatpush2.bf16.xpose.msra.mxu0 0
        %2698 = vmatprep.mubr.bf16.mxu0 0
        %2699 = vmatmul.mubr.bf16.gmra.mxu0 %v2661
        %v2700 = vpop.f32.mrf.mxu0
        %v2701 = vadd.f32 0.0, %v2700
        %v2702 = vpop.f32.mrf.mxu0
        %v2703 = vpop.f32.mrf.mxu0
        %v2704 = vpop.f32.mrf.mxu0
        %2705 = vdwg.mxu0
        %v2706 = vmul.f32 %v2655, 0.17677669
        %v2707 = vmul.f32 %v2701, 0.17677669
        %v2708 = vsel %vm991, %v2706, -inf
        %2709 = vmax.xlane.f32.xlu0 %v2708
        %v2710 = vpop.xlane.xlu0 %2709
        %v2711 = vsel %vm991, %v2707, -inf
        %2712 = vmax.xlane.f32.xlu0 %v2711
        %v2713 = vpop.xlane.xlu0 %2712
        %v2714 = vsub.f32 %v2706, %v2710
        %v2715 = vsub.f32 %v2707, %v2713
        %v2716 = vmul.f32 %v2714, 1.442695
        %v2717 = vpow.pop %v2716
        %v2718 = vmul.f32 %v2715, 1.442695
        %v2719 = vpow.pop %v2718
        %v2720 = vsel %vm991, %v2717, 0.0
        %2721 = vadd.xlane.f32.xlu0 %v2720
        %v2722 = vpop.xlane.xlu0 %2721
        %v2723 = vsel %vm991, %v2719, 0.0
        %2724 = vadd.xlane.f32.xlu0 %v2723
        %v2725 = vpop.xlane.xlu0 %2724
        %v2726 = vrcp.pop %v2722
        %v2727 = vrcp.pop %v2725
        %v2728 = vmul.f32 %v2717, %v2726
        %v2729 = vmul.f32 %v2719, %v2727
        %v2730 = vpack.c.bf16 %v2728, %v2728
        %v2731 = vpack.c.bf16 %v2729, %v2729
        %v2733 = vsel %vm991, %v2730, 0
        %v2736 = vsel %vm1019, %v2612, 0
        %2738 = vmatprep.subr.bf16.mxu0 0
        %2739 = vmatpush1.bf16.msra.mxu0 0
        %2740 = vmatprep.subr.bf16.mxu0 0
        %2741 = vmatpush1.bf16.msra.mxu0 0
        %2742 = vmatprep.subr.bf16.mxu0 0
        %2743 = vmatpush1.bf16.msra.mxu0 0
        %2744 = vmatprep.subr.bf16.mxu0 0
        %2745 = vmatpush1.bf16.msra.mxu0 0
        %2746 = vmatprep.subr.bf16.mxu0 0
        %2747 = vmatpush1.bf16.msra.mxu0 0
        %2748 = vmatprep.subr.bf16.mxu0 0
        %2749 = vmatpush1.bf16.msra.mxu0 0
        %2750 = vmatprep.subr.bf16.mxu0 0
        %2751 = vmatpush1.bf16.msra.mxu0 0
        %2752 = vmatprep.subr.bf16.mxu0 0
        %2753 = vmatpush1.bf16.msra.mxu0 %v2736
        %2754 = vmatprep.subr.bf16.mxu0 0
        %2755 = vmatpush2.bf16.msra.mxu0 0
        %2756 = vmatprep.subr.bf16.mxu0 0
        %2757 = vmatpush2.bf16.msra.mxu0 0
        %2758 = vmatprep.subr.bf16.mxu0 0
        %2759 = vmatpush2.bf16.msra.mxu0 0
        %2760 = vmatprep.subr.bf16.mxu0 0
        %2761 = vmatpush2.bf16.msra.mxu0 0
        %2762 = vmatprep.subr.bf16.mxu0 0
        %2763 = vmatpush2.bf16.msra.mxu0 0
        %2764 = vmatprep.subr.bf16.mxu0 0
        %2765 = vmatpush2.bf16.msra.mxu0 0
        %2766 = vmatprep.subr.bf16.mxu0 0
        %2767 = vmatpush2.bf16.msra.mxu0 0
        %2768 = vmatprep.subr.bf16.mxu0 0
        %2769 = vmatpush2.bf16.msra.mxu0 0
        %2770 = vmatprep.mubr.bf16.mxu0 0
        %2771 = vmatmul.mubr.bf16.gmra.mxu0 %v2733
        %v2772 = vpop.f32.mrf.mxu0
        %v2773 = vadd.f32 0.0, %v2772
        %v2774 = vpop.f32.mrf.mxu0
        %v2775 = vpop.f32.mrf.mxu0
        %v2776 = vpop.f32.mrf.mxu0
        %2777 = vdwg.mxu0
        %v2779 = vsel %vm991, %v2731, 0
        %v2782 = vsel %vm1019, %v2613, 0
        %2784 = vmatprep.subr.bf16.mxu0 0
        %2785 = vmatpush1.bf16.msra.mxu0 0
        %2786 = vmatprep.subr.bf16.mxu0 0
        %2787 = vmatpush1.bf16.msra.mxu0 0
        %2788 = vmatprep.subr.bf16.mxu0 0
        %2789 = vmatpush1.bf16.msra.mxu0 0
        %2790 = vmatprep.subr.bf16.mxu0 0
        %2791 = vmatpush1.bf16.msra.mxu0 0
        %2792 = vmatprep.subr.bf16.mxu0 0
        %2793 = vmatpush1.bf16.msra.mxu0 0
        %2794 = vmatprep.subr.bf16.mxu0 0
        %2795 = vmatpush1.bf16.msra.mxu0 0
        %2796 = vmatprep.subr.bf16.mxu0 0
        %2797 = vmatpush1.bf16.msra.mxu0 0
        %2798 = vmatprep.subr.bf16.mxu0 0
        %2799 = vmatpush1.bf16.msra.mxu0 %v2782
        %2800 = vmatprep.subr.bf16.mxu0 0
        %2801 = vmatpush2.bf16.msra.mxu0 0
        %2802 = vmatprep.subr.bf16.mxu0 0
        %2803 = vmatpush2.bf16.msra.mxu0 0
        %2804 = vmatprep.subr.bf16.mxu0 0
        %2805 = vmatpush2.bf16.msra.mxu0 0
        %2806 = vmatprep.subr.bf16.mxu0 0
        %2807 = vmatpush2.bf16.msra.mxu0 0
        %2808 = vmatprep.subr.bf16.mxu0 0
        %2809 = vmatpush2.bf16.msra.mxu0 0
        %2810 = vmatprep.subr.bf16.mxu0 0
        %2811 = vmatpush2.bf16.msra.mxu0 0
        %2812 = vmatprep.subr.bf16.mxu0 0
        %2813 = vmatpush2.bf16.msra.mxu0 0
        %2814 = vmatprep.subr.bf16.mxu0 0
        %2815 = vmatpush2.bf16.msra.mxu0 0
        %2816 = vmatprep.mubr.bf16.mxu0 0
        %2817 = vmatmul.mubr.bf16.gmra.mxu0 %v2779
        %v2818 = vpop.f32.mrf.mxu0
        %v2819 = vadd.f32 0.0, %v2818
        %v2820 = vpop.f32.mrf.mxu0
        %v2821 = vpop.f32.mrf.mxu0
        %v2822 = vpop.f32.mrf.mxu0
        %2823 = vdwg.mxu0
        %v2824 = vpack.c.bf16 %v2819, %v2773
        %v2826 = vunpack.c.l.b16 %v2824
        %v2827 = vunpack.c.h.b16 %v2824
        %v2828 = vpack.c.b16 %v2826, %v2826
        %v2829 = vpack.c.b16 %v2827, %v2827
        %2830 = vrot.lane.b32.xlu0 %v2828, 96
        %v2831 = vpop.permute.xlu0 %2830
        %2832 = vrot.lane.b32.xlu0 %v2829, 96
        %v2833 = vpop.permute.xlu0 %2832
        %vm2836 = vcmask 1044224
        %2837 = vst.msk [vmem:[#allocation2] sm:$0xf] %vm2836, %v2831
        %2838 = vst.msk [vmem:[#allocation2 + $0x4] sm:$0xf] %vm2836, %v2833
        %v2839 = vld [vmem:[#allocation2] sm:$0xf]
        %v2840 = vld [vmem:[#allocation2 + $0x4] sm:$0xf]
        %v2841 = vld [vmem:[%s7] sm:$0xf]
        %v2842 = vld [vmem:[%s7 + $0x4] sm:$0xf]
        %v2843 = vld [vmem:[%s7 + $0x8] sm:$0xf]
        %v2844 = vld [vmem:[%s7 + $0xc] sm:$0xf]
        %v2845 = vld [vmem:[%s7 + $0x10] sm:$0xf]
        %v2846 = vld [vmem:[%s7 + $0x14] sm:$0xf]
        %v2847 = vld [vmem:[%s7 + $0x18] sm:$0xf]
        %v2848 = vld [vmem:[%s7 + $0x1c] sm:$0xf]
        %v2849 = vld [vmem:[%s7 + $0x20] sm:$0xf]
        %v2850 = vld [vmem:[%s7 + $0x24] sm:$0xf]
        %v2851 = vld [vmem:[%s7 + $0x28] sm:$0xf]
        %v2852 = vld [vmem:[%s7 + $0x2c] sm:$0xf]
        %v2853 = vld [vmem:[%s7 + $0x30] sm:$0xf]
        %v2854 = vld [vmem:[%s7 + $0x34] sm:$0xf]
        %v2855 = vld [vmem:[%s7 + $0x38] sm:$0xf]
        %v2856 = vld [vmem:[%s7 + $0x3c] sm:$0xf]
        %v2857 = vld [vmem:[%s8] sm:$0x1]
        %v2859 = vlaneseq
        %v2860 = vshrl.u32 %v2859, 7
        %v2861 = vsub.s32 0, %v2860
        %v2862 = vrot.slane %v2857, %v2861
        %v2866 = vunpack.c.l.b16 %v2839
        %v2867 = vunpack.c.l.b16 %v2840
        %v2868 = vpack.c.b16 %v2867, %v2866
        %v2886 = vunpack.c.l.b16 %v2841
        %v2887 = vunpack.c.l.b16 %v2842
        %v2888 = vunpack.c.l.b16 %v2843
        %v2889 = vunpack.c.l.b16 %v2844
        %v2890 = vunpack.c.l.b16 %v2845
        %v2891 = vunpack.c.l.b16 %v2846
        %v2892 = vunpack.c.l.b16 %v2847
        %v2893 = vunpack.c.l.b16 %v2848
        %v2894 = vunpack.c.l.b16 %v2849
        %v2895 = vunpack.c.l.b16 %v2850
        %v2896 = vunpack.c.l.b16 %v2851
        %v2897 = vunpack.c.l.b16 %v2852
        %v2898 = vunpack.c.l.b16 %v2853
        %v2899 = vunpack.c.l.b16 %v2854
        %v2900 = vunpack.c.l.b16 %v2855
        %v2901 = vunpack.c.l.b16 %v2856
        %v2902 = vpack.c.b16 %v2887, %v2886
        %v2903 = vpack.c.b16 %v2889, %v2888
        %v2904 = vpack.c.b16 %v2891, %v2890
        %v2905 = vpack.c.b16 %v2893, %v2892
        %v2906 = vpack.c.b16 %v2895, %v2894
        %v2907 = vpack.c.b16 %v2897, %v2896
        %v2908 = vpack.c.b16 %v2899, %v2898
        %v2909 = vpack.c.b16 %v2901, %v2900
        %2918 = vmatprep.subr.bf16.mxu0 0
        %2919 = vmatpush1.bf16.msra.mxu0 %v2909
        %2920 = vmatprep.subr.bf16.mxu0 0
        %2921 = vmatpush1.bf16.msra.mxu0 %v2908
        %2922 = vmatprep.subr.bf16.mxu0 0
        %2923 = vmatpush1.bf16.msra.mxu0 %v2907
        %2924 = vmatprep.subr.bf16.mxu0 0
        %2925 = vmatpush1.bf16.msra.mxu0 %v2906
        %2926 = vmatprep.subr.bf16.mxu0 0
        %2927 = vmatpush1.bf16.msra.mxu0 %v2905
        %2928 = vmatprep.subr.bf16.mxu0 0
        %2929 = vmatpush1.bf16.msra.mxu0 %v2904
        %2930 = vmatprep.subr.bf16.mxu0 0
        %2931 = vmatpush1.bf16.msra.mxu0 %v2903
        %2932 = vmatprep.subr.bf16.mxu0 0
        %2933 = vmatpush1.bf16.msra.mxu0 %v2902
        %2934 = vmatprep.subr.bf16.mxu0 0
        %2935 = vmatpush2.bf16.msra.mxu0 0
        %2936 = vmatprep.subr.bf16.mxu0 0
        %2937 = vmatpush2.bf16.msra.mxu0 0
        %2938 = vmatprep.subr.bf16.mxu0 0
        %2939 = vmatpush2.bf16.msra.mxu0 0
        %2940 = vmatprep.subr.bf16.mxu0 0
        %2941 = vmatpush2.bf16.msra.mxu0 0
        %2942 = vmatprep.subr.bf16.mxu0 0
        %2943 = vmatpush2.bf16.msra.mxu0 0
        %2944 = vmatprep.subr.bf16.mxu0 0
        %2945 = vmatpush2.bf16.msra.mxu0 0
        %2946 = vmatprep.subr.bf16.mxu0 0
        %2947 = vmatpush2.bf16.msra.mxu0 0
        %2948 = vmatprep.subr.bf16.mxu0 0
        %2949 = vmatpush2.bf16.msra.mxu0 0
        %2950 = vmatprep.mubr.bf16.mxu0 0
        %2951 = vmatmul.mubr.bf16.gmra.mxu0 %v2868
        %v2952 = vpop.f32.mrf.mxu0
        %v2953 = vadd.f32 %v2862, %v2952
        %v2954 = vpop.f32.mrf.mxu0
        %v2955 = vpop.f32.mrf.mxu0
        %v2956 = vadd.f32 %v2862, %v2955
        %v2957 = vpop.f32.mrf.mxu0
        %2958 = vdwg.mxu0
        %v2959 = vadd.f32 %v551, %v2953
        %v2960 = vadd.f32 %v552, %v2956
        %2961 = vadd.xlane.f32.xlu0 %v2959
        %v2962 = vpop.xlane.xlu0 %2961
        %2963 = vadd.xlane.f32.xlu0 %v2960
        %v2964 = vpop.xlane.xlu0 %2963
        %v2965 = vrcp.pop 128.0
        %v2966 = vmul.f32 %v2962, %v2965
        %v2967 = vmul.f32 %v2964, %v2965
        %v2968 = vsub.f32 %v2959, %v2966
        %v2969 = vsub.f32 %v2960, %v2967
        %v2970 = vmul.f32 %v2968, %v2968
        %v2971 = vmul.f32 %v2969, %v2969
        %2972 = vadd.xlane.f32.xlu0 %v2970
        %v2973 = vpop.xlane.xlu0 %2972
        %2974 = vadd.xlane.f32.xlu0 %v2971
        %v2975 = vpop.xlane.xlu0 %2974
        %v2976 = vmul.f32 %v2973, %v2965
        %v2977 = vmul.f32 %v2975, %v2965
        %v2978 = vadd.f32 %v2976, 1e-05
        %v2979 = vadd.f32 %v2977, 1e-05
        %v2980 = vrsqrt.pop %v2978
        %v2981 = vrsqrt.pop %v2979
        %v2982 = vmul.f32 %v2968, %v2980
        %v2983 = vmul.f32 %v2969, %v2981
        %v2984 = vld [vmem:[%s9] sm:$0x1]
        %v2986 = vlaneseq
        %v2987 = vshrl.u32 %v2986, 7
        %v2988 = vsub.s32 0, %v2987
        %v2989 = vrot.slane %v2984, %v2988
        %v2991 = vmul.f32 %v2982, %v2989
        %v2992 = vmul.f32 %v2983, %v2989
        %v2993 = vld [vmem:[%s10] sm:$0x1]
        %v2995 = vlaneseq
        %v2996 = vshrl.u32 %v2995, 7
        %v2997 = vsub.s32 0, %v2996
        %v2998 = vrot.slane %v2993, %v2997
        %v3000 = vadd.f32 %v2991, %v2998
        %v3001 = vadd.f32 %v2992, %v2998
        %v3002 = vpack.c.bf16 %v3001, %v3000
        %v3003 = vld [vmem:[%s11] sm:$0xff]
        %v3004 = vld [vmem:[%s11 + $0x8] sm:$0xff]
        %v3005 = vld [vmem:[%s11 + $0x10] sm:$0xff]
        %v3006 = vld [vmem:[%s11 + $0x18] sm:$0xff]
        %v3007 = vld [vmem:[%s11 + $0x20] sm:$0xff]
        %v3008 = vld [vmem:[%s11 + $0x28] sm:$0xff]
        %v3009 = vld [vmem:[%s11 + $0x30] sm:$0xff]
        %v3010 = vld [vmem:[%s11 + $0x38] sm:$0xff]
        %v3011 = vld [vmem:[%s11 + $0x40] sm:$0xff]
        %v3012 = vld [vmem:[%s11 + $0x48] sm:$0xff]
        %v3013 = vld [vmem:[%s11 + $0x50] sm:$0xff]
        %v3014 = vld [vmem:[%s11 + $0x58] sm:$0xff]
        %v3015 = vld [vmem:[%s11 + $0x60] sm:$0xff]
        %v3016 = vld [vmem:[%s11 + $0x68] sm:$0xff]
        %v3017 = vld [vmem:[%s11 + $0x70] sm:$0xff]
        %v3018 = vld [vmem:[%s11 + $0x78] sm:$0xff]
        %v3019 = vld [vmem:[%s12] sm:$0x3]
        %v3021 = vlaneseq
        %v3022 = vshrl.u32 %v3021, 7
        %v3023 = vsub.s32 0, %v3022
        %v3024 = vrot.slane %v3019, %v3023
        %v3025 = vlaneseq
        %v3026 = vshrl.u32 %v3025, 7
        %v3027 = vsub.s32 1, %v3026
        %v3028 = vrot.slane %v3019, %v3027
        %v3047 = vunpack.c.l.b16 %v3003
        %v3048 = vunpack.c.h.b16 %v3003
        %v3049 = vunpack.c.l.b16 %v3004
        %v3050 = vunpack.c.h.b16 %v3004
        %v3051 = vunpack.c.l.b16 %v3005
        %v3052 = vunpack.c.h.b16 %v3005
        %v3053 = vunpack.c.l.b16 %v3006
        %v3054 = vunpack.c.h.b16 %v3006
        %v3055 = vunpack.c.l.b16 %v3007
        %v3056 = vunpack.c.h.b16 %v3007
        %v3057 = vunpack.c.l.b16 %v3008
        %v3058 = vunpack.c.h.b16 %v3008
        %v3059 = vunpack.c.l.b16 %v3009
        %v3060 = vunpack.c.h.b16 %v3009
        %v3061 = vunpack.c.l.b16 %v3010
        %v3062 = vunpack.c.h.b16 %v3010
        %v3063 = vunpack.c.l.b16 %v3011
        %v3064 = vunpack.c.h.b16 %v3011
        %v3065 = vunpack.c.l.b16 %v3012
        %v3066 = vunpack.c.h.b16 %v3012
        %v3067 = vunpack.c.l.b16 %v3013
        %v3068 = vunpack.c.h.b16 %v3013
        %v3069 = vunpack.c.l.b16 %v3014
        %v3070 = vunpack.c.h.b16 %v3014
        %v3071 = vunpack.c.l.b16 %v3015
        %v3072 = vunpack.c.h.b16 %v3015
        %v3073 = vunpack.c.l.b16 %v3016
        %v3074 = vunpack.c.h.b16 %v3016
        %v3075 = vunpack.c.l.b16 %v3017
        %v3076 = vunpack.c.h.b16 %v3017
        %v3077 = vunpack.c.l.b16 %v3018
        %v3078 = vunpack.c.h.b16 %v3018
        %v3079 = vpack.c.b16 %v3049, %v3047
        %v3080 = vpack.c.b16 %v3050, %v3048
        %v3081 = vpack.c.b16 %v3053, %v3051
        %v3082 = vpack.c.b16 %v3054, %v3052
        %v3083 = vpack.c.b16 %v3057, %v3055
        %v3084 = vpack.c.b16 %v3058, %v3056
        %v3085 = vpack.c.b16 %v3061, %v3059
        %v3086 = vpack.c.b16 %v3062, %v3060
        %v3087 = vpack.c.b16 %v3065, %v3063
        %v3088 = vpack.c.b16 %v3066, %v3064
        %v3089 = vpack.c.b16 %v3069, %v3067
        %v3090 = vpack.c.b16 %v3070, %v3068
        %v3091 = vpack.c.b16 %v3073, %v3071
        %v3092 = vpack.c.b16 %v3074, %v3072
        %v3093 = vpack.c.b16 %v3077, %v3075
        %v3094 = vpack.c.b16 %v3078, %v3076
        %3111 = vmatprep.subr.bf16.mxu0 %v3094
        %3112 = vmatpush1.bf16.msra.mxu0 %v3093
        %3113 = vmatprep.subr.bf16.mxu0 %v3092
        %3114 = vmatpush1.bf16.msra.mxu0 %v3091
        %3115 = vmatprep.subr.bf16.mxu0 %v3090
        %3116 = vmatpush1.bf16.msra.mxu0 %v3089
        %3117 = vmatprep.subr.bf16.mxu0 %v3088
        %3118 = vmatpush1.bf16.msra.mxu0 %v3087
        %3119 = vmatprep.subr.bf16.mxu0 %v3086
        %3120 = vmatpush1.bf16.msra.mxu0 %v3085
        %3121 = vmatprep.subr.bf16.mxu0 %v3084
        %3122 = vmatpush1.bf16.msra.mxu0 %v3083
        %3123 = vmatprep.subr.bf16.mxu0 %v3082
        %3124 = vmatpush1.bf16.msra.mxu0 %v3081
        %3125 = vmatprep.subr.bf16.mxu0 %v3080
        %3126 = vmatpush1.bf16.msra.mxu0 %v3079
        %3127 = vmatprep.subr.bf16.mxu0 0
        %3128 = vmatpush2.bf16.msra.mxu0 0
        %3129 = vmatprep.subr.bf16.mxu0 0
        %3130 = vmatpush2.bf16.msra.mxu0 0
        %3131 = vmatprep.subr.bf16.mxu0 0
        %3132 = vmatpush2.bf16.msra.mxu0 0
        %3133 = vmatprep.subr.bf16.mxu0 0
        %3134 = vmatpush2.bf16.msra.mxu0 0
        %3135 = vmatprep.subr.bf16.mxu0 0
        %3136 = vmatpush2.bf16.msra.mxu0 0
        %3137 = vmatprep.subr.bf16.mxu0 0
        %3138 = vmatpush2.bf16.msra.mxu0 0
        %3139 = vmatprep.subr.bf16.mxu0 0
        %3140 = vmatpush2.bf16.msra.mxu0 0
        %3141 = vmatprep.subr.bf16.mxu0 0
        %3142 = vmatpush2.bf16.msra.mxu0 0
        %3143 = vmatprep.mubr.bf16.mxu0 0
        %3144 = vmatmul.mubr.bf16.gmra.mxu0 %v3002
        %v3145 = vpop.f32.mrf.mxu0
        %v3146 = vadd.f32 %v3024, %v3145
        %v3147 = vpop.f32.mrf.mxu0
        %v3148 = vadd.f32 %v3028, %v3147
        %v3149 = vpop.f32.mrf.mxu0
        %v3150 = vadd.f32 %v3024, %v3149
        %v3151 = vpop.f32.mrf.mxu0
        %v3152 = vadd.f32 %v3028, %v3151
        %3153 = vdwg.mxu0
        %v3154 = vmax.f32 %v3146, 0.0
        %v3155 = vmax.f32 %v3148, 0.0
        %v3156 = vmax.f32 %v3150, 0.0
        %v3157 = vmax.f32 %v3152, 0.0
        %v3158 = vpack.c.bf16 %v3156, %v3154
        %v3159 = vpack.c.bf16 %v3157, %v3155
        %v3160 = vld [vmem:[%s13] sm:$0xf]
        %v3161 = vld [vmem:[%s13 + $0x4] sm:$0xf]
        %v3162 = vld [vmem:[%s13 + $0x8] sm:$0xf]
        %v3163 = vld [vmem:[%s13 + $0xc] sm:$0xf]
        %v3164 = vld [vmem:[%s13 + $0x10] sm:$0xf]
        %v3165 = vld [vmem:[%s13 + $0x14] sm:$0xf]
        %v3166 = vld [vmem:[%s13 + $0x18] sm:$0xf]
        %v3167 = vld [vmem:[%s13 + $0x1c] sm:$0xf]
        %v3168 = vld [vmem:[%s13 + $0x20] sm:$0xf]
        %v3169 = vld [vmem:[%s13 + $0x24] sm:$0xf]
        %v3170 = vld [vmem:[%s13 + $0x28] sm:$0xf]
        %v3171 = vld [vmem:[%s13 + $0x2c] sm:$0xf]
        %v3172 = vld [vmem:[%s13 + $0x30] sm:$0xf]
        %v3173 = vld [vmem:[%s13 + $0x34] sm:$0xf]
        %v3174 = vld [vmem:[%s13 + $0x38] sm:$0xf]
        %v3175 = vld [vmem:[%s13 + $0x3c] sm:$0xf]
        %v3176 = vld [vmem:[%s13 + $0x40] sm:$0xf]
        %v3177 = vld [vmem:[%s13 + $0x44] sm:$0xf]
        %v3178 = vld [vmem:[%s13 + $0x48] sm:$0xf]
        %v3179 = vld [vmem:[%s13 + $0x4c] sm:$0xf]
        %v3180 = vld [vmem:[%s13 + $0x50] sm:$0xf]
        %v3181 = vld [vmem:[%s13 + $0x54] sm:$0xf]
        %v3182 = vld [vmem:[%s13 + $0x58] sm:$0xf]
        %v3183 = vld [vmem:[%s13 + $0x5c] sm:$0xf]
        %v3184 = vld [vmem:[%s13 + $0x60] sm:$0xf]
        %v3185 = vld [vmem:[%s13 + $0x64] sm:$0xf]
        %v3186 = vld [vmem:[%s13 + $0x68] sm:$0xf]
        %v3187 = vld [vmem:[%s13 + $0x6c] sm:$0xf]
        %v3188 = vld [vmem:[%s13 + $0x70] sm:$0xf]
        %v3189 = vld [vmem:[%s13 + $0x74] sm:$0xf]
        %v3190 = vld [vmem:[%s13 + $0x78] sm:$0xf]
        %v3191 = vld [vmem:[%s13 + $0x7c] sm:$0xf]
        %v3192 = vld [vmem:[%s14] sm:$0x1]
        %v3194 = vlaneseq
        %v3195 = vshrl.u32 %v3194, 7
        %v3196 = vsub.s32 0, %v3195
        %v3197 = vrot.slane %v3192, %v3196
        %v3231 = vunpack.c.l.b16 %v3160
        %v3232 = vunpack.c.l.b16 %v3161
        %v3233 = vunpack.c.l.b16 %v3162
        %v3234 = vunpack.c.l.b16 %v3163
        %v3235 = vunpack.c.l.b16 %v3164
        %v3236 = vunpack.c.l.b16 %v3165
        %v3237 = vunpack.c.l.b16 %v3166
        %v3238 = vunpack.c.l.b16 %v3167
        %v3239 = vunpack.c.l.b16 %v3168
        %v3240 = vunpack.c.l.b16 %v3169
        %v3241 = vunpack.c.l.b16 %v3170
        %v3242 = vunpack.c.l.b16 %v3171
        %v3243 = vunpack.c.l.b16 %v3172
        %v3244 = vunpack.c.l.b16 %v3173
        %v3245 = vunpack.c.l.b16 %v3174
        %v3246 = vunpack.c.l.b16 %v3175
        %v3247 = vunpack.c.l.b16 %v3176
        %v3248 = vunpack.c.l.b16 %v3177
        %v3249 = vunpack.c.l.b16 %v3178
        %v3250 = vunpack.c.l.b16 %v3179
        %v3251 = vunpack.c.l.b16 %v3180
        %v3252 = vunpack.c.l.b16 %v3181
        %v3253 = vunpack.c.l.b16 %v3182
        %v3254 = vunpack.c.l.b16 %v3183
        %v3255 = vunpack.c.l.b16 %v3184
        %v3256 = vunpack.c.l.b16 %v3185
        %v3257 = vunpack.c.l.b16 %v3186
        %v3258 = vunpack.c.l.b16 %v3187
        %v3259 = vunpack.c.l.b16 %v3188
        %v3260 = vunpack.c.l.b16 %v3189
        %v3261 = vunpack.c.l.b16 %v3190
        %v3262 = vunpack.c.l.b16 %v3191
        %v3263 = vpack.c.b16 %v3232, %v3231
        %v3264 = vpack.c.b16 %v3234, %v3233
        %v3265 = vpack.c.b16 %v3236, %v3235
        %v3266 = vpack.c.b16 %v3238, %v3237
        %v3267 = vpack.c.b16 %v3240, %v3239
        %v3268 = vpack.c.b16 %v3242, %v3241
        %v3269 = vpack.c.b16 %v3244, %v3243
        %v3270 = vpack.c.b16 %v3246, %v3245
        %v3271 = vpack.c.b16 %v3248, %v3247
        %v3272 = vpack.c.b16 %v3250, %v3249
        %v3273 = vpack.c.b16 %v3252, %v3251
        %v3274 = vpack.c.b16 %v3254, %v3253
        %v3275 = vpack.c.b16 %v3256, %v3255
        %v3276 = vpack.c.b16 %v3258, %v3257
        %v3277 = vpack.c.b16 %v3260, %v3259
        %v3278 = vpack.c.b16 %v3262, %v3261
        %3295 = vmatprep.subr.bf16.mxu0 0
        %3296 = vmatpush1.bf16.msra.mxu0 %v3270
        %3297 = vmatprep.subr.bf16.mxu0 0
        %3298 = vmatpush1.bf16.msra.mxu0 %v3269
        %3299 = vmatprep.subr.bf16.mxu0 0
        %3300 = vmatpush1.bf16.msra.mxu0 %v3268
        %3301 = vmatprep.subr.bf16.mxu0 0
        %3302 = vmatpush1.bf16.msra.mxu0 %v3267
        %3303 = vmatprep.subr.bf16.mxu0 0
        %3304 = vmatpush1.bf16.msra.mxu0 %v3266
        %3305 = vmatprep.subr.bf16.mxu0 0
        %3306 = vmatpush1.bf16.msra.mxu0 %v3265
        %3307 = vmatprep.subr.bf16.mxu0 0
        %3308 = vmatpush1.bf16.msra.mxu0 %v3264
        %3309 = vmatprep.subr.bf16.mxu0 0
        %3310 = vmatpush1.bf16.msra.mxu0 %v3263
        %3311 = vmatprep.subr.bf16.mxu0 0
        %3312 = vmatpush2.bf16.msra.mxu0 %v3278
        %3313 = vmatprep.subr.bf16.mxu0 0
        %3314 = vmatpush2.bf16.msra.mxu0 %v3277
        %3315 = vmatprep.subr.bf16.mxu0 0
        %3316 = vmatpush2.bf16.msra.mxu0 %v3276
        %3317 = vmatprep.subr.bf16.mxu0 0
        %3318 = vmatpush2.bf16.msra.mxu0 %v3275
        %3319 = vmatprep.subr.bf16.mxu0 0
        %3320 = vmatpush2.bf16.msra.mxu0 %v3274
        %3321 = vmatprep.subr.bf16.mxu0 0
        %3322 = vmatpush2.bf16.msra.mxu0 %v3273
        %3323 = vmatprep.subr.bf16.mxu0 0
        %3324 = vmatpush2.bf16.msra.mxu0 %v3272
        %3325 = vmatprep.subr.bf16.mxu0 0
        %3326 = vmatpush2.bf16.msra.mxu0 %v3271
        %3327 = vmatprep.mubr.bf16.mxu0 %v3159
        %3328 = vmatmul.mubr.bf16.gmra.mxu0 %v3158
        %v3329 = vpop.f32.mrf.mxu0
        %v3330 = vadd.f32 %v3197, %v3329
        %v3331 = vpop.f32.mrf.mxu0
        %v3332 = vpop.f32.mrf.mxu0
        %v3333 = vadd.f32 %v3197, %v3332
        %v3334 = vpop.f32.mrf.mxu0
        %3335 = vdwg.mxu0
        %v3336 = vadd.f32 %v3000, %v3330
        %v3337 = vadd.f32 %v3001, %v3333
        %3338 = vadd.xlane.f32.xlu0 %v3336
        %v3339 = vpop.xlane.xlu0 %3338
        %3340 = vadd.xlane.f32.xlu0 %v3337
        %v3341 = vpop.xlane.xlu0 %3340
        %v3342 = vmul.f32 %v3339, %v2965
        %v3343 = vmul.f32 %v3341, %v2965
        %v3344 = vsub.f32 %v3336, %v3342
        %v3345 = vsub.f32 %v3337, %v3343
        %v3346 = vmul.f32 %v3344, %v3344
        %v3347 = vmul.f32 %v3345, %v3345
        %3348 = vadd.xlane.f32.xlu0 %v3346
        %v3349 = vpop.xlane.xlu0 %3348
        %3350 = vadd.xlane.f32.xlu0 %v3347
        %v3351 = vpop.xlane.xlu0 %3350
        %v3352 = vmul.f32 %v3349, %v2965
        %v3353 = vmul.f32 %v3351, %v2965
        %v3354 = vadd.f32 %v3352, 1e-05
        %v3355 = vadd.f32 %v3353, 1e-05
        %v3356 = vrsqrt.pop %v3354
        %v3357 = vrsqrt.pop %v3355
        %v3358 = vmul.f32 %v3344, %v3356
        %v3359 = vmul.f32 %v3345, %v3357
        %v3360 = vld [vmem:[%s15] sm:$0x1]
        %v3362 = vlaneseq
        %v3363 = vshrl.u32 %v3362, 7
        %v3364 = vsub.s32 0, %v3363
        %v3365 = vrot.slane %v3360, %v3364
        %v3367 = vmul.f32 %v3358, %v3365
        %v3368 = vmul.f32 %v3359, %v3365
        %v3369 = vld [vmem:[%s16] sm:$0x1]
        %v3371 = vlaneseq
        %v3372 = vshrl.u32 %v3371, 7
        %v3373 = vsub.s32 0, %v3372
        %v3374 = vrot.slane %v3369, %v3373
        %v3376 = vadd.f32 %v3367, %v3374
        %v3377 = vadd.f32 %v3368, %v3374
        %3378 = vst [vmem:[%s542] sm:$0xff] %v3376
        %3379 = vst [vmem:[%s542 + $0x8] sm:$0xff] %v3377
        %s3380 = sand.u32 %s401, 1
        %s3381 = scalar_lea.sflag [#allocation4], %s3380
        %s3382 = sand.u32 %s401, 1
        %s3383 = smul.addr %s3382, 16
        %s3384 = scalar_lea.vmem [#allocation3], %s3383
        // Predicated region
        $region89: #{tpu_custom_call.1} parent=87 // pred_check
          %p3385 = pneg %p411
        $region90: #{tpu_custom_call.1} parent=87 // pred_check_branch
          %3387 = sbr.rel (%p3385) target = $region92
        $region91: #{tpu_custom_call.1} parent=87 // pred_region
          %s3388 = smul.u32 2, %s31
          %s3390 = ssub.s32 256, 256
          %3391 = vsyncadd %s3381, %s3390
          %s3392 = smul.addr %s3388, 128
          %s3393 = scalar_lea.hbm %s17, %s3392
          %s3394 = sshll.u32 %s3384, 4
          %s3395 = int_to_ptr.vmem [resolvable:$true] %s3394
          %3400 = dma.vmem_to_hbm [thread:$0]  %s3395, 256, %s3393, %s3381, 128, 128, 8
        $region92: #{tpu_custom_call.1} parent=87 // pred_fallthru
          _
      $region88: #{tpu_custom_call.1} parent=5 // pred_fallthru
        _
      %p3401 = scmp.le.s32.totalorder 2, %s26
      // Predicated region
      $region93: #{tpu_custom_call.1} parent=5 // pred_check
        %p3402 = pneg %p3401
      $region94: #{tpu_custom_call.1} parent=5 // pred_check_branch
        %3404 = sbr.rel (%p3402) target = $region96
      $region95: #{tpu_custom_call.1} parent=5 // pred_region
        %s3405 = ssub.s32 %s26, 2
        // Predicated region
        $region97: #{tpu_custom_call.1} parent=95 // pred_check
          %p3406 = pneg %p417
        $region98: #{tpu_custom_call.1} parent=95 // pred_check_branch
          %3408 = sbr.rel (%p3406) target = $region100
        $region99: #{tpu_custom_call.1} parent=95 // pred_region
          %s3409 = sand.u32 %s402, 1
          %s3410 = scalar_lea.sflag [#allocation4], %s3409
          %s3411 = sand.u32 %s402, 1
          %s3412 = smul.addr %s3411, 16
          %s3413 = scalar_lea.vmem [#allocation3], %s3412
          %3414 = dma.done %s3410, 256
        $region100: #{tpu_custom_call.1} parent=95 // pred_fallthru
          _
      $region96: #{tpu_custom_call.1} parent=5 // pred_fallthru
        _
    $region6: #{tpu_custom_call.1} parent=1 // loop_footer
      %s30 = sadd.s32 1, %s26
    $region7: #{tpu_custom_call.1} parent=1 // loop_footer_branch
      %25 = sbr.rel target = $region3
    $region8: #{tpu_custom_call.1} parent=1 // loop_exit
      _
    %3415 = vsyncpa [#allocation4], 1
    %s3416 = scalar_lea.sflag [#allocation4], 1
    %3417 = vsyncpa %s3416, 1

</llo_original>
